<compile_context>
chip_gen: v6e
topology: v6e:2x2x1
jax: 0.10.0
libtpu: 0.0.40
codegen_flags: <defaults>
</compile_context>

<pallas_src>
import jax
import jax.numpy as jnp
from jax import lax
from jax.experimental import pallas as pl
from jax.experimental.pallas import tpu as pltpu


def _elu(v):
    # ELU(alpha=1): x if x > 0 else exp(x) - 1   (clamp exp arg for safety)
    return jnp.where(v > 0, v, jnp.exp(jnp.minimum(v, 0.0)) - 1.0)


def _fused_conv3x3_elu_x2_kernel(x_ref, w1_ref, b1_ref, w2_ref, b2_ref,
                                 o_ref, xbuf, ybuf):
    # x_ref : (1, H, W, Cin)        unpadded input tile (one batch element)
    # w1_ref: (9*Cin, CP)           conv1 taps flattened into the K axis
    # b1_ref: (1, CP)
    # w2_ref: (9*CP, CP)            conv2 taps flattened into the K axis
    # b2_ref: (1, CP)
    # o_ref : (1, H, W, CP)         CP = out_feat rounded up to 128 lanes
    # xbuf  : VMEM (H+2, W+2, Cin)  zero-halo buffer for the input
    # ybuf  : VMEM (H+2, W+2, CP)   zero-halo buffer for the intermediate act.
    H, W = o_ref.shape[1], o_ref.shape[2]
    cin = x_ref.shape[3]
    cp = o_ref.shape[3]

    # Zero the halo buffers every step (cheap vs. the matmuls; a
    # program_id==0 guard would be wrong under megacore sharding of the
    # batch axis, since the second core never sees step 0).
    xbuf[...] = jnp.zeros_like(xbuf)
    ybuf[...] = jnp.zeros_like(ybuf)

    def im2col(buf, c):
        # (H*W, 9*c) slab: the 9 shifted windows concatenated along the lane
        # axis, tap order (kh, kw) row-major with channel fastest -- matches
        # the (3, 3, c, cout) -> (9*c, cout) weight reshape in the wrapper.
        cols = [buf[kh:kh + H, kw:kw + W, :].reshape(H * W, c)
                for kh in range(3) for kw in range(3)]
        return jnp.concatenate(cols, axis=1)

    # ---- layer 1: conv3x3 + bias + ELU (single MXU matmul, K = 9*Cin) ----
    xbuf[1:H + 1, 1:W + 1, :] = x_ref[0]
    y1 = jnp.dot(im2col(xbuf, cin), w1_ref[...],
                 preferred_element_type=jnp.float32) + b1_ref[...]
    y1 = _elu(y1)
    # TODO(synk): Dropout(p=0.2) is identity in eval mode; training-mode
    # stochastic dropout is not reproduced here.

    # ---- layer 2: conv3x3 + bias + ELU (single MXU matmul, K = 9*CP) -----
    ybuf[1:H + 1, 1:W + 1, :] = y1.reshape(H, W, cp)
    y2 = jnp.dot(im2col(ybuf, cp), w2_ref[...],
                 preferred_element_type=jnp.float32) + b2_ref[...]
    y2 = _elu(y2)

    o_ref[...] = y2.reshape(1, H, W, cp).astype(o_ref.dtype)


def _round_up(x, m):
    return (x + m - 1) // m * m


def conv3x3_small_nhwc(x_nhwc, w1_hwio, b1, w2_hwio, b2):
    """Fused Conv3x3Small forward in NHWC via one Pallas TPU kernel.

    x_nhwc : (N, H, W, Cin) float32
    w*_hwio: (3, 3, Cin*, Cout) float32, b*: (Cout,) float32
    returns (N, H, W, Cout) float32
    """
    N, H, W, cin = x_nhwc.shape
    cout = w1_hwio.shape[-1]
    cp = _round_up(max(cout, 128), 128)   # lane-dense channel width
    f32 = jnp.float32

    # Zero-pad conv1 out-channels and conv2 in/out-channels to CP.  Padded
    # channels carry exactly 0 through bias+ELU, so slicing at the end is
    # numerically identical to the unpadded computation.
    w1p = jnp.zeros((3, 3, cin, cp), f32).at[:, :, :, :cout].set(w1_hwio)
    b1p = jnp.zeros((1, cp), f32).at[0, :cout].set(b1)
    w2p = jnp.zeros((3, 3, cp, cp), f32).at[:, :, :cout, :cout].set(w2_hwio)
    b2p = jnp.zeros((1, cp), f32).at[0, :cout].set(b2)

    w1m = w1p.reshape(9 * cin, cp)     # K = 9*Cin
    w2m = w2p.reshape(9 * cp, cp)      # K = 9*CP

    # TODO(synk): for real UNet sizes add a spatial row-block grid axis
    # (2-row halo for the fused pair) so the pipeline has >N steps and v7x's
    # 64 MiB VMEM is respected, and cast matmul inputs to bf16 (f32 acc) on
    # v6e/v7x.  At these small demo shapes grid=(N,) keeps the weights
    # resident and the whole image in VMEM.
    out = pl.pallas_call(
        _fused_conv3x3_elu_x2_kernel,
        out_shape=jax.ShapeDtypeStruct((N, H, W, cp), f32),
        grid_spec=pltpu.PrefetchScalarGridSpec(
            num_scalar_prefetch=0,
            grid=(N,),
            in_specs=[
                pl.BlockSpec((1, H, W, cin), lambda n: (n, 0, 0, 0)),
                pl.BlockSpec((9 * cin, cp), lambda n: (0, 0)),
                pl.BlockSpec((1, cp), lambda n: (0, 0)),
                pl.BlockSpec((9 * cp, cp), lambda n: (0, 0)),
                pl.BlockSpec((1, cp), lambda n: (0, 0)),
            ],
            out_specs=pl.BlockSpec((1, H, W, cp), lambda n: (n, 0, 0, 0)),
            scratch_shapes=[
                pltpu.VMEM((H + 2, W + 2, cin), f32),
                pltpu.VMEM((H + 2, W + 2, cp), f32),
            ],
        ),
        compiler_params=pltpu.CompilerParams(
            dimension_semantics=("parallel",)),
    )(x_nhwc, w1m, b1p, w2m, b2p)

    return out[..., :cout]


def init_conv_params(key, in_feat, out_feat):
    """Deterministic PyTorch-style (kaiming-uniform-ish) init for Conv2d 3x3."""
    kw_key, kb_key = jax.random.split(key)
    fan_in = in_feat * 3 * 3
    bound = 1.0 / jnp.sqrt(fan_in)
    # PyTorch weight layout is (out, in, 3, 3); convert to HWIO for the kernel.
    w_oihw = jax.random.uniform(kw_key, (out_feat, in_feat, 3, 3),
                                jnp.float32, -bound, bound)
    b = jax.random.uniform(kb_key, (out_feat,), jnp.float32, -bound, bound)
    w_hwio = jnp.transpose(w_oihw, (2, 3, 1, 0))                 # (3,3,in,out)
    return w_hwio, b


def conv3x3_small_forward(x_nchw, params):
    """Full Conv3x3Small forward. Input/output are NCHW like PyTorch."""
    (w1, b1), (w2, b2) = params
    x = jnp.transpose(x_nchw, (0, 2, 3, 1))                      # NCHW -> NHWC
    y = conv3x3_small_nhwc(x, w1, b1, w2, b2)
    return jnp.transpose(y, (0, 3, 1, 2))                        # NHWC -> NCHW


def _reference_forward(x_nchw, params):
    """Pure-JAX reference (lax.conv) for correctness checking."""
    (w1, b1), (w2, b2) = params

    def conv_elu(x, w, b):
        y = lax.conv_general_dilated(
            x, w, window_strides=(1, 1), padding="SAME",
            dimension_numbers=("NHWC", "HWIO", "NHWC"))
        y = y + b[None, None, None, :]
        return jnp.where(y > 0, y, jnp.exp(jnp.minimum(y, 0.0)) - 1.0)

    x = jnp.transpose(x_nchw, (0, 2, 3, 1))
    y = conv_elu(x, w1, b1)
    y = conv_elu(y, w2, b2)
    return jnp.transpose(y, (0, 3, 1, 2))


if __name__ == "__main__":
    key = jax.random.PRNGKey(0)
    k_x, k_c1, k_c2 = jax.random.split(key, 3)

    N, in_feat, out_feat, H, W = 2, 4, 8, 16, 16
    x = jax.random.normal(k_x, (N, in_feat, H, W), jnp.float32)

    params = (init_conv_params(k_c1, in_feat, out_feat),
              init_conv_params(k_c2, out_feat, out_feat))

    out = jax.block_until_ready(conv3x3_small_forward(x, params))
    ref = jax.block_until_ready(_reference_forward(x, params))

    assert out.shape == (N, out_feat, H, W)
    assert jnp.allclose(out, ref, atol=1e-4, rtol=1e-4), "mismatch vs reference"

    print("KERNEL_OK")
</pallas_src>

<mosaic_0001>
module attributes {stable_mosaic.version = 11 : i64} {
  func.func @_fused_conv3x3_elu_x2_kernel(%arg0: i32, %arg1: memref<1x16x16x4xf32, #tpu.memory_space<vmem>>, %arg2: memref<36x128xf32, #tpu.memory_space<vmem>>, %arg3: memref<1x128xf32, #tpu.memory_space<vmem>>, %arg4: memref<1152x128xf32, #tpu.memory_space<vmem>>, %arg5: memref<1x128xf32, #tpu.memory_space<vmem>>, %arg6: memref<1x16x16x128xf32, #tpu.memory_space<vmem>>, %arg7: memref<18x18x4xf32, #tpu.memory_space<vmem>>, %arg8: memref<18x18x128xf32, #tpu.memory_space<vmem>>) attributes {dimension_semantics = [#tpu.dimension_semantics<parallel>], iteration_bounds = array<i64: 2>, scalar_prefetch = 0 : i64, scratch_operands = 2 : i64, tpu.core_type = #tpu.core_type<tc>, window_params = [{transform_indices = @transform_0, window_bounds = array<i64: 1, 16, 16, 4>}, {pipeline_mode = #tpu.pipeline_mode<synchronous>, transform_indices = @transform_1, window_bounds = array<i64: 36, 128>}, {pipeline_mode = #tpu.pipeline_mode<synchronous>, transform_indices = @transform_2, window_bounds = array<i64: 1, 128>}, {pipeline_mode = #tpu.pipeline_mode<synchronous>, transform_indices = @transform_3, window_bounds = array<i64: 1152, 128>}, {pipeline_mode = #tpu.pipeline_mode<synchronous>, transform_indices = @transform_4, window_bounds = array<i64: 1, 128>}, {transform_indices = @transform_5, window_bounds = array<i64: 1, 16, 16, 128>}]} {
    %cst = arith.constant 0.000000e+00 : f32
    %0 = vector.broadcast %cst : f32 to vector<18x18x4xf32>
    %c0 = arith.constant 0 : index
    %c0_0 = arith.constant 0 : index
    %c0_1 = arith.constant 0 : index
    %1 = vector.load %arg7[%c0, %c0_0, %c0_1] : memref<18x18x4xf32, #tpu.memory_space<vmem>>, vector<18x18x4xf32>
    tpu.vector_store %arg7[%c0, %c0_0, %c0_1], %0 {strides = array<i32>} : memref<18x18x4xf32, #tpu.memory_space<vmem>>, vector<18x18x4xf32>,
    %cst_2 = arith.constant 0.000000e+00 : f32
    %2 = vector.broadcast %cst_2 : f32 to vector<18x18x128xf32>
    %c0_3 = arith.constant 0 : index
    %c0_4 = arith.constant 0 : index
    %c0_5 = arith.constant 0 : index
    %3 = vector.load %arg8[%c0_3, %c0_4, %c0_5] : memref<18x18x128xf32, #tpu.memory_space<vmem>>, vector<18x18x128xf32>
    tpu.vector_store %arg8[%c0_3, %c0_4, %c0_5], %2 {strides = array<i32>} : memref<18x18x128xf32, #tpu.memory_space<vmem>>, vector<18x18x128xf32>,
    %c0_6 = arith.constant 0 : index
    %c0_7 = arith.constant 0 : index
    %c0_8 = arith.constant 0 : index
    %c0_9 = arith.constant 0 : index
    %4 = vector.load %arg1[%c0_6, %c0_7, %c0_8, %c0_9] : memref<1x16x16x4xf32, #tpu.memory_space<vmem>>, vector<1x16x16x4xf32>
    %5 = vector.shape_cast %4 : vector<1x16x16x4xf32> to vector<16x16x4xf32>
    %c1 = arith.constant 1 : index
    %c1_10 = arith.constant 1 : index
    %c0_11 = arith.constant 0 : index
    %6 = vector.load %arg7[%c1, %c1_10, %c0_11] : memref<18x18x4xf32, #tpu.memory_space<vmem>>, vector<16x16x4xf32>
    tpu.vector_store %arg7[%c1, %c1_10, %c0_11], %5 {strides = array<i32>} : memref<18x18x4xf32, #tpu.memory_space<vmem>>, vector<16x16x4xf32>,
    %c0_12 = arith.constant 0 : index
    %c0_13 = arith.constant 0 : index
    %c0_14 = arith.constant 0 : index
    %7 = vector.load %arg7[%c0_12, %c0_13, %c0_14] : memref<18x18x4xf32, #tpu.memory_space<vmem>>, vector<16x16x4xf32>
    %8 = vector.shape_cast %7 : vector<16x16x4xf32> to vector<256x4xf32>
    %c0_15 = arith.constant 0 : index
    %c1_16 = arith.constant 1 : index
    %c0_17 = arith.constant 0 : index
    %9 = vector.load %arg7[%c0_15, %c1_16, %c0_17] : memref<18x18x4xf32, #tpu.memory_space<vmem>>, vector<16x16x4xf32>
    %10 = vector.shape_cast %9 : vector<16x16x4xf32> to vector<256x4xf32>
    %c0_18 = arith.constant 0 : index
    %c2 = arith.constant 2 : index
    %c0_19 = arith.constant 0 : index
    %11 = vector.load %arg7[%c0_18, %c2, %c0_19] : memref<18x18x4xf32, #tpu.memory_space<vmem>>, vector<16x16x4xf32>
    %12 = vector.shape_cast %11 : vector<16x16x4xf32> to vector<256x4xf32>
    %c1_20 = arith.constant 1 : index
    %c0_21 = arith.constant 0 : index
    %c0_22 = arith.constant 0 : index
    %13 = vector.load %arg7[%c1_20, %c0_21, %c0_22] : memref<18x18x4xf32, #tpu.memory_space<vmem>>, vector<16x16x4xf32>
    %14 = vector.shape_cast %13 : vector<16x16x4xf32> to vector<256x4xf32>
    %c1_23 = arith.constant 1 : index
    %c1_24 = arith.constant 1 : index
    %c0_25 = arith.constant 0 : index
    %15 = vector.load %arg7[%c1_23, %c1_24, %c0_25] : memref<18x18x4xf32, #tpu.memory_space<vmem>>, vector<16x16x4xf32>
    %16 = vector.shape_cast %15 : vector<16x16x4xf32> to vector<256x4xf32>
    %c1_26 = arith.constant 1 : index
    %c2_27 = arith.constant 2 : index
    %c0_28 = arith.constant 0 : index
    %17 = vector.load %arg7[%c1_26, %c2_27, %c0_28] : memref<18x18x4xf32, #tpu.memory_space<vmem>>, vector<16x16x4xf32>
    %18 = vector.shape_cast %17 : vector<16x16x4xf32> to vector<256x4xf32>
    %c2_29 = arith.constant 2 : index
    %c0_30 = arith.constant 0 : index
    %c0_31 = arith.constant 0 : index
    %19 = vector.load %arg7[%c2_29, %c0_30, %c0_31] : memref<18x18x4xf32, #tpu.memory_space<vmem>>, vector<16x16x4xf32>
    %20 = vector.shape_cast %19 : vector<16x16x4xf32> to vector<256x4xf32>
    %c2_32 = arith.constant 2 : index
    %c1_33 = arith.constant 1 : index
    %c0_34 = arith.constant 0 : index
    %21 = vector.load %arg7[%c2_32, %c1_33, %c0_34] : memref<18x18x4xf32, #tpu.memory_space<vmem>>, vector<16x16x4xf32>
    %22 = vector.shape_cast %21 : vector<16x16x4xf32> to vector<256x4xf32>
    %c2_35 = arith.constant 2 : index
    %c2_36 = arith.constant 2 : index
    %c0_37 = arith.constant 0 : index
    %23 = vector.load %arg7[%c2_35, %c2_36, %c0_37] : memref<18x18x4xf32, #tpu.memory_space<vmem>>, vector<16x16x4xf32>
    %24 = vector.shape_cast %23 : vector<16x16x4xf32> to vector<256x4xf32>
    %25 = tpu.concatenate %8, %10, %12, %14, %16, %18, %20, %22, %24 in 1 : vector<256x4xf32>, vector<256x4xf32>, vector<256x4xf32>, vector<256x4xf32>, vector<256x4xf32>, vector<256x4xf32>, vector<256x4xf32>, vector<256x4xf32>, vector<256x4xf32> -> vector<256x36xf32>
    %c0_38 = arith.constant 0 : index
    %c0_39 = arith.constant 0 : index
    %26 = vector.load %arg2[%c0_38, %c0_39] : memref<36x128xf32, #tpu.memory_space<vmem>>, vector<36x128xf32>
    %cst_40 = arith.constant dense<0.000000e+00> : vector<256x128xf32>
    %27 = tpu.matmul %25, %26, %cst_40 {dimension_numbers = #tpu.dot_dimension_numbers<[1], [0], [0], [1], [0, 0, 1, 1], [], []>} : vector<256x36xf32>, vector<36x128xf32>, vector<256x128xf32> -> vector<256x128xf32>
    %c0_41 = arith.constant 0 : index
    %c0_42 = arith.constant 0 : index
    %28 = vector.load %arg3[%c0_41, %c0_42] : memref<1x128xf32, #tpu.memory_space<vmem>>, vector<1x128xf32>
    %29 = vector.broadcast %28 : vector<1x128xf32> to vector<256x128xf32>
    %30 = arith.addf %27, %29 : vector<256x128xf32>
    %cst_43 = arith.constant 0.000000e+00 : f32
    %31 = vector.broadcast %cst_43 : f32 to vector<256x128xf32>
    %32 = arith.cmpf ogt, %30, %31 : vector<256x128xf32>
    %cst_44 = arith.constant 0.000000e+00 : f32
    %33 = vector.broadcast %cst_44 : f32 to vector<256x128xf32>
    %34 = arith.minimumf %30, %33 : vector<256x128xf32>
    %35 = math.exp %34 : vector<256x128xf32>
    %cst_45 = arith.constant 1.000000e+00 : f32
    %36 = vector.broadcast %cst_45 : f32 to vector<256x128xf32>
    %37 = arith.subf %35, %36 : vector<256x128xf32>
    %38 = arith.select %32, %30, %37 : vector<256x128xi1>, vector<256x128xf32>
    %39 = vector.shape_cast %38 : vector<256x128xf32> to vector<16x16x128xf32>
    %c1_46 = arith.constant 1 : index
    %c1_47 = arith.constant 1 : index
    %c0_48 = arith.constant 0 : index
    %40 = vector.load %arg8[%c1_46, %c1_47, %c0_48] : memref<18x18x128xf32, #tpu.memory_space<vmem>>, vector<16x16x128xf32>
    tpu.vector_store %arg8[%c1_46, %c1_47, %c0_48], %39 {strides = array<i32>} : memref<18x18x128xf32, #tpu.memory_space<vmem>>, vector<16x16x128xf32>,
    %c0_49 = arith.constant 0 : index
    %c0_50 = arith.constant 0 : index
    %c0_51 = arith.constant 0 : index
    %41 = vector.load %arg8[%c0_49, %c0_50, %c0_51] : memref<18x18x128xf32, #tpu.memory_space<vmem>>, vector<16x16x128xf32>
    %42 = vector.shape_cast %41 : vector<16x16x128xf32> to vector<256x128xf32>
    %c0_52 = arith.constant 0 : index
    %c1_53 = arith.constant 1 : index
    %c0_54 = arith.constant 0 : index
    %43 = vector.load %arg8[%c0_52, %c1_53, %c0_54] : memref<18x18x128xf32, #tpu.memory_space<vmem>>, vector<16x16x128xf32>
    %44 = vector.shape_cast %43 : vector<16x16x128xf32> to vector<256x128xf32>
    %c0_55 = arith.constant 0 : index
    %c2_56 = arith.constant 2 : index
    %c0_57 = arith.constant 0 : index
    %45 = vector.load %arg8[%c0_55, %c2_56, %c0_57] : memref<18x18x128xf32, #tpu.memory_space<vmem>>, vector<16x16x128xf32>
    %46 = vector.shape_cast %45 : vector<16x16x128xf32> to vector<256x128xf32>
    %c1_58 = arith.constant 1 : index
    %c0_59 = arith.constant 0 : index
    %c0_60 = arith.constant 0 : index
    %47 = vector.load %arg8[%c1_58, %c0_59, %c0_60] : memref<18x18x128xf32, #tpu.memory_space<vmem>>, vector<16x16x128xf32>
    %48 = vector.shape_cast %47 : vector<16x16x128xf32> to vector<256x128xf32>
    %c1_61 = arith.constant 1 : index
    %c1_62 = arith.constant 1 : index
    %c0_63 = arith.constant 0 : index
    %49 = vector.load %arg8[%c1_61, %c1_62, %c0_63] : memref<18x18x128xf32, #tpu.memory_space<vmem>>, vector<16x16x128xf32>
    %50 = vector.shape_cast %49 : vector<16x16x128xf32> to vector<256x128xf32>
    %c1_64 = arith.constant 1 : index
    %c2_65 = arith.constant 2 : index
    %c0_66 = arith.constant 0 : index
    %51 = vector.load %arg8[%c1_64, %c2_65, %c0_66] : memref<18x18x128xf32, #tpu.memory_space<vmem>>, vector<16x16x128xf32>
    %52 = vector.shape_cast %51 : vector<16x16x128xf32> to vector<256x128xf32>
    %c2_67 = arith.constant 2 : index
    %c0_68 = arith.constant 0 : index
    %c0_69 = arith.constant 0 : index
    %53 = vector.load %arg8[%c2_67, %c0_68, %c0_69] : memref<18x18x128xf32, #tpu.memory_space<vmem>>, vector<16x16x128xf32>
    %54 = vector.shape_cast %53 : vector<16x16x128xf32> to vector<256x128xf32>
    %c2_70 = arith.constant 2 : index
    %c1_71 = arith.constant 1 : index
    %c0_72 = arith.constant 0 : index
    %55 = vector.load %arg8[%c2_70, %c1_71, %c0_72] : memref<18x18x128xf32, #tpu.memory_space<vmem>>, vector<16x16x128xf32>
    %56 = vector.shape_cast %55 : vector<16x16x128xf32> to vector<256x128xf32>
    %c2_73 = arith.constant 2 : index
    %c2_74 = arith.constant 2 : index
    %c0_75 = arith.constant 0 : index
    %57 = vector.load %arg8[%c2_73, %c2_74, %c0_75] : memref<18x18x128xf32, #tpu.memory_space<vmem>>, vector<16x16x128xf32>
    %58 = vector.shape_cast %57 : vector<16x16x128xf32> to vector<256x128xf32>
    %59 = tpu.concatenate %42, %44, %46, %48, %50, %52, %54, %56, %58 in 1 : vector<256x128xf32>, vector<256x128xf32>, vector<256x128xf32>, vector<256x128xf32>, vector<256x128xf32>, vector<256x128xf32>, vector<256x128xf32>, vector<256x128xf32>, vector<256x128xf32> -> vector<256x1152xf32>
    %c0_76 = arith.constant 0 : index
    %c0_77 = arith.constant 0 : index
    %60 = vector.load %arg4[%c0_76, %c0_77] : memref<1152x128xf32, #tpu.memory_space<vmem>>, vector<1152x128xf32>
    %cst_78 = arith.constant dense<0.000000e+00> : vector<256x128xf32>
    %61 = tpu.matmul %59, %60, %cst_78 {dimension_numbers = #tpu.dot_dimension_numbers<[1], [0], [0], [1], [0, 0, 1, 1], [], []>} : vector<256x1152xf32>, vector<1152x128xf32>, vector<256x128xf32> -> vector<256x128xf32>
    %c0_79 = arith.constant 0 : index
    %c0_80 = arith.constant 0 : index
    %62 = vector.load %arg5[%c0_79, %c0_80] : memref<1x128xf32, #tpu.memory_space<vmem>>, vector<1x128xf32>
    %63 = vector.broadcast %62 : vector<1x128xf32> to vector<256x128xf32>
    %64 = arith.addf %61, %63 : vector<256x128xf32>
    %cst_81 = arith.constant 0.000000e+00 : f32
    %65 = vector.broadcast %cst_81 : f32 to vector<256x128xf32>
    %66 = arith.cmpf ogt, %64, %65 : vector<256x128xf32>
    %cst_82 = arith.constant 0.000000e+00 : f32
    %67 = vector.broadcast %cst_82 : f32 to vector<256x128xf32>
    %68 = arith.minimumf %64, %67 : vector<256x128xf32>
    %69 = math.exp %68 : vector<256x128xf32>
    %cst_83 = arith.constant 1.000000e+00 : f32
    %70 = vector.broadcast %cst_83 : f32 to vector<256x128xf32>
    %71 = arith.subf %69, %70 : vector<256x128xf32>
    %72 = arith.select %66, %64, %71 : vector<256x128xi1>, vector<256x128xf32>
    %73 = vector.shape_cast %72 : vector<256x128xf32> to vector<1x16x16x128xf32>
    %c0_84 = arith.constant 0 : index
    %c0_85 = arith.constant 0 : index
    %c0_86 = arith.constant 0 : index
    %c0_87 = arith.constant 0 : index
    %74 = vector.load %arg6[%c0_84, %c0_85, %c0_86, %c0_87] : memref<1x16x16x128xf32, #tpu.memory_space<vmem>>, vector<1x16x16x128xf32>
    tpu.vector_store %arg6[%c0_84, %c0_85, %c0_86, %c0_87], %73 {strides = array<i32>} : memref<1x16x16x128xf32, #tpu.memory_space<vmem>>, vector<1x16x16x128xf32>,
    return
  }
  func.func @transform_0(%arg0: i32) -> (i32, i32, i32, i32) {
    %c0_i32 = arith.constant 0 : i32
    %c0_i32_0 = arith.constant 0 : i32
    %c0_i32_1 = arith.constant 0 : i32
    %c0_i32_2 = arith.constant 0 : i32
    return %arg0, %c0_i32, %c0_i32_0, %c0_i32_1 : i32, i32, i32, i32
  }
  func.func @transform_1(%arg0: i32) -> (i32, i32) {
    %c0_i32 = arith.constant 0 : i32
    %c0_i32_0 = arith.constant 0 : i32
    %c0_i32_1 = arith.constant 0 : i32
    return %c0_i32, %c0_i32_0 : i32, i32
  }
  func.func @transform_2(%arg0: i32) -> (i32, i32) {
    %c0_i32 = arith.constant 0 : i32
    %c0_i32_0 = arith.constant 0 : i32
    %c0_i32_1 = arith.constant 0 : i32
    return %c0_i32, %c0_i32_0 : i32, i32
  }
  func.func @transform_3(%arg0: i32) -> (i32, i32) {
    %c0_i32 = arith.constant 0 : i32
    %c0_i32_0 = arith.constant 0 : i32
    %c0_i32_1 = arith.constant 0 : i32
    return %c0_i32, %c0_i32_0 : i32, i32
  }
  func.func @transform_4(%arg0: i32) -> (i32, i32) {
    %c0_i32 = arith.constant 0 : i32
    %c0_i32_0 = arith.constant 0 : i32
    %c0_i32_1 = arith.constant 0 : i32
    return %c0_i32, %c0_i32_0 : i32, i32
  }
  func.func @transform_5(%arg0: i32) -> (i32, i32, i32, i32) {
    %c0_i32 = arith.constant 0 : i32
    %c0_i32_0 = arith.constant 0 : i32
    %c0_i32_1 = arith.constant 0 : i32
    %c0_i32_2 = arith.constant 0 : i32
    return %arg0, %c0_i32, %c0_i32_0, %c0_i32_1 : i32, i32, i32, i32
  }
}

</mosaic_0001>

<llo_original>
// kernel: tpu_custom_call.1
$region0: #{tpu_custom_call.1}
  #allocation0 [shape = 'u32[]', space=smem, size = 0x4, offset = 0x4, fixed_abs, tag = 'smem constant byte address 0x4 - core index']
  #allocation1 [shape = 'u32[144,128]{1,0:T(1,128)}', space=vmem, size = 0x12000, scoped, tag = 'internal scratch']
  #allocation2 [shape = 'f32[18,18,4]{2,1,0:T(8,128)}', space=vmem, size = 0x36000, scoped, tag = 'scratch operand']
  #allocation3 [shape = 'f32[18,18,128]{2,1,0:T(8,128)}', space=vmem, size = 0x36000, scoped, tag = 'scratch operand']
  %s0 = inlined_call_operand.vmem [shape: f32[2,16,16,4], index: 0, kind: input, shape index: {}]
  %s1 = inlined_call_operand.vmem [shape: f32[36,128], index: 1, kind: input, shape index: {}]
  %s2 = inlined_call_operand.vmem [shape: f32[1,128], index: 2, kind: input, shape index: {}]
  %s3 = inlined_call_operand.hbm [shape: f32[1152,128], index: 3, kind: input, shape index: {}]
  %s4 = inlined_call_operand.vmem [shape: f32[1,128], index: 4, kind: input, shape index: {}]
  %s5 = inlined_call_operand.hbm [shape: f32[2,16,16,128], index: 5, kind: output, shape index: {}]
  %s6 = sld [smem:[#allocation0]]
  $region57: #{tpu_custom_call.1} parent=0
    _
  %s8 = ssub.s32 1, %s6
  %s9 = scalar_select 0, %s8, %s6
  $region1: #{tpu_custom_call.1} parent=0
    #allocation4 [shape = 'u8[589824]{0}', space=vmem, size = 0x90000, scoped, tag = 'input window, operand 3, single buffered']
    #allocation5 [shape = 's32[2]{0}', space=sflag, size = 0x8, scoped, tag = 'scoped memory for tpu_custom_call.1']
    #allocation6 [shape = 's32[2]{0}', space=sflag, size = 0x8, scoped, tag = 'scoped memory for tpu_custom_call.1']
    #allocation7 [shape = 'u8[262144]{0}', space=vmem, size = 0x40000, scoped, tag = 'output window, operand 0']
    %10 = vsyncpa [#allocation5], 0
    %11 = vsyncpa [#allocation6], 0
    %s12 = scalar_lea.sflag [#allocation6], 1
    %13 = vsyncpa %s12, 0
    loop: start=0, step=1, limit=4
    $region2: #{tpu_custom_call.1} parent=1 // loop_pre_header
      _
    $region3: #{tpu_custom_call.1} parent=1 // loop_header
      %s15 = sphi 0, %s19
      %p16 = scmp.ge.s32.totalorder %s15, 4
      %s25 = sphi 0, %s27
      %s28 = sphi 0, %s25
      %s29 = sphi 0, %s28
      %s45 = sphi 0, %s29
      %s49 = sphi 0, %s49
      %s51 = sphi 0, %s49
      %s52 = sphi 0, %s51
      %s66 = sphi 0, %s52
      %s70 = sphi 0, %s70
      %s72 = sphi 0, %s70
      %s73 = sphi 0, %s72
      %s87 = sphi 0, %s73
      %s91 = sphi 0, %s91
      %s93 = sphi 0, %s91
      %s94 = sphi 0, %s93
      %s108 = sphi 0, %s94
      %s112 = sphi 0, %s112
      %s114 = sphi 0, %s112
      %s115 = sphi 0, %s114
      %s129 = sphi 0, %s115
      %s135 = sphi 0, %s137
      %s138 = sphi 0, %s135
      %s139 = sphi 0, %s138
      %s155 = sphi 0, %s139
    $region4: #{tpu_custom_call.1} parent=1 // loop_header_branch
      %18 = sbr.rel (%p16) target = $region8
    $region5: #{tpu_custom_call.1} parent=1 // loop_body
      %s20 = ssub.s32 %s15, 1
      %s21 = ssub.s32 %s15, 2
      %s22 = sadd.s32 %s15, 1
      %s23 = ssub.s32 %s15, %s22
      %p24 = scmp.eq.s32.totalorder %s23, 0
      %s26 = sadd.s32 %s25, 1
      %s27 = scalar_select %p24, %s25, %s26
      %p30 = pneg %p24
      %p31 = scmp.eq.s32.totalorder %s15, 1
      %p32 = por %p30, %p31
      %p33 = scmp.ne.s32.totalorder %s25, %s28
      %p34 = scmp.eq.s32.totalorder %s15, 0
      %p35 = por %p33, %p34
      %p36 = scmp.ne.s32.totalorder %s25, %s28
      %p37 = scmp.eq.s32.totalorder %s20, 1
      %p38 = por %p36, %p37
      %p39 = scmp.ne.s32.totalorder %s28, %s29
      %p40 = scmp.eq.s32.totalorder %s20, 0
      %p41 = por %p39, %p40
      %p42 = scmp.ne.s32.totalorder %s28, %s29
      %p43 = scmp.eq.s32.totalorder %s21, 1
      %p44 = por %p42, %p43
      %p46 = scmp.ne.s32.totalorder %s29, %s45
      %p47 = scmp.eq.s32.totalorder %s21, 0
      %p48 = por %p46, %p47
      %s50 = sadd.s32 %s49, 1
      %p53 = scmp.eq.s32.totalorder %s15, 1
      %p54 = scmp.ne.s32.totalorder %s49, %s51
      %p55 = scmp.eq.s32.totalorder %s15, 0
      %p56 = por %p54, %p55
      %p57 = scmp.ne.s32.totalorder %s49, %s51
      %p58 = scmp.eq.s32.totalorder %s20, 1
      %p59 = por %p57, %p58
      %p60 = scmp.ne.s32.totalorder %s51, %s52
      %p61 = scmp.eq.s32.totalorder %s20, 0
      %p62 = por %p60, %p61
      %p63 = scmp.ne.s32.totalorder %s51, %s52
      %p64 = scmp.eq.s32.totalorder %s21, 1
      %p65 = por %p63, %p64
      %p67 = scmp.ne.s32.totalorder %s52, %s66
      %p68 = scmp.eq.s32.totalorder %s21, 0
      %p69 = por %p67, %p68
      %s71 = sadd.s32 %s70, 1
      %p74 = scmp.eq.s32.totalorder %s15, 1
      %p75 = scmp.ne.s32.totalorder %s70, %s72
      %p76 = scmp.eq.s32.totalorder %s15, 0
      %p77 = por %p75, %p76
      %p78 = scmp.ne.s32.totalorder %s70, %s72
      %p79 = scmp.eq.s32.totalorder %s20, 1
      %p80 = por %p78, %p79
      %p81 = scmp.ne.s32.totalorder %s72, %s73
      %p82 = scmp.eq.s32.totalorder %s20, 0
      %p83 = por %p81, %p82
      %p84 = scmp.ne.s32.totalorder %s72, %s73
      %p85 = scmp.eq.s32.totalorder %s21, 1
      %p86 = por %p84, %p85
      %p88 = scmp.ne.s32.totalorder %s73, %s87
      %p89 = scmp.eq.s32.totalorder %s21, 0
      %p90 = por %p88, %p89
      %s92 = sadd.s32 %s91, 1
      %p95 = scmp.eq.s32.totalorder %s15, 1
      %p96 = scmp.ne.s32.totalorder %s91, %s93
      %p97 = scmp.eq.s32.totalorder %s15, 0
      %p98 = por %p96, %p97
      %p99 = scmp.ne.s32.totalorder %s91, %s93
      %p100 = scmp.eq.s32.totalorder %s20, 1
      %p101 = por %p99, %p100
      %p102 = scmp.ne.s32.totalorder %s93, %s94
      %p103 = scmp.eq.s32.totalorder %s20, 0
      %p104 = por %p102, %p103
      %p105 = scmp.ne.s32.totalorder %s93, %s94
      %p106 = scmp.eq.s32.totalorder %s21, 1
      %p107 = por %p105, %p106
      %p109 = scmp.ne.s32.totalorder %s94, %s108
      %p110 = scmp.eq.s32.totalorder %s21, 0
      %p111 = por %p109, %p110
      %s113 = sadd.s32 %s112, 1
      %p116 = scmp.eq.s32.totalorder %s15, 1
      %p117 = scmp.ne.s32.totalorder %s112, %s114
      %p118 = scmp.eq.s32.totalorder %s15, 0
      %p119 = por %p117, %p118
      %p120 = scmp.ne.s32.totalorder %s112, %s114
      %p121 = scmp.eq.s32.totalorder %s20, 1
      %p122 = por %p120, %p121
      %p123 = scmp.ne.s32.totalorder %s114, %s115
      %p124 = scmp.eq.s32.totalorder %s20, 0
      %p125 = por %p123, %p124
      %p126 = scmp.ne.s32.totalorder %s114, %s115
      %p127 = scmp.eq.s32.totalorder %s21, 1
      %p128 = por %p126, %p127
      %p130 = scmp.ne.s32.totalorder %s115, %s129
      %p131 = scmp.eq.s32.totalorder %s21, 0
      %p132 = por %p130, %p131
      %s133 = ssub.s32 %s15, %s22
      %p134 = scmp.eq.s32.totalorder %s133, 0
      %s136 = sadd.s32 %s135, 1
      %s137 = scalar_select %p134, %s135, %s136
      %p140 = pneg %p134
      %p141 = scmp.eq.s32.totalorder %s15, 1
      %p142 = por %p140, %p141
      %p143 = scmp.ne.s32.totalorder %s135, %s138
      %p144 = scmp.eq.s32.totalorder %s15, 0
      %p145 = por %p143, %p144
      %p146 = scmp.ne.s32.totalorder %s135, %s138
      %p147 = scmp.eq.s32.totalorder %s20, 1
      %p148 = por %p146, %p147
      %p149 = scmp.ne.s32.totalorder %s138, %s139
      %p150 = scmp.eq.s32.totalorder %s20, 0
      %p151 = por %p149, %p150
      %p152 = scmp.ne.s32.totalorder %s138, %s139
      %p153 = scmp.eq.s32.totalorder %s21, 1
      %p154 = por %p152, %p153
      %p156 = scmp.ne.s32.totalorder %s139, %s155
      %p157 = scmp.eq.s32.totalorder %s21, 0
      %p158 = por %p156, %p157
      %p159 = scmp.le.s32.totalorder 1, %s15
      %p160 = scmp.lt.s32.totalorder %s15, 3
      %p161 = pnand %p159, %p160
      %p162 = pneg %p161
      // Predicated region
      $region9: #{tpu_custom_call.1} parent=5 // pred_check
        _
      $region10: #{tpu_custom_call.1} parent=5 // pred_check_branch
        %164 = sbr.rel (%p161) target = $region12
      $region11: #{tpu_custom_call.1} parent=5 // pred_region
        %s165 = ssub.s32 %s15, 1
        // Predicated region
        $region13: #{tpu_custom_call.1} parent=11 // pred_check
          %p166 = pneg %p62
        $region14: #{tpu_custom_call.1} parent=11 // pred_check_branch
          %168 = sbr.rel (%p166) target = $region16
        $region15: #{tpu_custom_call.1} parent=11 // pred_region
          _
        $region16: #{tpu_custom_call.1} parent=11 // pred_fallthru
          _
        // Predicated region
        $region17: #{tpu_custom_call.1} parent=11 // pred_check
          %p169 = pneg %p83
        $region18: #{tpu_custom_call.1} parent=11 // pred_check_branch
          %171 = sbr.rel (%p169) target = $region20
        $region19: #{tpu_custom_call.1} parent=11 // pred_region
          _
        $region20: #{tpu_custom_call.1} parent=11 // pred_fallthru
          _
        // Predicated region
        $region21: #{tpu_custom_call.1} parent=11 // pred_check
          %p172 = pneg %p104
        $region22: #{tpu_custom_call.1} parent=11 // pred_check_branch
          %174 = sbr.rel (%p172) target = $region24
        $region23: #{tpu_custom_call.1} parent=11 // pred_region
          %s176 = ssub.s32 18432, 18432
          %177 = vsyncadd [#allocation5], %s176
          %s178 = sshll.u32 [#allocation4], 4
          %s179 = int_to_ptr.vmem [resolvable:$true] %s178
          %184 = dma.hbm_to_vmem [thread:$0]  %s3, 18432, %s179, [#allocation5], 128, 128, 8
        $region24: #{tpu_custom_call.1} parent=11 // pred_fallthru
          _
        // Predicated region
        $region25: #{tpu_custom_call.1} parent=11 // pred_check
          %p185 = pneg %p125
        $region26: #{tpu_custom_call.1} parent=11 // pred_check_branch
          %187 = sbr.rel (%p185) target = $region28
        $region27: #{tpu_custom_call.1} parent=11 // pred_region
          _
        $region28: #{tpu_custom_call.1} parent=11 // pred_fallthru
          _
      $region12: #{tpu_custom_call.1} parent=5 // pred_fallthru
        _
      %p188 = scmp.lt.s32.totalorder %s15, 2
      // Predicated region
      $region29: #{tpu_custom_call.1} parent=5 // pred_check
        %p189 = pneg %p188
      $region30: #{tpu_custom_call.1} parent=5 // pred_check_branch
        %191 = sbr.rel (%p189) target = $region32
      $region31: #{tpu_custom_call.1} parent=5 // pred_region
        // Predicated region
        $region33: #{tpu_custom_call.1} parent=31 // pred_check
          %p192 = pneg %p35
        $region34: #{tpu_custom_call.1} parent=31 // pred_check_branch
          %194 = sbr.rel (%p192) target = $region36
        $region35: #{tpu_custom_call.1} parent=31 // pred_region
          %p195 = scmp.lt.s32.totalorder %s15, 1
          %s196 = scalar_select %p195, %s15, 1
          %s197 = smul.addr %s196, 32
          %s198 = smul.addr %s197, 8
          %s199 = scalar_lea.vmem %s0, %s198
        $region36: #{tpu_custom_call.1} parent=31 // pred_fallthru
          _
      $region32: #{tpu_custom_call.1} parent=5 // pred_fallthru
        _
      %p200 = scmp.le.s32.totalorder 1, %s15
      %p201 = scmp.lt.s32.totalorder %s15, 3
      %p202 = pnand %p200, %p201
      %p203 = pneg %p202
      // Predicated region
      $region37: #{tpu_custom_call.1} parent=5 // pred_check
        _
      $region38: #{tpu_custom_call.1} parent=5 // pred_check_branch
        %205 = sbr.rel (%p202) target = $region40
      $region39: #{tpu_custom_call.1} parent=5 // pred_region
        %s206 = ssub.s32 %s15, 1
        // Predicated region
        $region41: #{tpu_custom_call.1} parent=39 // pred_check
          %p207 = pneg %p104
        $region42: #{tpu_custom_call.1} parent=39 // pred_check_branch
          %209 = sbr.rel (%p207) target = $region44
        $region43: #{tpu_custom_call.1} parent=39 // pred_region
          %210 = dma.done [#allocation5], 18432
        $region44: #{tpu_custom_call.1} parent=39 // pred_fallthru
          _
        %p211 = scmp.lt.s32.totalorder %s20, 1
        %s212 = scalar_select %p211, %s20, 1
        %s213 = smul.addr %s212, 32
        %s214 = smul.addr %s213, 8
        %s215 = scalar_lea.vmem %s0, %s214
        %p216 = pneg %p41
        %p217 = pneg %p38
        %p218 = pneg %p62
        %p219 = pneg %p59
        %p220 = pneg %p83
        %p221 = pneg %p80
        %p222 = pneg %p104
        %p223 = pneg %p101
        %p224 = pneg %p125
        %p225 = pneg %p122
        %p226 = pneg %p151
        %p227 = pneg %p148
        %s228 = sand.u32 %s138, 1
        %s229 = scalar_lea.sflag [#allocation6], %s228
        %s230 = sand.u32 %s138, 1
        %s231 = smul.addr %s230, 256
        %s232 = scalar_lea.vmem [#allocation7], %s231
        %p233 = scmp.lt.s32.totalorder %s20, 1
        %s234 = scalar_select %p233, %s20, 1
        %s235 = smul.addr %s234, 32
        %s236 = smul.addr %s235, 8
        %s237 = scalar_lea.vmem %s0, %s236
        %vm238 = vcmask 31744
        %239 = vst.msk [vmem:[#allocation2] sm:$0xff] %vm238, 0.0
        %240 = vst.msk [vmem:[#allocation2 + $0x8] sm:$0xff] %vm238, 0.0
        %vm241 = vcmask 25600
        %242 = vst.msk [vmem:[#allocation2 + $0x10] sm:$0x3] %vm241, 0.0
        %243 = vst.msk [vmem:[#allocation2 + $0x18] sm:$0xff] %vm238, 0.0
        %244 = vst.msk [vmem:[#allocation2 + $0x20] sm:$0xff] %vm238, 0.0
        %245 = vst.msk [vmem:[#allocation2 + $0x28] sm:$0x3] %vm241, 0.0
        %246 = vst.msk [vmem:[#allocation2 + $0x30] sm:$0xff] %vm238, 0.0
        %247 = vst.msk [vmem:[#allocation2 + $0x38] sm:$0xff] %vm238, 0.0
        %248 = vst.msk [vmem:[#allocation2 + $0x40] sm:$0x3] %vm241, 0.0
        %249 = vst.msk [vmem:[#allocation2 + $0x48] sm:$0xff] %vm238, 0.0
        %250 = vst.msk [vmem:[#allocation2 + $0x50] sm:$0xff] %vm238, 0.0
        %251 = vst.msk [vmem:[#allocation2 + $0x58] sm:$0x3] %vm241, 0.0
        %252 = vst.msk [vmem:[#allocation2 + $0x60] sm:$0xff] %vm238, 0.0
        %253 = vst.msk [vmem:[#allocation2 + $0x68] sm:$0xff] %vm238, 0.0
        %254 = vst.msk [vmem:[#allocation2 + $0x70] sm:$0x3] %vm241, 0.0
        %255 = vst.msk [vmem:[#allocation2 + $0x78] sm:$0xff] %vm238, 0.0
        %256 = vst.msk [vmem:[#allocation2 + $0x80] sm:$0xff] %vm238, 0.0
        %257 = vst.msk [vmem:[#allocation2 + $0x88] sm:$0x3] %vm241, 0.0
        %258 = vst.msk [vmem:[#allocation2 + $0x90] sm:$0xff] %vm238, 0.0
        %259 = vst.msk [vmem:[#allocation2 + $0x98] sm:$0xff] %vm238, 0.0
        %260 = vst.msk [vmem:[#allocation2 + $0xa0] sm:$0x3] %vm241, 0.0
        %261 = vst.msk [vmem:[#allocation2 + $0xa8] sm:$0xff] %vm238, 0.0
        %262 = vst.msk [vmem:[#allocation2 + $0xb0] sm:$0xff] %vm238, 0.0
        %263 = vst.msk [vmem:[#allocation2 + $0xb8] sm:$0x3] %vm241, 0.0
        %264 = vst.msk [vmem:[#allocation2 + $0xc0] sm:$0xff] %vm238, 0.0
        %265 = vst.msk [vmem:[#allocation2 + $0xc8] sm:$0xff] %vm238, 0.0
        %266 = vst.msk [vmem:[#allocation2 + $0xd0] sm:$0x3] %vm241, 0.0
        %267 = vst.msk [vmem:[#allocation2 + $0xd8] sm:$0xff] %vm238, 0.0
        %268 = vst.msk [vmem:[#allocation2 + $0xe0] sm:$0xff] %vm238, 0.0
        %269 = vst.msk [vmem:[#allocation2 + $0xe8] sm:$0x3] %vm241, 0.0
        %270 = vst.msk [vmem:[#allocation2 + $0xf0] sm:$0xff] %vm238, 0.0
        %271 = vst.msk [vmem:[#allocation2 + $0xf8] sm:$0xff] %vm238, 0.0
        %272 = vst.msk [vmem:[#allocation2 + $0x100] sm:$0x3] %vm241, 0.0
        %273 = vst.msk [vmem:[#allocation2 + $0x108] sm:$0xff] %vm238, 0.0
        %274 = vst.msk [vmem:[#allocation2 + $0x110] sm:$0xff] %vm238, 0.0
        %275 = vst.msk [vmem:[#allocation2 + $0x118] sm:$0x3] %vm241, 0.0
        %276 = vst.msk [vmem:[#allocation2 + $0x120] sm:$0xff] %vm238, 0.0
        %277 = vst.msk [vmem:[#allocation2 + $0x128] sm:$0xff] %vm238, 0.0
        %278 = vst.msk [vmem:[#allocation2 + $0x130] sm:$0x3] %vm241, 0.0
        %279 = vst.msk [vmem:[#allocation2 + $0x138] sm:$0xff] %vm238, 0.0
        %280 = vst.msk [vmem:[#allocation2 + $0x140] sm:$0xff] %vm238, 0.0
        %281 = vst.msk [vmem:[#allocation2 + $0x148] sm:$0x3] %vm241, 0.0
        %282 = vst.msk [vmem:[#allocation2 + $0x150] sm:$0xff] %vm238, 0.0
        %283 = vst.msk [vmem:[#allocation2 + $0x158] sm:$0xff] %vm238, 0.0
        %284 = vst.msk [vmem:[#allocation2 + $0x160] sm:$0x3] %vm241, 0.0
        %285 = vst.msk [vmem:[#allocation2 + $0x168] sm:$0xff] %vm238, 0.0
        %286 = vst.msk [vmem:[#allocation2 + $0x170] sm:$0xff] %vm238, 0.0
        %287 = vst.msk [vmem:[#allocation2 + $0x178] sm:$0x3] %vm241, 0.0
        %288 = vst.msk [vmem:[#allocation2 + $0x180] sm:$0xff] %vm238, 0.0
        %289 = vst.msk [vmem:[#allocation2 + $0x188] sm:$0xff] %vm238, 0.0
        %290 = vst.msk [vmem:[#allocation2 + $0x190] sm:$0x3] %vm241, 0.0
        %291 = vst.msk [vmem:[#allocation2 + $0x198] sm:$0xff] %vm238, 0.0
        %292 = vst.msk [vmem:[#allocation2 + $0x1a0] sm:$0xff] %vm238, 0.0
        %293 = vst.msk [vmem:[#allocation2 + $0x1a8] sm:$0x3] %vm241, 0.0
        %294 = vst [vmem:[#allocation3] sm:$0xff] 0.0
        %295 = vst [vmem:[#allocation3 + $0x8] sm:$0xff] 0.0
        %296 = vst [vmem:[#allocation3 + $0x10] sm:$0x3] 0.0
        %297 = vst [vmem:[#allocation3 + $0x18] sm:$0xff] 0.0
        %298 = vst [vmem:[#allocation3 + $0x20] sm:$0xff] 0.0
        %299 = vst [vmem:[#allocation3 + $0x28] sm:$0x3] 0.0
        %300 = vst [vmem:[#allocation3 + $0x30] sm:$0xff] 0.0
        %301 = vst [vmem:[#allocation3 + $0x38] sm:$0xff] 0.0
        %302 = vst [vmem:[#allocation3 + $0x40] sm:$0x3] 0.0
        %303 = vst [vmem:[#allocation3 + $0x48] sm:$0xff] 0.0
        %304 = vst [vmem:[#allocation3 + $0x50] sm:$0xff] 0.0
        %305 = vst [vmem:[#allocation3 + $0x58] sm:$0x3] 0.0
        %306 = vst [vmem:[#allocation3 + $0x60] sm:$0xff] 0.0
        %307 = vst [vmem:[#allocation3 + $0x68] sm:$0xff] 0.0
        %308 = vst [vmem:[#allocation3 + $0x70] sm:$0x3] 0.0
        %309 = vst [vmem:[#allocation3 + $0x78] sm:$0xff] 0.0
        %310 = vst [vmem:[#allocation3 + $0x80] sm:$0xff] 0.0
        %311 = vst [vmem:[#allocation3 + $0x88] sm:$0x3] 0.0
        %312 = vst [vmem:[#allocation3 + $0x90] sm:$0xff] 0.0
        %313 = vst [vmem:[#allocation3 + $0x98] sm:$0xff] 0.0
        %314 = vst [vmem:[#allocation3 + $0xa0] sm:$0x3] 0.0
        %315 = vst [vmem:[#allocation3 + $0xa8] sm:$0xff] 0.0
        %316 = vst [vmem:[#allocation3 + $0xb0] sm:$0xff] 0.0
        %317 = vst [vmem:[#allocation3 + $0xb8] sm:$0x3] 0.0
        %318 = vst [vmem:[#allocation3 + $0xc0] sm:$0xff] 0.0
        %319 = vst [vmem:[#allocation3 + $0xc8] sm:$0xff] 0.0
        %320 = vst [vmem:[#allocation3 + $0xd0] sm:$0x3] 0.0
        %321 = vst [vmem:[#allocation3 + $0xd8] sm:$0xff] 0.0
        %322 = vst [vmem:[#allocation3 + $0xe0] sm:$0xff] 0.0
        %323 = vst [vmem:[#allocation3 + $0xe8] sm:$0x3] 0.0
        %324 = vst [vmem:[#allocation3 + $0xf0] sm:$0xff] 0.0
        %325 = vst [vmem:[#allocation3 + $0xf8] sm:$0xff] 0.0
        %326 = vst [vmem:[#allocation3 + $0x100] sm:$0x3] 0.0
        %327 = vst [vmem:[#allocation3 + $0x108] sm:$0xff] 0.0
        %328 = vst [vmem:[#allocation3 + $0x110] sm:$0xff] 0.0
        %329 = vst [vmem:[#allocation3 + $0x118] sm:$0x3] 0.0
        %330 = vst [vmem:[#allocation3 + $0x120] sm:$0xff] 0.0
        %331 = vst [vmem:[#allocation3 + $0x128] sm:$0xff] 0.0
        %332 = vst [vmem:[#allocation3 + $0x130] sm:$0x3] 0.0
        %333 = vst [vmem:[#allocation3 + $0x138] sm:$0xff] 0.0
        %334 = vst [vmem:[#allocation3 + $0x140] sm:$0xff] 0.0
        %335 = vst [vmem:[#allocation3 + $0x148] sm:$0x3] 0.0
        %336 = vst [vmem:[#allocation3 + $0x150] sm:$0xff] 0.0
        %337 = vst [vmem:[#allocation3 + $0x158] sm:$0xff] 0.0
        %338 = vst [vmem:[#allocation3 + $0x160] sm:$0x3] 0.0
        %339 = vst [vmem:[#allocation3 + $0x168] sm:$0xff] 0.0
        %340 = vst [vmem:[#allocation3 + $0x170] sm:$0xff] 0.0
        %341 = vst [vmem:[#allocation3 + $0x178] sm:$0x3] 0.0
        %342 = vst [vmem:[#allocation3 + $0x180] sm:$0xff] 0.0
        %343 = vst [vmem:[#allocation3 + $0x188] sm:$0xff] 0.0
        %344 = vst [vmem:[#allocation3 + $0x190] sm:$0x3] 0.0
        %345 = vst [vmem:[#allocation3 + $0x198] sm:$0xff] 0.0
        %346 = vst [vmem:[#allocation3 + $0x1a0] sm:$0xff] 0.0
        %347 = vst [vmem:[#allocation3 + $0x1a8] sm:$0x3] 0.0
        %v348 = vld [vmem:[%s237] sm:$0xff]
        %v349 = vld [vmem:[%s237 + $0x8] sm:$0xff]
        %v350 = vld [vmem:[%s237 + $0x10] sm:$0xff]
        %v351 = vld [vmem:[%s237 + $0x18] sm:$0xff]
        %v352 = vld [vmem:[%s237 + $0x20] sm:$0xff]
        %v353 = vld [vmem:[%s237 + $0x28] sm:$0xff]
        %v354 = vld [vmem:[%s237 + $0x30] sm:$0xff]
        %v355 = vld [vmem:[%s237 + $0x38] sm:$0xff]
        %v356 = vld [vmem:[%s237 + $0x40] sm:$0xff]
        %v357 = vld [vmem:[%s237 + $0x48] sm:$0xff]
        %v358 = vld [vmem:[%s237 + $0x50] sm:$0xff]
        %v359 = vld [vmem:[%s237 + $0x58] sm:$0xff]
        %v360 = vld [vmem:[%s237 + $0x60] sm:$0xff]
        %v361 = vld [vmem:[%s237 + $0x68] sm:$0xff]
        %v362 = vld [vmem:[%s237 + $0x70] sm:$0xff]
        %v363 = vld [vmem:[%s237 + $0x78] sm:$0xff]
        %v364 = vld [vmem:[%s237 + $0x80] sm:$0xff]
        %v365 = vld [vmem:[%s237 + $0x88] sm:$0xff]
        %v366 = vld [vmem:[%s237 + $0x90] sm:$0xff]
        %v367 = vld [vmem:[%s237 + $0x98] sm:$0xff]
        %v368 = vld [vmem:[%s237 + $0xa0] sm:$0xff]
        %v369 = vld [vmem:[%s237 + $0xa8] sm:$0xff]
        %v370 = vld [vmem:[%s237 + $0xb0] sm:$0xff]
        %v371 = vld [vmem:[%s237 + $0xb8] sm:$0xff]
        %v372 = vld [vmem:[%s237 + $0xc0] sm:$0xff]
        %v373 = vld [vmem:[%s237 + $0xc8] sm:$0xff]
        %v374 = vld [vmem:[%s237 + $0xd0] sm:$0xff]
        %v375 = vld [vmem:[%s237 + $0xd8] sm:$0xff]
        %v376 = vld [vmem:[%s237 + $0xe0] sm:$0xff]
        %v377 = vld [vmem:[%s237 + $0xe8] sm:$0xff]
        %v378 = vld [vmem:[%s237 + $0xf0] sm:$0xff]
        %v379 = vld [vmem:[%s237 + $0xf8] sm:$0xff]
        %s380 = scalar_lea.vmem [#allocation2], 24
        %381 = vst.msk [vmem:[%s380 + $0x1] sm:$0xff] %vm238, %v348
        %382 = vst.msk [vmem:[%s380 + $0x9] sm:$0xff] %vm238, %v349
        %383 = vst.msk [vmem:[%s380 + $0x19] sm:$0xff] %vm238, %v350
        %384 = vst.msk [vmem:[%s380 + $0x21] sm:$0xff] %vm238, %v351
        %385 = vst.msk [vmem:[%s380 + $0x31] sm:$0xff] %vm238, %v352
        %386 = vst.msk [vmem:[%s380 + $0x39] sm:$0xff] %vm238, %v353
        %387 = vst.msk [vmem:[%s380 + $0x49] sm:$0xff] %vm238, %v354
        %388 = vst.msk [vmem:[%s380 + $0x51] sm:$0xff] %vm238, %v355
        %389 = vst.msk [vmem:[%s380 + $0x61] sm:$0xff] %vm238, %v356
        %390 = vst.msk [vmem:[%s380 + $0x69] sm:$0xff] %vm238, %v357
        %391 = vst.msk [vmem:[%s380 + $0x79] sm:$0xff] %vm238, %v358
        %392 = vst.msk [vmem:[%s380 + $0x81] sm:$0xff] %vm238, %v359
        %393 = vst.msk [vmem:[%s380 + $0x91] sm:$0xff] %vm238, %v360
        %394 = vst.msk [vmem:[%s380 + $0x99] sm:$0xff] %vm238, %v361
        %395 = vst.msk [vmem:[%s380 + $0xa9] sm:$0xff] %vm238, %v362
        %396 = vst.msk [vmem:[%s380 + $0xb1] sm:$0xff] %vm238, %v363
        %397 = vst.msk [vmem:[%s380 + $0xc1] sm:$0xff] %vm238, %v364
        %398 = vst.msk [vmem:[%s380 + $0xc9] sm:$0xff] %vm238, %v365
        %399 = vst.msk [vmem:[%s380 + $0xd9] sm:$0xff] %vm238, %v366
        %400 = vst.msk [vmem:[%s380 + $0xe1] sm:$0xff] %vm238, %v367
        %401 = vst.msk [vmem:[%s380 + $0xf1] sm:$0xff] %vm238, %v368
        %402 = vst.msk [vmem:[%s380 + $0xf9] sm:$0xff] %vm238, %v369
        %403 = vst.msk [vmem:[%s380 + $0x109] sm:$0xff] %vm238, %v370
        %404 = vst.msk [vmem:[%s380 + $0x111] sm:$0xff] %vm238, %v371
        %405 = vst.msk [vmem:[%s380 + $0x121] sm:$0xff] %vm238, %v372
        %406 = vst.msk [vmem:[%s380 + $0x129] sm:$0xff] %vm238, %v373
        %407 = vst.msk [vmem:[%s380 + $0x139] sm:$0xff] %vm238, %v374
        %408 = vst.msk [vmem:[%s380 + $0x141] sm:$0xff] %vm238, %v375
        %409 = vst.msk [vmem:[%s380 + $0x151] sm:$0xff] %vm238, %v376
        %410 = vst.msk [vmem:[%s380 + $0x159] sm:$0xff] %vm238, %v377
        %411 = vst.msk [vmem:[%s380 + $0x169] sm:$0xff] %vm238, %v378
        %412 = vst.msk [vmem:[%s380 + $0x171] sm:$0xff] %vm238, %v379
        %v413 = vld [vmem:[#allocation2] sm:$0xff]
        %v414 = vld [vmem:[#allocation2 + $0x8] sm:$0xff]
        %v415 = vld [vmem:[#allocation2 + $0x18] sm:$0xff]
        %v416 = vld [vmem:[#allocation2 + $0x20] sm:$0xff]
        %v417 = vld [vmem:[#allocation2 + $0x30] sm:$0xff]
        %v418 = vld [vmem:[#allocation2 + $0x38] sm:$0xff]
        %v419 = vld [vmem:[#allocation2 + $0x48] sm:$0xff]
        %v420 = vld [vmem:[#allocation2 + $0x50] sm:$0xff]
        %v421 = vld [vmem:[#allocation2 + $0x60] sm:$0xff]
        %v422 = vld [vmem:[#allocation2 + $0x68] sm:$0xff]
        %v423 = vld [vmem:[#allocation2 + $0x78] sm:$0xff]
        %v424 = vld [vmem:[#allocation2 + $0x80] sm:$0xff]
        %v425 = vld [vmem:[#allocation2 + $0x90] sm:$0xff]
        %v426 = vld [vmem:[#allocation2 + $0x98] sm:$0xff]
        %v427 = vld [vmem:[#allocation2 + $0xa8] sm:$0xff]
        %v428 = vld [vmem:[#allocation2 + $0xb0] sm:$0xff]
        %v429 = vld [vmem:[#allocation2 + $0xc0] sm:$0xff]
        %v430 = vld [vmem:[#allocation2 + $0xc8] sm:$0xff]
        %v431 = vld [vmem:[#allocation2 + $0xd8] sm:$0xff]
        %v432 = vld [vmem:[#allocation2 + $0xe0] sm:$0xff]
        %v433 = vld [vmem:[#allocation2 + $0xf0] sm:$0xff]
        %v434 = vld [vmem:[#allocation2 + $0xf8] sm:$0xff]
        %v435 = vld [vmem:[#allocation2 + $0x108] sm:$0xff]
        %v436 = vld [vmem:[#allocation2 + $0x110] sm:$0xff]
        %v437 = vld [vmem:[#allocation2 + $0x120] sm:$0xff]
        %v438 = vld [vmem:[#allocation2 + $0x128] sm:$0xff]
        %v439 = vld [vmem:[#allocation2 + $0x138] sm:$0xff]
        %v440 = vld [vmem:[#allocation2 + $0x140] sm:$0xff]
        %v441 = vld [vmem:[#allocation2 + $0x150] sm:$0xff]
        %v442 = vld [vmem:[#allocation2 + $0x158] sm:$0xff]
        %v443 = vld [vmem:[#allocation2 + $0x168] sm:$0xff]
        %v444 = vld [vmem:[#allocation2 + $0x170] sm:$0xff]
        %v445 = vld [vmem:[#allocation2 + $0x1] sm:$0xff]
        %v446 = vld [vmem:[#allocation2 + $0x9] sm:$0xff]
        %v447 = vld [vmem:[#allocation2 + $0x19] sm:$0xff]
        %v448 = vld [vmem:[#allocation2 + $0x21] sm:$0xff]
        %v449 = vld [vmem:[#allocation2 + $0x31] sm:$0xff]
        %v450 = vld [vmem:[#allocation2 + $0x39] sm:$0xff]
        %v451 = vld [vmem:[#allocation2 + $0x49] sm:$0xff]
        %v452 = vld [vmem:[#allocation2 + $0x51] sm:$0xff]
        %v453 = vld [vmem:[#allocation2 + $0x61] sm:$0xff]
        %v454 = vld [vmem:[#allocation2 + $0x69] sm:$0xff]
        %v455 = vld [vmem:[#allocation2 + $0x79] sm:$0xff]
        %v456 = vld [vmem:[#allocation2 + $0x81] sm:$0xff]
        %v457 = vld [vmem:[#allocation2 + $0x91] sm:$0xff]
        %v458 = vld [vmem:[#allocation2 + $0x99] sm:$0xff]
        %v459 = vld [vmem:[#allocation2 + $0xa9] sm:$0xff]
        %v460 = vld [vmem:[#allocation2 + $0xb1] sm:$0xff]
        %v461 = vld [vmem:[#allocation2 + $0xc1] sm:$0xff]
        %v462 = vld [vmem:[#allocation2 + $0xc9] sm:$0xff]
        %v463 = vld [vmem:[#allocation2 + $0xd9] sm:$0xff]
        %v464 = vld [vmem:[#allocation2 + $0xe1] sm:$0xff]
        %v465 = vld [vmem:[#allocation2 + $0xf1] sm:$0xff]
        %v466 = vld [vmem:[#allocation2 + $0xf9] sm:$0xff]
        %v467 = vld [vmem:[#allocation2 + $0x109] sm:$0xff]
        %v468 = vld [vmem:[#allocation2 + $0x111] sm:$0xff]
        %v469 = vld [vmem:[#allocation2 + $0x121] sm:$0xff]
        %v470 = vld [vmem:[#allocation2 + $0x129] sm:$0xff]
        %v471 = vld [vmem:[#allocation2 + $0x139] sm:$0xff]
        %v472 = vld [vmem:[#allocation2 + $0x141] sm:$0xff]
        %v473 = vld [vmem:[#allocation2 + $0x151] sm:$0xff]
        %v474 = vld [vmem:[#allocation2 + $0x159] sm:$0xff]
        %v475 = vld [vmem:[#allocation2 + $0x169] sm:$0xff]
        %v476 = vld [vmem:[#allocation2 + $0x171] sm:$0xff]
        %v477 = vld [vmem:[#allocation2 + $0x2] sm:$0xff]
        %v478 = vld [vmem:[#allocation2 + $0xa] sm:$0xff]
        %v479 = vld [vmem:[#allocation2 + $0x1a] sm:$0xff]
        %v480 = vld [vmem:[#allocation2 + $0x22] sm:$0xff]
        %v481 = vld [vmem:[#allocation2 + $0x32] sm:$0xff]
        %v482 = vld [vmem:[#allocation2 + $0x3a] sm:$0xff]
        %v483 = vld [vmem:[#allocation2 + $0x4a] sm:$0xff]
        %v484 = vld [vmem:[#allocation2 + $0x52] sm:$0xff]
        %v485 = vld [vmem:[#allocation2 + $0x62] sm:$0xff]
        %v486 = vld [vmem:[#allocation2 + $0x6a] sm:$0xff]
        %v487 = vld [vmem:[#allocation2 + $0x7a] sm:$0xff]
        %v488 = vld [vmem:[#allocation2 + $0x82] sm:$0xff]
        %v489 = vld [vmem:[#allocation2 + $0x92] sm:$0xff]
        %v490 = vld [vmem:[#allocation2 + $0x9a] sm:$0xff]
        %v491 = vld [vmem:[#allocation2 + $0xaa] sm:$0xff]
        %v492 = vld [vmem:[#allocation2 + $0xb2] sm:$0xff]
        %v493 = vld [vmem:[#allocation2 + $0xc2] sm:$0xff]
        %v494 = vld [vmem:[#allocation2 + $0xca] sm:$0xff]
        %v495 = vld [vmem:[#allocation2 + $0xda] sm:$0xff]
        %v496 = vld [vmem:[#allocation2 + $0xe2] sm:$0xff]
        %v497 = vld [vmem:[#allocation2 + $0xf2] sm:$0xff]
        %v498 = vld [vmem:[#allocation2 + $0xfa] sm:$0xff]
        %v499 = vld [vmem:[#allocation2 + $0x10a] sm:$0xff]
        %v500 = vld [vmem:[#allocation2 + $0x112] sm:$0xff]
        %v501 = vld [vmem:[#allocation2 + $0x122] sm:$0xff]
        %v502 = vld [vmem:[#allocation2 + $0x12a] sm:$0xff]
        %v503 = vld [vmem:[#allocation2 + $0x13a] sm:$0xff]
        %v504 = vld [vmem:[#allocation2 + $0x142] sm:$0xff]
        %v505 = vld [vmem:[#allocation2 + $0x152] sm:$0xff]
        %v506 = vld [vmem:[#allocation2 + $0x15a] sm:$0xff]
        %v507 = vld [vmem:[#allocation2 + $0x16a] sm:$0xff]
        %v508 = vld [vmem:[#allocation2 + $0x172] sm:$0xff]
        %v509 = vld [vmem:[%s380] sm:$0xff]
        %v510 = vld [vmem:[%s380 + $0x8] sm:$0xff]
        %v511 = vld [vmem:[%s380 + $0x18] sm:$0xff]
        %v512 = vld [vmem:[%s380 + $0x20] sm:$0xff]
        %v513 = vld [vmem:[%s380 + $0x30] sm:$0xff]
        %v514 = vld [vmem:[%s380 + $0x38] sm:$0xff]
        %v515 = vld [vmem:[%s380 + $0x48] sm:$0xff]
        %v516 = vld [vmem:[%s380 + $0x50] sm:$0xff]
        %v517 = vld [vmem:[%s380 + $0x60] sm:$0xff]
        %v518 = vld [vmem:[%s380 + $0x68] sm:$0xff]
        %v519 = vld [vmem:[%s380 + $0x78] sm:$0xff]
        %v520 = vld [vmem:[%s380 + $0x80] sm:$0xff]
        %v521 = vld [vmem:[%s380 + $0x90] sm:$0xff]
        %v522 = vld [vmem:[%s380 + $0x98] sm:$0xff]
        %v523 = vld [vmem:[%s380 + $0xa8] sm:$0xff]
        %v524 = vld [vmem:[%s380 + $0xb0] sm:$0xff]
        %v525 = vld [vmem:[%s380 + $0xc0] sm:$0xff]
        %v526 = vld [vmem:[%s380 + $0xc8] sm:$0xff]
        %v527 = vld [vmem:[%s380 + $0xd8] sm:$0xff]
        %v528 = vld [vmem:[%s380 + $0xe0] sm:$0xff]
        %v529 = vld [vmem:[%s380 + $0xf0] sm:$0xff]
        %v530 = vld [vmem:[%s380 + $0xf8] sm:$0xff]
        %v531 = vld [vmem:[%s380 + $0x108] sm:$0xff]
        %v532 = vld [vmem:[%s380 + $0x110] sm:$0xff]
        %v533 = vld [vmem:[%s380 + $0x120] sm:$0xff]
        %v534 = vld [vmem:[%s380 + $0x128] sm:$0xff]
        %v535 = vld [vmem:[%s380 + $0x138] sm:$0xff]
        %v536 = vld [vmem:[%s380 + $0x140] sm:$0xff]
        %v537 = vld [vmem:[%s380 + $0x150] sm:$0xff]
        %v538 = vld [vmem:[%s380 + $0x158] sm:$0xff]
        %v539 = vld [vmem:[%s380 + $0x168] sm:$0xff]
        %v540 = vld [vmem:[%s380 + $0x170] sm:$0xff]
        %v541 = vld [vmem:[%s380 + $0x1] sm:$0xff]
        %v542 = vld [vmem:[%s380 + $0x9] sm:$0xff]
        %v543 = vld [vmem:[%s380 + $0x19] sm:$0xff]
        %v544 = vld [vmem:[%s380 + $0x21] sm:$0xff]
        %v545 = vld [vmem:[%s380 + $0x31] sm:$0xff]
        %v546 = vld [vmem:[%s380 + $0x39] sm:$0xff]
        %v547 = vld [vmem:[%s380 + $0x49] sm:$0xff]
        %v548 = vld [vmem:[%s380 + $0x51] sm:$0xff]
        %v549 = vld [vmem:[%s380 + $0x61] sm:$0xff]
        %v550 = vld [vmem:[%s380 + $0x69] sm:$0xff]
        %v551 = vld [vmem:[%s380 + $0x79] sm:$0xff]
        %v552 = vld [vmem:[%s380 + $0x81] sm:$0xff]
        %v553 = vld [vmem:[%s380 + $0x91] sm:$0xff]
        %v554 = vld [vmem:[%s380 + $0x99] sm:$0xff]
        %v555 = vld [vmem:[%s380 + $0xa9] sm:$0xff]
        %v556 = vld [vmem:[%s380 + $0xb1] sm:$0xff]
        %v557 = vld [vmem:[%s380 + $0xc1] sm:$0xff]
        %v558 = vld [vmem:[%s380 + $0xc9] sm:$0xff]
        %v559 = vld [vmem:[%s380 + $0xd9] sm:$0xff]
        %v560 = vld [vmem:[%s380 + $0xe1] sm:$0xff]
        %v561 = vld [vmem:[%s380 + $0xf1] sm:$0xff]
        %v562 = vld [vmem:[%s380 + $0xf9] sm:$0xff]
        %v563 = vld [vmem:[%s380 + $0x109] sm:$0xff]
        %v564 = vld [vmem:[%s380 + $0x111] sm:$0xff]
        %v565 = vld [vmem:[%s380 + $0x121] sm:$0xff]
        %v566 = vld [vmem:[%s380 + $0x129] sm:$0xff]
        %v567 = vld [vmem:[%s380 + $0x139] sm:$0xff]
        %v568 = vld [vmem:[%s380 + $0x141] sm:$0xff]
        %v569 = vld [vmem:[%s380 + $0x151] sm:$0xff]
        %v570 = vld [vmem:[%s380 + $0x159] sm:$0xff]
        %v571 = vld [vmem:[%s380 + $0x169] sm:$0xff]
        %v572 = vld [vmem:[%s380 + $0x171] sm:$0xff]
        %v573 = vld [vmem:[%s380 + $0x2] sm:$0xff]
        %v574 = vld [vmem:[%s380 + $0xa] sm:$0xff]
        %v575 = vld [vmem:[%s380 + $0x1a] sm:$0xff]
        %v576 = vld [vmem:[%s380 + $0x22] sm:$0xff]
        %v577 = vld [vmem:[%s380 + $0x32] sm:$0xff]
        %v578 = vld [vmem:[%s380 + $0x3a] sm:$0xff]
        %v579 = vld [vmem:[%s380 + $0x4a] sm:$0xff]
        %v580 = vld [vmem:[%s380 + $0x52] sm:$0xff]
        %v581 = vld [vmem:[%s380 + $0x62] sm:$0xff]
        %v582 = vld [vmem:[%s380 + $0x6a] sm:$0xff]
        %v583 = vld [vmem:[%s380 + $0x7a] sm:$0xff]
        %v584 = vld [vmem:[%s380 + $0x82] sm:$0xff]
        %v585 = vld [vmem:[%s380 + $0x92] sm:$0xff]
        %v586 = vld [vmem:[%s380 + $0x9a] sm:$0xff]
        %v587 = vld [vmem:[%s380 + $0xaa] sm:$0xff]
        %v588 = vld [vmem:[%s380 + $0xb2] sm:$0xff]
        %v589 = vld [vmem:[%s380 + $0xc2] sm:$0xff]
        %v590 = vld [vmem:[%s380 + $0xca] sm:$0xff]
        %v591 = vld [vmem:[%s380 + $0xda] sm:$0xff]
        %v592 = vld [vmem:[%s380 + $0xe2] sm:$0xff]
        %v593 = vld [vmem:[%s380 + $0xf2] sm:$0xff]
        %v594 = vld [vmem:[%s380 + $0xfa] sm:$0xff]
        %v595 = vld [vmem:[%s380 + $0x10a] sm:$0xff]
        %v596 = vld [vmem:[%s380 + $0x112] sm:$0xff]
        %v597 = vld [vmem:[%s380 + $0x122] sm:$0xff]
        %v598 = vld [vmem:[%s380 + $0x12a] sm:$0xff]
        %v599 = vld [vmem:[%s380 + $0x13a] sm:$0xff]
        %v600 = vld [vmem:[%s380 + $0x142] sm:$0xff]
        %v601 = vld [vmem:[%s380 + $0x152] sm:$0xff]
        %v602 = vld [vmem:[%s380 + $0x15a] sm:$0xff]
        %v603 = vld [vmem:[%s380 + $0x16a] sm:$0xff]
        %v604 = vld [vmem:[%s380 + $0x172] sm:$0xff]
        %s605 = scalar_lea.vmem [#allocation2], 48
        %v606 = vld [vmem:[%s605] sm:$0xff]
        %v607 = vld [vmem:[%s605 + $0x8] sm:$0xff]
        %v608 = vld [vmem:[%s605 + $0x18] sm:$0xff]
        %v609 = vld [vmem:[%s605 + $0x20] sm:$0xff]
        %v610 = vld [vmem:[%s605 + $0x30] sm:$0xff]
        %v611 = vld [vmem:[%s605 + $0x38] sm:$0xff]
        %v612 = vld [vmem:[%s605 + $0x48] sm:$0xff]
        %v613 = vld [vmem:[%s605 + $0x50] sm:$0xff]
        %v614 = vld [vmem:[%s605 + $0x60] sm:$0xff]
        %v615 = vld [vmem:[%s605 + $0x68] sm:$0xff]
        %v616 = vld [vmem:[%s605 + $0x78] sm:$0xff]
        %v617 = vld [vmem:[%s605 + $0x80] sm:$0xff]
        %v618 = vld [vmem:[%s605 + $0x90] sm:$0xff]
        %v619 = vld [vmem:[%s605 + $0x98] sm:$0xff]
        %v620 = vld [vmem:[%s605 + $0xa8] sm:$0xff]
        %v621 = vld [vmem:[%s605 + $0xb0] sm:$0xff]
        %v622 = vld [vmem:[%s605 + $0xc0] sm:$0xff]
        %v623 = vld [vmem:[%s605 + $0xc8] sm:$0xff]
        %v624 = vld [vmem:[%s605 + $0xd8] sm:$0xff]
        %v625 = vld [vmem:[%s605 + $0xe0] sm:$0xff]
        %v626 = vld [vmem:[%s605 + $0xf0] sm:$0xff]
        %v627 = vld [vmem:[%s605 + $0xf8] sm:$0xff]
        %v628 = vld [vmem:[%s605 + $0x108] sm:$0xff]
        %v629 = vld [vmem:[%s605 + $0x110] sm:$0xff]
        %v630 = vld [vmem:[%s605 + $0x120] sm:$0xff]
        %v631 = vld [vmem:[%s605 + $0x128] sm:$0xff]
        %v632 = vld [vmem:[%s605 + $0x138] sm:$0xff]
        %v633 = vld [vmem:[%s605 + $0x140] sm:$0xff]
        %v634 = vld [vmem:[%s605 + $0x150] sm:$0xff]
        %v635 = vld [vmem:[%s605 + $0x158] sm:$0xff]
        %v636 = vld [vmem:[%s605 + $0x168] sm:$0xff]
        %v637 = vld [vmem:[%s605 + $0x170] sm:$0xff]
        %v638 = vld [vmem:[%s605 + $0x1] sm:$0xff]
        %v639 = vld [vmem:[%s605 + $0x9] sm:$0xff]
        %v640 = vld [vmem:[%s605 + $0x19] sm:$0xff]
        %v641 = vld [vmem:[%s605 + $0x21] sm:$0xff]
        %v642 = vld [vmem:[%s605 + $0x31] sm:$0xff]
        %v643 = vld [vmem:[%s605 + $0x39] sm:$0xff]
        %v644 = vld [vmem:[%s605 + $0x49] sm:$0xff]
        %v645 = vld [vmem:[%s605 + $0x51] sm:$0xff]
        %v646 = vld [vmem:[%s605 + $0x61] sm:$0xff]
        %v647 = vld [vmem:[%s605 + $0x69] sm:$0xff]
        %v648 = vld [vmem:[%s605 + $0x79] sm:$0xff]
        %v649 = vld [vmem:[%s605 + $0x81] sm:$0xff]
        %v650 = vld [vmem:[%s605 + $0x91] sm:$0xff]
        %v651 = vld [vmem:[%s605 + $0x99] sm:$0xff]
        %v652 = vld [vmem:[%s605 + $0xa9] sm:$0xff]
        %v653 = vld [vmem:[%s605 + $0xb1] sm:$0xff]
        %v654 = vld [vmem:[%s605 + $0xc1] sm:$0xff]
        %v655 = vld [vmem:[%s605 + $0xc9] sm:$0xff]
        %v656 = vld [vmem:[%s605 + $0xd9] sm:$0xff]
        %v657 = vld [vmem:[%s605 + $0xe1] sm:$0xff]
        %v658 = vld [vmem:[%s605 + $0xf1] sm:$0xff]
        %v659 = vld [vmem:[%s605 + $0xf9] sm:$0xff]
        %v660 = vld [vmem:[%s605 + $0x109] sm:$0xff]
        %v661 = vld [vmem:[%s605 + $0x111] sm:$0xff]
        %v662 = vld [vmem:[%s605 + $0x121] sm:$0xff]
        %v663 = vld [vmem:[%s605 + $0x129] sm:$0xff]
        %v664 = vld [vmem:[%s605 + $0x139] sm:$0xff]
        %v665 = vld [vmem:[%s605 + $0x141] sm:$0xff]
        %v666 = vld [vmem:[%s605 + $0x151] sm:$0xff]
        %v667 = vld [vmem:[%s605 + $0x159] sm:$0xff]
        %v668 = vld [vmem:[%s605 + $0x169] sm:$0xff]
        %v669 = vld [vmem:[%s605 + $0x171] sm:$0xff]
        %v670 = vld [vmem:[%s605 + $0x2] sm:$0xff]
        %v671 = vld [vmem:[%s605 + $0xa] sm:$0xff]
        %v672 = vld [vmem:[%s605 + $0x1a] sm:$0xff]
        %v673 = vld [vmem:[%s605 + $0x22] sm:$0xff]
        %v674 = vld [vmem:[%s605 + $0x32] sm:$0xff]
        %v675 = vld [vmem:[%s605 + $0x3a] sm:$0xff]
        %v676 = vld [vmem:[%s605 + $0x4a] sm:$0xff]
        %v677 = vld [vmem:[%s605 + $0x52] sm:$0xff]
        %v678 = vld [vmem:[%s605 + $0x62] sm:$0xff]
        %v679 = vld [vmem:[%s605 + $0x6a] sm:$0xff]
        %v680 = vld [vmem:[%s605 + $0x7a] sm:$0xff]
        %v681 = vld [vmem:[%s605 + $0x82] sm:$0xff]
        %v682 = vld [vmem:[%s605 + $0x92] sm:$0xff]
        %v683 = vld [vmem:[%s605 + $0x9a] sm:$0xff]
        %v684 = vld [vmem:[%s605 + $0xaa] sm:$0xff]
        %v685 = vld [vmem:[%s605 + $0xb2] sm:$0xff]
        %v686 = vld [vmem:[%s605 + $0xc2] sm:$0xff]
        %v687 = vld [vmem:[%s605 + $0xca] sm:$0xff]
        %v688 = vld [vmem:[%s605 + $0xda] sm:$0xff]
        %v689 = vld [vmem:[%s605 + $0xe2] sm:$0xff]
        %v690 = vld [vmem:[%s605 + $0xf2] sm:$0xff]
        %v691 = vld [vmem:[%s605 + $0xfa] sm:$0xff]
        %v692 = vld [vmem:[%s605 + $0x10a] sm:$0xff]
        %v693 = vld [vmem:[%s605 + $0x112] sm:$0xff]
        %v694 = vld [vmem:[%s605 + $0x122] sm:$0xff]
        %v695 = vld [vmem:[%s605 + $0x12a] sm:$0xff]
        %v696 = vld [vmem:[%s605 + $0x13a] sm:$0xff]
        %v697 = vld [vmem:[%s605 + $0x142] sm:$0xff]
        %v698 = vld [vmem:[%s605 + $0x152] sm:$0xff]
        %v699 = vld [vmem:[%s605 + $0x15a] sm:$0xff]
        %v700 = vld [vmem:[%s605 + $0x16a] sm:$0xff]
        %v701 = vld [vmem:[%s605 + $0x172] sm:$0xff]
        %734 = vrot.lane.b32.xlu0 %v445, 4
        %v735 = vpop.permute.xlu0 %734
        %736 = vrot.lane.b32.xlu0 %v446, 4
        %v737 = vpop.permute.xlu0 %736
        %738 = vrot.lane.b32.xlu0 %v447, 4
        %v739 = vpop.permute.xlu0 %738
        %740 = vrot.lane.b32.xlu0 %v448, 4
        %v741 = vpop.permute.xlu0 %740
        %742 = vrot.lane.b32.xlu0 %v449, 4
        %v743 = vpop.permute.xlu0 %742
        %744 = vrot.lane.b32.xlu0 %v450, 4
        %v745 = vpop.permute.xlu0 %744
        %746 = vrot.lane.b32.xlu0 %v451, 4
        %v747 = vpop.permute.xlu0 %746
        %748 = vrot.lane.b32.xlu0 %v452, 4
        %v749 = vpop.permute.xlu0 %748
        %750 = vrot.lane.b32.xlu0 %v453, 4
        %v751 = vpop.permute.xlu0 %750
        %752 = vrot.lane.b32.xlu0 %v454, 4
        %v753 = vpop.permute.xlu0 %752
        %754 = vrot.lane.b32.xlu0 %v455, 4
        %v755 = vpop.permute.xlu0 %754
        %756 = vrot.lane.b32.xlu0 %v456, 4
        %v757 = vpop.permute.xlu0 %756
        %758 = vrot.lane.b32.xlu0 %v457, 4
        %v759 = vpop.permute.xlu0 %758
        %760 = vrot.lane.b32.xlu0 %v458, 4
        %v761 = vpop.permute.xlu0 %760
        %762 = vrot.lane.b32.xlu0 %v459, 4
        %v763 = vpop.permute.xlu0 %762
        %764 = vrot.lane.b32.xlu0 %v460, 4
        %v765 = vpop.permute.xlu0 %764
        %766 = vrot.lane.b32.xlu0 %v461, 4
        %v767 = vpop.permute.xlu0 %766
        %768 = vrot.lane.b32.xlu0 %v462, 4
        %v769 = vpop.permute.xlu0 %768
        %770 = vrot.lane.b32.xlu0 %v463, 4
        %v771 = vpop.permute.xlu0 %770
        %772 = vrot.lane.b32.xlu0 %v464, 4
        %v773 = vpop.permute.xlu0 %772
        %774 = vrot.lane.b32.xlu0 %v465, 4
        %v775 = vpop.permute.xlu0 %774
        %776 = vrot.lane.b32.xlu0 %v466, 4
        %v777 = vpop.permute.xlu0 %776
        %778 = vrot.lane.b32.xlu0 %v467, 4
        %v779 = vpop.permute.xlu0 %778
        %780 = vrot.lane.b32.xlu0 %v468, 4
        %v781 = vpop.permute.xlu0 %780
        %782 = vrot.lane.b32.xlu0 %v469, 4
        %v783 = vpop.permute.xlu0 %782
        %784 = vrot.lane.b32.xlu0 %v470, 4
        %v785 = vpop.permute.xlu0 %784
        %786 = vrot.lane.b32.xlu0 %v471, 4
        %v787 = vpop.permute.xlu0 %786
        %788 = vrot.lane.b32.xlu0 %v472, 4
        %v789 = vpop.permute.xlu0 %788
        %790 = vrot.lane.b32.xlu0 %v473, 4
        %v791 = vpop.permute.xlu0 %790
        %792 = vrot.lane.b32.xlu0 %v474, 4
        %v793 = vpop.permute.xlu0 %792
        %794 = vrot.lane.b32.xlu0 %v475, 4
        %v795 = vpop.permute.xlu0 %794
        %796 = vrot.lane.b32.xlu0 %v476, 4
        %v797 = vpop.permute.xlu0 %796
        %862 = vrot.lane.b32.xlu0 %v477, 8
        %v863 = vpop.permute.xlu0 %862
        %864 = vrot.lane.b32.xlu0 %v478, 8
        %v865 = vpop.permute.xlu0 %864
        %866 = vrot.lane.b32.xlu0 %v479, 8
        %v867 = vpop.permute.xlu0 %866
        %868 = vrot.lane.b32.xlu0 %v480, 8
        %v869 = vpop.permute.xlu0 %868
        %870 = vrot.lane.b32.xlu0 %v481, 8
        %v871 = vpop.permute.xlu0 %870
        %872 = vrot.lane.b32.xlu0 %v482, 8
        %v873 = vpop.permute.xlu0 %872
        %874 = vrot.lane.b32.xlu0 %v483, 8
        %v875 = vpop.permute.xlu0 %874
        %876 = vrot.lane.b32.xlu0 %v484, 8
        %v877 = vpop.permute.xlu0 %876
        %878 = vrot.lane.b32.xlu0 %v485, 8
        %v879 = vpop.permute.xlu0 %878
        %880 = vrot.lane.b32.xlu0 %v486, 8
        %v881 = vpop.permute.xlu0 %880
        %882 = vrot.lane.b32.xlu0 %v487, 8
        %v883 = vpop.permute.xlu0 %882
        %884 = vrot.lane.b32.xlu0 %v488, 8
        %v885 = vpop.permute.xlu0 %884
        %886 = vrot.lane.b32.xlu0 %v489, 8
        %v887 = vpop.permute.xlu0 %886
        %888 = vrot.lane.b32.xlu0 %v490, 8
        %v889 = vpop.permute.xlu0 %888
        %890 = vrot.lane.b32.xlu0 %v491, 8
        %v891 = vpop.permute.xlu0 %890
        %892 = vrot.lane.b32.xlu0 %v492, 8
        %v893 = vpop.permute.xlu0 %892
        %894 = vrot.lane.b32.xlu0 %v493, 8
        %v895 = vpop.permute.xlu0 %894
        %896 = vrot.lane.b32.xlu0 %v494, 8
        %v897 = vpop.permute.xlu0 %896
        %898 = vrot.lane.b32.xlu0 %v495, 8
        %v899 = vpop.permute.xlu0 %898
        %900 = vrot.lane.b32.xlu0 %v496, 8
        %v901 = vpop.permute.xlu0 %900
        %902 = vrot.lane.b32.xlu0 %v497, 8
        %v903 = vpop.permute.xlu0 %902
        %904 = vrot.lane.b32.xlu0 %v498, 8
        %v905 = vpop.permute.xlu0 %904
        %906 = vrot.lane.b32.xlu0 %v499, 8
        %v907 = vpop.permute.xlu0 %906
        %908 = vrot.lane.b32.xlu0 %v500, 8
        %v909 = vpop.permute.xlu0 %908
        %910 = vrot.lane.b32.xlu0 %v501, 8
        %v911 = vpop.permute.xlu0 %910
        %912 = vrot.lane.b32.xlu0 %v502, 8
        %v913 = vpop.permute.xlu0 %912
        %914 = vrot.lane.b32.xlu0 %v503, 8
        %v915 = vpop.permute.xlu0 %914
        %916 = vrot.lane.b32.xlu0 %v504, 8
        %v917 = vpop.permute.xlu0 %916
        %918 = vrot.lane.b32.xlu0 %v505, 8
        %v919 = vpop.permute.xlu0 %918
        %920 = vrot.lane.b32.xlu0 %v506, 8
        %v921 = vpop.permute.xlu0 %920
        %922 = vrot.lane.b32.xlu0 %v507, 8
        %v923 = vpop.permute.xlu0 %922
        %924 = vrot.lane.b32.xlu0 %v508, 8
        %v925 = vpop.permute.xlu0 %924
        %990 = vrot.lane.b32.xlu0 %v509, 12
        %v991 = vpop.permute.xlu0 %990
        %992 = vrot.lane.b32.xlu0 %v510, 12
        %v993 = vpop.permute.xlu0 %992
        %994 = vrot.lane.b32.xlu0 %v511, 12
        %v995 = vpop.permute.xlu0 %994
        %996 = vrot.lane.b32.xlu0 %v512, 12
        %v997 = vpop.permute.xlu0 %996
        %998 = vrot.lane.b32.xlu0 %v513, 12
        %v999 = vpop.permute.xlu0 %998
        %1000 = vrot.lane.b32.xlu0 %v514, 12
        %v1001 = vpop.permute.xlu0 %1000
        %1002 = vrot.lane.b32.xlu0 %v515, 12
        %v1003 = vpop.permute.xlu0 %1002
        %1004 = vrot.lane.b32.xlu0 %v516, 12
        %v1005 = vpop.permute.xlu0 %1004
        %1006 = vrot.lane.b32.xlu0 %v517, 12
        %v1007 = vpop.permute.xlu0 %1006
        %1008 = vrot.lane.b32.xlu0 %v518, 12
        %v1009 = vpop.permute.xlu0 %1008
        %1010 = vrot.lane.b32.xlu0 %v519, 12
        %v1011 = vpop.permute.xlu0 %1010
        %1012 = vrot.lane.b32.xlu0 %v520, 12
        %v1013 = vpop.permute.xlu0 %1012
        %1014 = vrot.lane.b32.xlu0 %v521, 12
        %v1015 = vpop.permute.xlu0 %1014
        %1016 = vrot.lane.b32.xlu0 %v522, 12
        %v1017 = vpop.permute.xlu0 %1016
        %1018 = vrot.lane.b32.xlu0 %v523, 12
        %v1019 = vpop.permute.xlu0 %1018
        %1020 = vrot.lane.b32.xlu0 %v524, 12
        %v1021 = vpop.permute.xlu0 %1020
        %1022 = vrot.lane.b32.xlu0 %v525, 12
        %v1023 = vpop.permute.xlu0 %1022
        %1024 = vrot.lane.b32.xlu0 %v526, 12
        %v1025 = vpop.permute.xlu0 %1024
        %1026 = vrot.lane.b32.xlu0 %v527, 12
        %v1027 = vpop.permute.xlu0 %1026
        %1028 = vrot.lane.b32.xlu0 %v528, 12
        %v1029 = vpop.permute.xlu0 %1028
        %1030 = vrot.lane.b32.xlu0 %v529, 12
        %v1031 = vpop.permute.xlu0 %1030
        %1032 = vrot.lane.b32.xlu0 %v530, 12
        %v1033 = vpop.permute.xlu0 %1032
        %1034 = vrot.lane.b32.xlu0 %v531, 12
        %v1035 = vpop.permute.xlu0 %1034
        %1036 = vrot.lane.b32.xlu0 %v532, 12
        %v1037 = vpop.permute.xlu0 %1036
        %1038 = vrot.lane.b32.xlu0 %v533, 12
        %v1039 = vpop.permute.xlu0 %1038
        %1040 = vrot.lane.b32.xlu0 %v534, 12
        %v1041 = vpop.permute.xlu0 %1040
        %1042 = vrot.lane.b32.xlu0 %v535, 12
        %v1043 = vpop.permute.xlu0 %1042
        %1044 = vrot.lane.b32.xlu0 %v536, 12
        %v1045 = vpop.permute.xlu0 %1044
        %1046 = vrot.lane.b32.xlu0 %v537, 12
        %v1047 = vpop.permute.xlu0 %1046
        %1048 = vrot.lane.b32.xlu0 %v538, 12
        %v1049 = vpop.permute.xlu0 %1048
        %1050 = vrot.lane.b32.xlu0 %v539, 12
        %v1051 = vpop.permute.xlu0 %1050
        %1052 = vrot.lane.b32.xlu0 %v540, 12
        %v1053 = vpop.permute.xlu0 %1052
        %1118 = vrot.lane.b32.xlu0 %v541, 16
        %v1119 = vpop.permute.xlu0 %1118
        %1120 = vrot.lane.b32.xlu0 %v542, 16
        %v1121 = vpop.permute.xlu0 %1120
        %1122 = vrot.lane.b32.xlu0 %v543, 16
        %v1123 = vpop.permute.xlu0 %1122
        %1124 = vrot.lane.b32.xlu0 %v544, 16
        %v1125 = vpop.permute.xlu0 %1124
        %1126 = vrot.lane.b32.xlu0 %v545, 16
        %v1127 = vpop.permute.xlu0 %1126
        %1128 = vrot.lane.b32.xlu0 %v546, 16
        %v1129 = vpop.permute.xlu0 %1128
        %1130 = vrot.lane.b32.xlu0 %v547, 16
        %v1131 = vpop.permute.xlu0 %1130
        %1132 = vrot.lane.b32.xlu0 %v548, 16
        %v1133 = vpop.permute.xlu0 %1132
        %1134 = vrot.lane.b32.xlu0 %v549, 16
        %v1135 = vpop.permute.xlu0 %1134
        %1136 = vrot.lane.b32.xlu0 %v550, 16
        %v1137 = vpop.permute.xlu0 %1136
        %1138 = vrot.lane.b32.xlu0 %v551, 16
        %v1139 = vpop.permute.xlu0 %1138
        %1140 = vrot.lane.b32.xlu0 %v552, 16
        %v1141 = vpop.permute.xlu0 %1140
        %1142 = vrot.lane.b32.xlu0 %v553, 16
        %v1143 = vpop.permute.xlu0 %1142
        %1144 = vrot.lane.b32.xlu0 %v554, 16
        %v1145 = vpop.permute.xlu0 %1144
        %1146 = vrot.lane.b32.xlu0 %v555, 16
        %v1147 = vpop.permute.xlu0 %1146
        %1148 = vrot.lane.b32.xlu0 %v556, 16
        %v1149 = vpop.permute.xlu0 %1148
        %1150 = vrot.lane.b32.xlu0 %v557, 16
        %v1151 = vpop.permute.xlu0 %1150
        %1152 = vrot.lane.b32.xlu0 %v558, 16
        %v1153 = vpop.permute.xlu0 %1152
        %1154 = vrot.lane.b32.xlu0 %v559, 16
        %v1155 = vpop.permute.xlu0 %1154
        %1156 = vrot.lane.b32.xlu0 %v560, 16
        %v1157 = vpop.permute.xlu0 %1156
        %1158 = vrot.lane.b32.xlu0 %v561, 16
        %v1159 = vpop.permute.xlu0 %1158
        %1160 = vrot.lane.b32.xlu0 %v562, 16
        %v1161 = vpop.permute.xlu0 %1160
        %1162 = vrot.lane.b32.xlu0 %v563, 16
        %v1163 = vpop.permute.xlu0 %1162
        %1164 = vrot.lane.b32.xlu0 %v564, 16
        %v1165 = vpop.permute.xlu0 %1164
        %1166 = vrot.lane.b32.xlu0 %v565, 16
        %v1167 = vpop.permute.xlu0 %1166
        %1168 = vrot.lane.b32.xlu0 %v566, 16
        %v1169 = vpop.permute.xlu0 %1168
        %1170 = vrot.lane.b32.xlu0 %v567, 16
        %v1171 = vpop.permute.xlu0 %1170
        %1172 = vrot.lane.b32.xlu0 %v568, 16
        %v1173 = vpop.permute.xlu0 %1172
        %1174 = vrot.lane.b32.xlu0 %v569, 16
        %v1175 = vpop.permute.xlu0 %1174
        %1176 = vrot.lane.b32.xlu0 %v570, 16
        %v1177 = vpop.permute.xlu0 %1176
        %1178 = vrot.lane.b32.xlu0 %v571, 16
        %v1179 = vpop.permute.xlu0 %1178
        %1180 = vrot.lane.b32.xlu0 %v572, 16
        %v1181 = vpop.permute.xlu0 %1180
        %1246 = vrot.lane.b32.xlu0 %v573, 20
        %v1247 = vpop.permute.xlu0 %1246
        %1248 = vrot.lane.b32.xlu0 %v574, 20
        %v1249 = vpop.permute.xlu0 %1248
        %1250 = vrot.lane.b32.xlu0 %v575, 20
        %v1251 = vpop.permute.xlu0 %1250
        %1252 = vrot.lane.b32.xlu0 %v576, 20
        %v1253 = vpop.permute.xlu0 %1252
        %1254 = vrot.lane.b32.xlu0 %v577, 20
        %v1255 = vpop.permute.xlu0 %1254
        %1256 = vrot.lane.b32.xlu0 %v578, 20
        %v1257 = vpop.permute.xlu0 %1256
        %1258 = vrot.lane.b32.xlu0 %v579, 20
        %v1259 = vpop.permute.xlu0 %1258
        %1260 = vrot.lane.b32.xlu0 %v580, 20
        %v1261 = vpop.permute.xlu0 %1260
        %1262 = vrot.lane.b32.xlu0 %v581, 20
        %v1263 = vpop.permute.xlu0 %1262
        %1264 = vrot.lane.b32.xlu0 %v582, 20
        %v1265 = vpop.permute.xlu0 %1264
        %1266 = vrot.lane.b32.xlu0 %v583, 20
        %v1267 = vpop.permute.xlu0 %1266
        %1268 = vrot.lane.b32.xlu0 %v584, 20
        %v1269 = vpop.permute.xlu0 %1268
        %1270 = vrot.lane.b32.xlu0 %v585, 20
        %v1271 = vpop.permute.xlu0 %1270
        %1272 = vrot.lane.b32.xlu0 %v586, 20
        %v1273 = vpop.permute.xlu0 %1272
        %1274 = vrot.lane.b32.xlu0 %v587, 20
        %v1275 = vpop.permute.xlu0 %1274
        %1276 = vrot.lane.b32.xlu0 %v588, 20
        %v1277 = vpop.permute.xlu0 %1276
        %1278 = vrot.lane.b32.xlu0 %v589, 20
        %v1279 = vpop.permute.xlu0 %1278
        %1280 = vrot.lane.b32.xlu0 %v590, 20
        %v1281 = vpop.permute.xlu0 %1280
        %1282 = vrot.lane.b32.xlu0 %v591, 20
        %v1283 = vpop.permute.xlu0 %1282
        %1284 = vrot.lane.b32.xlu0 %v592, 20
        %v1285 = vpop.permute.xlu0 %1284
        %1286 = vrot.lane.b32.xlu0 %v593, 20
        %v1287 = vpop.permute.xlu0 %1286
        %1288 = vrot.lane.b32.xlu0 %v594, 20
        %v1289 = vpop.permute.xlu0 %1288
        %1290 = vrot.lane.b32.xlu0 %v595, 20
        %v1291 = vpop.permute.xlu0 %1290
        %1292 = vrot.lane.b32.xlu0 %v596, 20
        %v1293 = vpop.permute.xlu0 %1292
        %1294 = vrot.lane.b32.xlu0 %v597, 20
        %v1295 = vpop.permute.xlu0 %1294
        %1296 = vrot.lane.b32.xlu0 %v598, 20
        %v1297 = vpop.permute.xlu0 %1296
        %1298 = vrot.lane.b32.xlu0 %v599, 20
        %v1299 = vpop.permute.xlu0 %1298
        %1300 = vrot.lane.b32.xlu0 %v600, 20
        %v1301 = vpop.permute.xlu0 %1300
        %1302 = vrot.lane.b32.xlu0 %v601, 20
        %v1303 = vpop.permute.xlu0 %1302
        %1304 = vrot.lane.b32.xlu0 %v602, 20
        %v1305 = vpop.permute.xlu0 %1304
        %1306 = vrot.lane.b32.xlu0 %v603, 20
        %v1307 = vpop.permute.xlu0 %1306
        %1308 = vrot.lane.b32.xlu0 %v604, 20
        %v1309 = vpop.permute.xlu0 %1308
        %1374 = vrot.lane.b32.xlu0 %v606, 24
        %v1375 = vpop.permute.xlu0 %1374
        %1376 = vrot.lane.b32.xlu0 %v607, 24
        %v1377 = vpop.permute.xlu0 %1376
        %1378 = vrot.lane.b32.xlu0 %v608, 24
        %v1379 = vpop.permute.xlu0 %1378
        %1380 = vrot.lane.b32.xlu0 %v609, 24
        %v1381 = vpop.permute.xlu0 %1380
        %1382 = vrot.lane.b32.xlu0 %v610, 24
        %v1383 = vpop.permute.xlu0 %1382
        %1384 = vrot.lane.b32.xlu0 %v611, 24
        %v1385 = vpop.permute.xlu0 %1384
        %1386 = vrot.lane.b32.xlu0 %v612, 24
        %v1387 = vpop.permute.xlu0 %1386
        %1388 = vrot.lane.b32.xlu0 %v613, 24
        %v1389 = vpop.permute.xlu0 %1388
        %1390 = vrot.lane.b32.xlu0 %v614, 24
        %v1391 = vpop.permute.xlu0 %1390
        %1392 = vrot.lane.b32.xlu0 %v615, 24
        %v1393 = vpop.permute.xlu0 %1392
        %1394 = vrot.lane.b32.xlu0 %v616, 24
        %v1395 = vpop.permute.xlu0 %1394
        %1396 = vrot.lane.b32.xlu0 %v617, 24
        %v1397 = vpop.permute.xlu0 %1396
        %1398 = vrot.lane.b32.xlu0 %v618, 24
        %v1399 = vpop.permute.xlu0 %1398
        %1400 = vrot.lane.b32.xlu0 %v619, 24
        %v1401 = vpop.permute.xlu0 %1400
        %1402 = vrot.lane.b32.xlu0 %v620, 24
        %v1403 = vpop.permute.xlu0 %1402
        %1404 = vrot.lane.b32.xlu0 %v621, 24
        %v1405 = vpop.permute.xlu0 %1404
        %1406 = vrot.lane.b32.xlu0 %v622, 24
        %v1407 = vpop.permute.xlu0 %1406
        %1408 = vrot.lane.b32.xlu0 %v623, 24
        %v1409 = vpop.permute.xlu0 %1408
        %1410 = vrot.lane.b32.xlu0 %v624, 24
        %v1411 = vpop.permute.xlu0 %1410
        %1412 = vrot.lane.b32.xlu0 %v625, 24
        %v1413 = vpop.permute.xlu0 %1412
        %1414 = vrot.lane.b32.xlu0 %v626, 24
        %v1415 = vpop.permute.xlu0 %1414
        %1416 = vrot.lane.b32.xlu0 %v627, 24
        %v1417 = vpop.permute.xlu0 %1416
        %1418 = vrot.lane.b32.xlu0 %v628, 24
        %v1419 = vpop.permute.xlu0 %1418
        %1420 = vrot.lane.b32.xlu0 %v629, 24
        %v1421 = vpop.permute.xlu0 %1420
        %1422 = vrot.lane.b32.xlu0 %v630, 24
        %v1423 = vpop.permute.xlu0 %1422
        %1424 = vrot.lane.b32.xlu0 %v631, 24
        %v1425 = vpop.permute.xlu0 %1424
        %1426 = vrot.lane.b32.xlu0 %v632, 24
        %v1427 = vpop.permute.xlu0 %1426
        %1428 = vrot.lane.b32.xlu0 %v633, 24
        %v1429 = vpop.permute.xlu0 %1428
        %1430 = vrot.lane.b32.xlu0 %v634, 24
        %v1431 = vpop.permute.xlu0 %1430
        %1432 = vrot.lane.b32.xlu0 %v635, 24
        %v1433 = vpop.permute.xlu0 %1432
        %1434 = vrot.lane.b32.xlu0 %v636, 24
        %v1435 = vpop.permute.xlu0 %1434
        %1436 = vrot.lane.b32.xlu0 %v637, 24
        %v1437 = vpop.permute.xlu0 %1436
        %1502 = vrot.lane.b32.xlu0 %v638, 28
        %v1503 = vpop.permute.xlu0 %1502
        %1504 = vrot.lane.b32.xlu0 %v639, 28
        %v1505 = vpop.permute.xlu0 %1504
        %1506 = vrot.lane.b32.xlu0 %v640, 28
        %v1507 = vpop.permute.xlu0 %1506
        %1508 = vrot.lane.b32.xlu0 %v641, 28
        %v1509 = vpop.permute.xlu0 %1508
        %1510 = vrot.lane.b32.xlu0 %v642, 28
        %v1511 = vpop.permute.xlu0 %1510
        %1512 = vrot.lane.b32.xlu0 %v643, 28
        %v1513 = vpop.permute.xlu0 %1512
        %1514 = vrot.lane.b32.xlu0 %v644, 28
        %v1515 = vpop.permute.xlu0 %1514
        %1516 = vrot.lane.b32.xlu0 %v645, 28
        %v1517 = vpop.permute.xlu0 %1516
        %1518 = vrot.lane.b32.xlu0 %v646, 28
        %v1519 = vpop.permute.xlu0 %1518
        %1520 = vrot.lane.b32.xlu0 %v647, 28
        %v1521 = vpop.permute.xlu0 %1520
        %1522 = vrot.lane.b32.xlu0 %v648, 28
        %v1523 = vpop.permute.xlu0 %1522
        %1524 = vrot.lane.b32.xlu0 %v649, 28
        %v1525 = vpop.permute.xlu0 %1524
        %1526 = vrot.lane.b32.xlu0 %v650, 28
        %v1527 = vpop.permute.xlu0 %1526
        %1528 = vrot.lane.b32.xlu0 %v651, 28
        %v1529 = vpop.permute.xlu0 %1528
        %1530 = vrot.lane.b32.xlu0 %v652, 28
        %v1531 = vpop.permute.xlu0 %1530
        %1532 = vrot.lane.b32.xlu0 %v653, 28
        %v1533 = vpop.permute.xlu0 %1532
        %1534 = vrot.lane.b32.xlu0 %v654, 28
        %v1535 = vpop.permute.xlu0 %1534
        %1536 = vrot.lane.b32.xlu0 %v655, 28
        %v1537 = vpop.permute.xlu0 %1536
        %1538 = vrot.lane.b32.xlu0 %v656, 28
        %v1539 = vpop.permute.xlu0 %1538
        %1540 = vrot.lane.b32.xlu0 %v657, 28
        %v1541 = vpop.permute.xlu0 %1540
        %1542 = vrot.lane.b32.xlu0 %v658, 28
        %v1543 = vpop.permute.xlu0 %1542
        %1544 = vrot.lane.b32.xlu0 %v659, 28
        %v1545 = vpop.permute.xlu0 %1544
        %1546 = vrot.lane.b32.xlu0 %v660, 28
        %v1547 = vpop.permute.xlu0 %1546
        %1548 = vrot.lane.b32.xlu0 %v661, 28
        %v1549 = vpop.permute.xlu0 %1548
        %1550 = vrot.lane.b32.xlu0 %v662, 28
        %v1551 = vpop.permute.xlu0 %1550
        %1552 = vrot.lane.b32.xlu0 %v663, 28
        %v1553 = vpop.permute.xlu0 %1552
        %1554 = vrot.lane.b32.xlu0 %v664, 28
        %v1555 = vpop.permute.xlu0 %1554
        %1556 = vrot.lane.b32.xlu0 %v665, 28
        %v1557 = vpop.permute.xlu0 %1556
        %1558 = vrot.lane.b32.xlu0 %v666, 28
        %v1559 = vpop.permute.xlu0 %1558
        %1560 = vrot.lane.b32.xlu0 %v667, 28
        %v1561 = vpop.permute.xlu0 %1560
        %1562 = vrot.lane.b32.xlu0 %v668, 28
        %v1563 = vpop.permute.xlu0 %1562
        %1564 = vrot.lane.b32.xlu0 %v669, 28
        %v1565 = vpop.permute.xlu0 %1564
        %1630 = vrot.lane.b32.xlu0 %v670, 32
        %v1631 = vpop.permute.xlu0 %1630
        %1632 = vrot.lane.b32.xlu0 %v671, 32
        %v1633 = vpop.permute.xlu0 %1632
        %1634 = vrot.lane.b32.xlu0 %v672, 32
        %v1635 = vpop.permute.xlu0 %1634
        %1636 = vrot.lane.b32.xlu0 %v673, 32
        %v1637 = vpop.permute.xlu0 %1636
        %1638 = vrot.lane.b32.xlu0 %v674, 32
        %v1639 = vpop.permute.xlu0 %1638
        %1640 = vrot.lane.b32.xlu0 %v675, 32
        %v1641 = vpop.permute.xlu0 %1640
        %1642 = vrot.lane.b32.xlu0 %v676, 32
        %v1643 = vpop.permute.xlu0 %1642
        %1644 = vrot.lane.b32.xlu0 %v677, 32
        %v1645 = vpop.permute.xlu0 %1644
        %1646 = vrot.lane.b32.xlu0 %v678, 32
        %v1647 = vpop.permute.xlu0 %1646
        %1648 = vrot.lane.b32.xlu0 %v679, 32
        %v1649 = vpop.permute.xlu0 %1648
        %1650 = vrot.lane.b32.xlu0 %v680, 32
        %v1651 = vpop.permute.xlu0 %1650
        %1652 = vrot.lane.b32.xlu0 %v681, 32
        %v1653 = vpop.permute.xlu0 %1652
        %1654 = vrot.lane.b32.xlu0 %v682, 32
        %v1655 = vpop.permute.xlu0 %1654
        %1656 = vrot.lane.b32.xlu0 %v683, 32
        %v1657 = vpop.permute.xlu0 %1656
        %1658 = vrot.lane.b32.xlu0 %v684, 32
        %v1659 = vpop.permute.xlu0 %1658
        %1660 = vrot.lane.b32.xlu0 %v685, 32
        %v1661 = vpop.permute.xlu0 %1660
        %1662 = vrot.lane.b32.xlu0 %v686, 32
        %v1663 = vpop.permute.xlu0 %1662
        %1664 = vrot.lane.b32.xlu0 %v687, 32
        %v1665 = vpop.permute.xlu0 %1664
        %1666 = vrot.lane.b32.xlu0 %v688, 32
        %v1667 = vpop.permute.xlu0 %1666
        %1668 = vrot.lane.b32.xlu0 %v689, 32
        %v1669 = vpop.permute.xlu0 %1668
        %1670 = vrot.lane.b32.xlu0 %v690, 32
        %v1671 = vpop.permute.xlu0 %1670
        %1672 = vrot.lane.b32.xlu0 %v691, 32
        %v1673 = vpop.permute.xlu0 %1672
        %1674 = vrot.lane.b32.xlu0 %v692, 32
        %v1675 = vpop.permute.xlu0 %1674
        %1676 = vrot.lane.b32.xlu0 %v693, 32
        %v1677 = vpop.permute.xlu0 %1676
        %1678 = vrot.lane.b32.xlu0 %v694, 32
        %v1679 = vpop.permute.xlu0 %1678
        %1680 = vrot.lane.b32.xlu0 %v695, 32
        %v1681 = vpop.permute.xlu0 %1680
        %1682 = vrot.lane.b32.xlu0 %v696, 32
        %v1683 = vpop.permute.xlu0 %1682
        %1684 = vrot.lane.b32.xlu0 %v697, 32
        %v1685 = vpop.permute.xlu0 %1684
        %1686 = vrot.lane.b32.xlu0 %v698, 32
        %v1687 = vpop.permute.xlu0 %1686
        %1688 = vrot.lane.b32.xlu0 %v699, 32
        %v1689 = vpop.permute.xlu0 %1688
        %1690 = vrot.lane.b32.xlu0 %v700, 32
        %v1691 = vpop.permute.xlu0 %1690
        %1692 = vrot.lane.b32.xlu0 %v701, 32
        %v1693 = vpop.permute.xlu0 %1692
        %v1726 = vsel %vm238, %v413, %v735
        %v1727 = vsel %vm238, %v414, %v737
        %v1728 = vsel %vm238, %v415, %v739
        %v1729 = vsel %vm238, %v416, %v741
        %v1730 = vsel %vm238, %v417, %v743
        %v1731 = vsel %vm238, %v418, %v745
        %v1732 = vsel %vm238, %v419, %v747
        %v1733 = vsel %vm238, %v420, %v749
        %v1734 = vsel %vm238, %v421, %v751
        %v1735 = vsel %vm238, %v422, %v753
        %v1736 = vsel %vm238, %v423, %v755
        %v1737 = vsel %vm238, %v424, %v757
        %v1738 = vsel %vm238, %v425, %v759
        %v1739 = vsel %vm238, %v426, %v761
        %v1740 = vsel %vm238, %v427, %v763
        %v1741 = vsel %vm238, %v428, %v765
        %v1742 = vsel %vm238, %v429, %v767
        %v1743 = vsel %vm238, %v430, %v769
        %v1744 = vsel %vm238, %v431, %v771
        %v1745 = vsel %vm238, %v432, %v773
        %v1746 = vsel %vm238, %v433, %v775
        %v1747 = vsel %vm238, %v434, %v777
        %v1748 = vsel %vm238, %v435, %v779
        %v1749 = vsel %vm238, %v436, %v781
        %v1750 = vsel %vm238, %v437, %v783
        %v1751 = vsel %vm238, %v438, %v785
        %v1752 = vsel %vm238, %v439, %v787
        %v1753 = vsel %vm238, %v440, %v789
        %v1754 = vsel %vm238, %v441, %v791
        %v1755 = vsel %vm238, %v442, %v793
        %v1756 = vsel %vm238, %v443, %v795
        %v1757 = vsel %vm238, %v444, %v797
        %vm1758 = vcmask 64512
        %v1759 = vsel %vm1758, %v1726, %v863
        %v1760 = vsel %vm1758, %v1727, %v865
        %v1761 = vsel %vm1758, %v1728, %v867
        %v1762 = vsel %vm1758, %v1729, %v869
        %v1763 = vsel %vm1758, %v1730, %v871
        %v1764 = vsel %vm1758, %v1731, %v873
        %v1765 = vsel %vm1758, %v1732, %v875
        %v1766 = vsel %vm1758, %v1733, %v877
        %v1767 = vsel %vm1758, %v1734, %v879
        %v1768 = vsel %vm1758, %v1735, %v881
        %v1769 = vsel %vm1758, %v1736, %v883
        %v1770 = vsel %vm1758, %v1737, %v885
        %v1771 = vsel %vm1758, %v1738, %v887
        %v1772 = vsel %vm1758, %v1739, %v889
        %v1773 = vsel %vm1758, %v1740, %v891
        %v1774 = vsel %vm1758, %v1741, %v893
        %v1775 = vsel %vm1758, %v1742, %v895
        %v1776 = vsel %vm1758, %v1743, %v897
        %v1777 = vsel %vm1758, %v1744, %v899
        %v1778 = vsel %vm1758, %v1745, %v901
        %v1779 = vsel %vm1758, %v1746, %v903
        %v1780 = vsel %vm1758, %v1747, %v905
        %v1781 = vsel %vm1758, %v1748, %v907
        %v1782 = vsel %vm1758, %v1749, %v909
        %v1783 = vsel %vm1758, %v1750, %v911
        %v1784 = vsel %vm1758, %v1751, %v913
        %v1785 = vsel %vm1758, %v1752, %v915
        %v1786 = vsel %vm1758, %v1753, %v917
        %v1787 = vsel %vm1758, %v1754, %v919
        %v1788 = vsel %vm1758, %v1755, %v921
        %v1789 = vsel %vm1758, %v1756, %v923
        %v1790 = vsel %vm1758, %v1757, %v925
        %vm1791 = vcmask 97280
        %v1792 = vsel %vm1791, %v1759, %v991
        %v1793 = vsel %vm1791, %v1760, %v993
        %v1794 = vsel %vm1791, %v1761, %v995
        %v1795 = vsel %vm1791, %v1762, %v997
        %v1796 = vsel %vm1791, %v1763, %v999
        %v1797 = vsel %vm1791, %v1764, %v1001
        %v1798 = vsel %vm1791, %v1765, %v1003
        %v1799 = vsel %vm1791, %v1766, %v1005
        %v1800 = vsel %vm1791, %v1767, %v1007
        %v1801 = vsel %vm1791, %v1768, %v1009
        %v1802 = vsel %vm1791, %v1769, %v1011
        %v1803 = vsel %vm1791, %v1770, %v1013
        %v1804 = vsel %vm1791, %v1771, %v1015
        %v1805 = vsel %vm1791, %v1772, %v1017
        %v1806 = vsel %vm1791, %v1773, %v1019
        %v1807 = vsel %vm1791, %v1774, %v1021
        %v1808 = vsel %vm1791, %v1775, %v1023
        %v1809 = vsel %vm1791, %v1776, %v1025
        %v1810 = vsel %vm1791, %v1777, %v1027
        %v1811 = vsel %vm1791, %v1778, %v1029
        %v1812 = vsel %vm1791, %v1779, %v1031
        %v1813 = vsel %vm1791, %v1780, %v1033
        %v1814 = vsel %vm1791, %v1781, %v1035
        %v1815 = vsel %vm1791, %v1782, %v1037
        %v1816 = vsel %vm1791, %v1783, %v1039
        %v1817 = vsel %vm1791, %v1784, %v1041
        %v1818 = vsel %vm1791, %v1785, %v1043
        %v1819 = vsel %vm1791, %v1786, %v1045
        %v1820 = vsel %vm1791, %v1787, %v1047
        %v1821 = vsel %vm1791, %v1788, %v1049
        %v1822 = vsel %vm1791, %v1789, %v1051
        %v1823 = vsel %vm1791, %v1790, %v1053
        %vm1824 = vcmask 130048
        %v1825 = vsel %vm1824, %v1792, %v1119
        %v1826 = vsel %vm1824, %v1793, %v1121
        %v1827 = vsel %vm1824, %v1794, %v1123
        %v1828 = vsel %vm1824, %v1795, %v1125
        %v1829 = vsel %vm1824, %v1796, %v1127
        %v1830 = vsel %vm1824, %v1797, %v1129
        %v1831 = vsel %vm1824, %v1798, %v1131
        %v1832 = vsel %vm1824, %v1799, %v1133
        %v1833 = vsel %vm1824, %v1800, %v1135
        %v1834 = vsel %vm1824, %v1801, %v1137
        %v1835 = vsel %vm1824, %v1802, %v1139
        %v1836 = vsel %vm1824, %v1803, %v1141
        %v1837 = vsel %vm1824, %v1804, %v1143
        %v1838 = vsel %vm1824, %v1805, %v1145
        %v1839 = vsel %vm1824, %v1806, %v1147
        %v1840 = vsel %vm1824, %v1807, %v1149
        %v1841 = vsel %vm1824, %v1808, %v1151
        %v1842 = vsel %vm1824, %v1809, %v1153
        %v1843 = vsel %vm1824, %v1810, %v1155
        %v1844 = vsel %vm1824, %v1811, %v1157
        %v1845 = vsel %vm1824, %v1812, %v1159
        %v1846 = vsel %vm1824, %v1813, %v1161
        %v1847 = vsel %vm1824, %v1814, %v1163
        %v1848 = vsel %vm1824, %v1815, %v1165
        %v1849 = vsel %vm1824, %v1816, %v1167
        %v1850 = vsel %vm1824, %v1817, %v1169
        %v1851 = vsel %vm1824, %v1818, %v1171
        %v1852 = vsel %vm1824, %v1819, %v1173
        %v1853 = vsel %vm1824, %v1820, %v1175
        %v1854 = vsel %vm1824, %v1821, %v1177
        %v1855 = vsel %vm1824, %v1822, %v1179
        %v1856 = vsel %vm1824, %v1823, %v1181
        %vm1857 = vcmask 162816
        %v1858 = vsel %vm1857, %v1825, %v1247
        %v1859 = vsel %vm1857, %v1826, %v1249
        %v1860 = vsel %vm1857, %v1827, %v1251
        %v1861 = vsel %vm1857, %v1828, %v1253
        %v1862 = vsel %vm1857, %v1829, %v1255
        %v1863 = vsel %vm1857, %v1830, %v1257
        %v1864 = vsel %vm1857, %v1831, %v1259
        %v1865 = vsel %vm1857, %v1832, %v1261
        %v1866 = vsel %vm1857, %v1833, %v1263
        %v1867 = vsel %vm1857, %v1834, %v1265
        %v1868 = vsel %vm1857, %v1835, %v1267
        %v1869 = vsel %vm1857, %v1836, %v1269
        %v1870 = vsel %vm1857, %v1837, %v1271
        %v1871 = vsel %vm1857, %v1838, %v1273
        %v1872 = vsel %vm1857, %v1839, %v1275
        %v1873 = vsel %vm1857, %v1840, %v1277
        %v1874 = vsel %vm1857, %v1841, %v1279
        %v1875 = vsel %vm1857, %v1842, %v1281
        %v1876 = vsel %vm1857, %v1843, %v1283
        %v1877 = vsel %vm1857, %v1844, %v1285
        %v1878 = vsel %vm1857, %v1845, %v1287
        %v1879 = vsel %vm1857, %v1846, %v1289
        %v1880 = vsel %vm1857, %v1847, %v1291
        %v1881 = vsel %vm1857, %v1848, %v1293
        %v1882 = vsel %vm1857, %v1849, %v1295
        %v1883 = vsel %vm1857, %v1850, %v1297
        %v1884 = vsel %vm1857, %v1851, %v1299
        %v1885 = vsel %vm1857, %v1852, %v1301
        %v1886 = vsel %vm1857, %v1853, %v1303
        %v1887 = vsel %vm1857, %v1854, %v1305
        %v1888 = vsel %vm1857, %v1855, %v1307
        %v1889 = vsel %vm1857, %v1856, %v1309
        %vm1890 = vcmask 195584
        %v1891 = vsel %vm1890, %v1858, %v1375
        %v1892 = vsel %vm1890, %v1859, %v1377
        %v1893 = vsel %vm1890, %v1860, %v1379
        %v1894 = vsel %vm1890, %v1861, %v1381
        %v1895 = vsel %vm1890, %v1862, %v1383
        %v1896 = vsel %vm1890, %v1863, %v1385
        %v1897 = vsel %vm1890, %v1864, %v1387
        %v1898 = vsel %vm1890, %v1865, %v1389
        %v1899 = vsel %vm1890, %v1866, %v1391
        %v1900 = vsel %vm1890, %v1867, %v1393
        %v1901 = vsel %vm1890, %v1868, %v1395
        %v1902 = vsel %vm1890, %v1869, %v1397
        %v1903 = vsel %vm1890, %v1870, %v1399
        %v1904 = vsel %vm1890, %v1871, %v1401
        %v1905 = vsel %vm1890, %v1872, %v1403
        %v1906 = vsel %vm1890, %v1873, %v1405
        %v1907 = vsel %vm1890, %v1874, %v1407
        %v1908 = vsel %vm1890, %v1875, %v1409
        %v1909 = vsel %vm1890, %v1876, %v1411
        %v1910 = vsel %vm1890, %v1877, %v1413
        %v1911 = vsel %vm1890, %v1878, %v1415
        %v1912 = vsel %vm1890, %v1879, %v1417
        %v1913 = vsel %vm1890, %v1880, %v1419
        %v1914 = vsel %vm1890, %v1881, %v1421
        %v1915 = vsel %vm1890, %v1882, %v1423
        %v1916 = vsel %vm1890, %v1883, %v1425
        %v1917 = vsel %vm1890, %v1884, %v1427
        %v1918 = vsel %vm1890, %v1885, %v1429
        %v1919 = vsel %vm1890, %v1886, %v1431
        %v1920 = vsel %vm1890, %v1887, %v1433
        %v1921 = vsel %vm1890, %v1888, %v1435
        %v1922 = vsel %vm1890, %v1889, %v1437
        %vm1923 = vcmask 228352
        %v1924 = vsel %vm1923, %v1891, %v1503
        %v1925 = vsel %vm1923, %v1892, %v1505
        %v1926 = vsel %vm1923, %v1893, %v1507
        %v1927 = vsel %vm1923, %v1894, %v1509
        %v1928 = vsel %vm1923, %v1895, %v1511
        %v1929 = vsel %vm1923, %v1896, %v1513
        %v1930 = vsel %vm1923, %v1897, %v1515
        %v1931 = vsel %vm1923, %v1898, %v1517
        %v1932 = vsel %vm1923, %v1899, %v1519
        %v1933 = vsel %vm1923, %v1900, %v1521
        %v1934 = vsel %vm1923, %v1901, %v1523
        %v1935 = vsel %vm1923, %v1902, %v1525
        %v1936 = vsel %vm1923, %v1903, %v1527
        %v1937 = vsel %vm1923, %v1904, %v1529
        %v1938 = vsel %vm1923, %v1905, %v1531
        %v1939 = vsel %vm1923, %v1906, %v1533
        %v1940 = vsel %vm1923, %v1907, %v1535
        %v1941 = vsel %vm1923, %v1908, %v1537
        %v1942 = vsel %vm1923, %v1909, %v1539
        %v1943 = vsel %vm1923, %v1910, %v1541
        %v1944 = vsel %vm1923, %v1911, %v1543
        %v1945 = vsel %vm1923, %v1912, %v1545
        %v1946 = vsel %vm1923, %v1913, %v1547
        %v1947 = vsel %vm1923, %v1914, %v1549
        %v1948 = vsel %vm1923, %v1915, %v1551
        %v1949 = vsel %vm1923, %v1916, %v1553
        %v1950 = vsel %vm1923, %v1917, %v1555
        %v1951 = vsel %vm1923, %v1918, %v1557
        %v1952 = vsel %vm1923, %v1919, %v1559
        %v1953 = vsel %vm1923, %v1920, %v1561
        %v1954 = vsel %vm1923, %v1921, %v1563
        %v1955 = vsel %vm1923, %v1922, %v1565
        %vm1956 = vcmask 261120
        %v1957 = vsel %vm1956, %v1924, %v1631
        %v1958 = vsel %vm1956, %v1925, %v1633
        %v1959 = vsel %vm1956, %v1926, %v1635
        %v1960 = vsel %vm1956, %v1927, %v1637
        %v1961 = vsel %vm1956, %v1928, %v1639
        %v1962 = vsel %vm1956, %v1929, %v1641
        %v1963 = vsel %vm1956, %v1930, %v1643
        %v1964 = vsel %vm1956, %v1931, %v1645
        %v1965 = vsel %vm1956, %v1932, %v1647
        %v1966 = vsel %vm1956, %v1933, %v1649
        %v1967 = vsel %vm1956, %v1934, %v1651
        %v1968 = vsel %vm1956, %v1935, %v1653
        %v1969 = vsel %vm1956, %v1936, %v1655
        %v1970 = vsel %vm1956, %v1937, %v1657
        %v1971 = vsel %vm1956, %v1938, %v1659
        %v1972 = vsel %vm1956, %v1939, %v1661
        %v1973 = vsel %vm1956, %v1940, %v1663
        %v1974 = vsel %vm1956, %v1941, %v1665
        %v1975 = vsel %vm1956, %v1942, %v1667
        %v1976 = vsel %vm1956, %v1943, %v1669
        %v1977 = vsel %vm1956, %v1944, %v1671
        %v1978 = vsel %vm1956, %v1945, %v1673
        %v1979 = vsel %vm1956, %v1946, %v1675
        %v1980 = vsel %vm1956, %v1947, %v1677
        %v1981 = vsel %vm1956, %v1948, %v1679
        %v1982 = vsel %vm1956, %v1949, %v1681
        %v1983 = vsel %vm1956, %v1950, %v1683
        %v1984 = vsel %vm1956, %v1951, %v1685
        %v1985 = vsel %vm1956, %v1952, %v1687
        %v1986 = vsel %vm1956, %v1953, %v1689
        %v1987 = vsel %vm1956, %v1954, %v1691
        %v1988 = vsel %vm1956, %v1955, %v1693
        %v1989 = vld [vmem:[%s1] sm:$0xff]
        %v1990 = vld [vmem:[%s1 + $0x8] sm:$0xff]
        %v1991 = vld [vmem:[%s1 + $0x10] sm:$0xff]
        %v1992 = vld [vmem:[%s1 + $0x18] sm:$0xff]
        %v1993 = vld [vmem:[%s1 + $0x20] sm:$0xf]
        %v1994 = vld [vmem:[%s2] sm:$0x1]
        %v1996 = vlaneseq
        %v1997 = vshrl.u32 %v1996, 7
        %v1998 = vsub.s32 0, %v1997
        %v1999 = vrot.slane %v1994, %v1998
        %vm2001 = vcmask 293888
        %v2003 = vsel %vm2001, %v1957, 0
        %v2006 = vsel %vm2001, %v1958, 0
        %v2009 = vsel %vm2001, %v1959, 0
        %v2012 = vsel %vm2001, %v1960, 0
        %v2015 = vsel %vm2001, %v1961, 0
        %v2018 = vsel %vm2001, %v1962, 0
        %v2021 = vsel %vm2001, %v1963, 0
        %v2024 = vsel %vm2001, %v1964, 0
        %v2027 = vsel %vm2001, %v1965, 0
        %v2030 = vsel %vm2001, %v1966, 0
        %v2033 = vsel %vm2001, %v1967, 0
        %v2036 = vsel %vm2001, %v1968, 0
        %v2039 = vsel %vm2001, %v1969, 0
        %v2042 = vsel %vm2001, %v1970, 0
        %v2045 = vsel %vm2001, %v1971, 0
        %v2048 = vsel %vm2001, %v1972, 0
        %v2051 = vsel %vm2001, %v1973, 0
        %v2054 = vsel %vm2001, %v1974, 0
        %v2057 = vsel %vm2001, %v1975, 0
        %v2060 = vsel %vm2001, %v1976, 0
        %v2063 = vsel %vm2001, %v1977, 0
        %v2066 = vsel %vm2001, %v1978, 0
        %v2069 = vsel %vm2001, %v1979, 0
        %v2072 = vsel %vm2001, %v1980, 0
        %v2075 = vsel %vm2001, %v1981, 0
        %v2078 = vsel %vm2001, %v1982, 0
        %v2081 = vsel %vm2001, %v1983, 0
        %v2084 = vsel %vm2001, %v1984, 0
        %v2087 = vsel %vm2001, %v1985, 0
        %v2090 = vsel %vm2001, %v1986, 0
        %v2093 = vsel %vm2001, %v1987, 0
        %v2096 = vsel %vm2001, %v1988, 0
        %vm2098 = vcmask 1043456
        %v2100 = vsel %vm2098, %v1993, 0
        %2102 = vmatprep.subr.mxu0 0.0
        %2103 = vmatpush1.msra.mxu0 0.0
        %2104 = vmatprep.subr.mxu0 0.0
        %2105 = vmatpush1.msra.mxu0 0.0
        %2106 = vmatprep.subr.mxu0 0.0
        %2107 = vmatpush1.msra.mxu0 0.0
        %2108 = vmatprep.subr.mxu0 0.0
        %2109 = vmatpush1.msra.mxu0 0.0
        %2110 = vmatprep.subr.mxu0 0.0
        %2111 = vmatpush1.msra.mxu0 0.0
        %2112 = vmatprep.subr.mxu0 0.0
        %2113 = vmatpush1.msra.mxu0 0.0
        %2114 = vmatprep.subr.mxu0 0.0
        %2115 = vmatpush1.msra.mxu0 0.0
        %2116 = vmatprep.subr.mxu0 0.0
        %2117 = vmatpush1.msra.mxu0 0.0
        %2118 = vmatprep.subr.mxu0 0.0
        %2119 = vmatpush1.msra.mxu0 0.0
        %2120 = vmatprep.subr.mxu0 0.0
        %2121 = vmatpush1.msra.mxu0 0.0
        %2122 = vmatprep.subr.mxu0 0.0
        %2123 = vmatpush1.msra.mxu0 0.0
        %2124 = vmatprep.subr.mxu0 0.0
        %2125 = vmatpush1.msra.mxu0 %v2100
        %2126 = vmatprep.subr.mxu0 0.0
        %2127 = vmatpush1.msra.mxu0 %v1992
        %2128 = vmatprep.subr.mxu0 0.0
        %2129 = vmatpush1.msra.mxu0 %v1991
        %2130 = vmatprep.subr.mxu0 0.0
        %2131 = vmatpush1.msra.mxu0 %v1990
        %2132 = vmatprep.subr.mxu0 0.0
        %2133 = vmatpush1.msra.mxu0 %v1989
        %2134 = vmatprep.subr.mxu0 0.0
        %2135 = vmatpush2.msra.mxu0 0.0
        %2136 = vmatprep.subr.mxu0 0.0
        %2137 = vmatpush2.msra.mxu0 0.0
        %2138 = vmatprep.subr.mxu0 0.0
        %2139 = vmatpush2.msra.mxu0 0.0
        %2140 = vmatprep.subr.mxu0 0.0
        %2141 = vmatpush2.msra.mxu0 0.0
        %2142 = vmatprep.subr.mxu0 0.0
        %2143 = vmatpush2.msra.mxu0 0.0
        %2144 = vmatprep.subr.mxu0 0.0
        %2145 = vmatpush2.msra.mxu0 0.0
        %2146 = vmatprep.subr.mxu0 0.0
        %2147 = vmatpush2.msra.mxu0 0.0
        %2148 = vmatprep.subr.mxu0 0.0
        %2149 = vmatpush2.msra.mxu0 0.0
        %2150 = vmatprep.subr.mxu0 0.0
        %2151 = vmatpush2.msra.mxu0 0.0
        %2152 = vmatprep.subr.mxu0 0.0
        %2153 = vmatpush2.msra.mxu0 0.0
        %2154 = vmatprep.subr.mxu0 0.0
        %2155 = vmatpush2.msra.mxu0 0.0
        %2156 = vmatprep.subr.mxu0 0.0
        %2157 = vmatpush2.msra.mxu0 0.0
        %2158 = vmatprep.subr.mxu0 0.0
        %2159 = vmatpush2.msra.mxu0 0.0
        %2160 = vmatprep.subr.mxu0 0.0
        %2161 = vmatpush2.msra.mxu0 0.0
        %2162 = vmatprep.subr.mxu0 0.0
        %2163 = vmatpush2.msra.mxu0 0.0
        %2164 = vmatprep.subr.mxu0 0.0
        %2165 = vmatpush2.msra.mxu0 0.0
        %2166 = vmatprep.mubr.f32.mxu0 0.0
        %2167 = vmatmul.mubr.f32.gmra.mxu0 %v2003
        %v2168 = vpop.f32.mrf.mxu0
        %v2169 = vadd.f32 %v1999, %v2168
        %v2170 = vpop.f32.mrf.mxu0
        %2171 = vmatprep.mubr.f32.mxu0 0.0
        %2172 = vmatmul.mubr.f32.gmra.mxu0 %v2006
        %v2173 = vpop.f32.mrf.mxu0
        %v2174 = vadd.f32 %v1999, %v2173
        %v2175 = vpop.f32.mrf.mxu0
        %2176 = vmatprep.mubr.f32.mxu0 0.0
        %2177 = vmatmul.mubr.f32.gmra.mxu0 %v2009
        %v2178 = vpop.f32.mrf.mxu0
        %v2179 = vadd.f32 %v1999, %v2178
        %v2180 = vpop.f32.mrf.mxu0
        %2181 = vmatprep.mubr.f32.mxu0 0.0
        %2182 = vmatmul.mubr.f32.gmra.mxu0 %v2012
        %v2183 = vpop.f32.mrf.mxu0
        %v2184 = vadd.f32 %v1999, %v2183
        %v2185 = vpop.f32.mrf.mxu0
        %2186 = vmatprep.mubr.f32.mxu0 0.0
        %2187 = vmatmul.mubr.f32.gmra.mxu0 %v2015
        %v2188 = vpop.f32.mrf.mxu0
        %v2189 = vadd.f32 %v1999, %v2188
        %v2190 = vpop.f32.mrf.mxu0
        %2191 = vmatprep.mubr.f32.mxu0 0.0
        %2192 = vmatmul.mubr.f32.gmra.mxu0 %v2018
        %v2193 = vpop.f32.mrf.mxu0
        %v2194 = vadd.f32 %v1999, %v2193
        %v2195 = vpop.f32.mrf.mxu0
        %2196 = vmatprep.mubr.f32.mxu0 0.0
        %2197 = vmatmul.mubr.f32.gmra.mxu0 %v2021
        %v2198 = vpop.f32.mrf.mxu0
        %v2199 = vadd.f32 %v1999, %v2198
        %v2200 = vpop.f32.mrf.mxu0
        %2201 = vmatprep.mubr.f32.mxu0 0.0
        %2202 = vmatmul.mubr.f32.gmra.mxu0 %v2024
        %v2203 = vpop.f32.mrf.mxu0
        %v2204 = vadd.f32 %v1999, %v2203
        %v2205 = vpop.f32.mrf.mxu0
        %2206 = vmatprep.mubr.f32.mxu0 0.0
        %2207 = vmatmul.mubr.f32.gmra.mxu0 %v2027
        %v2208 = vpop.f32.mrf.mxu0
        %v2209 = vadd.f32 %v1999, %v2208
        %v2210 = vpop.f32.mrf.mxu0
        %2211 = vmatprep.mubr.f32.mxu0 0.0
        %2212 = vmatmul.mubr.f32.gmra.mxu0 %v2030
        %v2213 = vpop.f32.mrf.mxu0
        %v2214 = vadd.f32 %v1999, %v2213
        %v2215 = vpop.f32.mrf.mxu0
        %2216 = vmatprep.mubr.f32.mxu0 0.0
        %2217 = vmatmul.mubr.f32.gmra.mxu0 %v2033
        %v2218 = vpop.f32.mrf.mxu0
        %v2219 = vadd.f32 %v1999, %v2218
        %v2220 = vpop.f32.mrf.mxu0
        %2221 = vmatprep.mubr.f32.mxu0 0.0
        %2222 = vmatmul.mubr.f32.gmra.mxu0 %v2036
        %v2223 = vpop.f32.mrf.mxu0
        %v2224 = vadd.f32 %v1999, %v2223
        %v2225 = vpop.f32.mrf.mxu0
        %2226 = vmatprep.mubr.f32.mxu0 0.0
        %2227 = vmatmul.mubr.f32.gmra.mxu0 %v2039
        %v2228 = vpop.f32.mrf.mxu0
        %v2229 = vadd.f32 %v1999, %v2228
        %v2230 = vpop.f32.mrf.mxu0
        %2231 = vmatprep.mubr.f32.mxu0 0.0
        %2232 = vmatmul.mubr.f32.gmra.mxu0 %v2042
        %v2233 = vpop.f32.mrf.mxu0
        %v2234 = vadd.f32 %v1999, %v2233
        %v2235 = vpop.f32.mrf.mxu0
        %2236 = vmatprep.mubr.f32.mxu0 0.0
        %2237 = vmatmul.mubr.f32.gmra.mxu0 %v2045
        %v2238 = vpop.f32.mrf.mxu0
        %v2239 = vadd.f32 %v1999, %v2238
        %v2240 = vpop.f32.mrf.mxu0
        %2241 = vmatprep.mubr.f32.mxu0 0.0
        %2242 = vmatmul.mubr.f32.gmra.mxu0 %v2048
        %v2243 = vpop.f32.mrf.mxu0
        %v2244 = vadd.f32 %v1999, %v2243
        %v2245 = vpop.f32.mrf.mxu0
        %2246 = vmatprep.mubr.f32.mxu0 0.0
        %2247 = vmatmul.mubr.f32.gmra.mxu0 %v2051
        %v2248 = vpop.f32.mrf.mxu0
        %v2249 = vadd.f32 %v1999, %v2248
        %v2250 = vpop.f32.mrf.mxu0
        %2251 = vmatprep.mubr.f32.mxu0 0.0
        %2252 = vmatmul.mubr.f32.gmra.mxu0 %v2054
        %v2253 = vpop.f32.mrf.mxu0
        %v2254 = vadd.f32 %v1999, %v2253
        %v2255 = vpop.f32.mrf.mxu0
        %2256 = vmatprep.mubr.f32.mxu0 0.0
        %2257 = vmatmul.mubr.f32.gmra.mxu0 %v2057
        %v2258 = vpop.f32.mrf.mxu0
        %v2259 = vadd.f32 %v1999, %v2258
        %v2260 = vpop.f32.mrf.mxu0
        %2261 = vmatprep.mubr.f32.mxu0 0.0
        %2262 = vmatmul.mubr.f32.gmra.mxu0 %v2060
        %v2263 = vpop.f32.mrf.mxu0
        %v2264 = vadd.f32 %v1999, %v2263
        %v2265 = vpop.f32.mrf.mxu0
        %2266 = vmatprep.mubr.f32.mxu0 0.0
        %2267 = vmatmul.mubr.f32.gmra.mxu0 %v2063
        %v2268 = vpop.f32.mrf.mxu0
        %v2269 = vadd.f32 %v1999, %v2268
        %v2270 = vpop.f32.mrf.mxu0
        %2271 = vmatprep.mubr.f32.mxu0 0.0
        %2272 = vmatmul.mubr.f32.gmra.mxu0 %v2066
        %v2273 = vpop.f32.mrf.mxu0
        %v2274 = vadd.f32 %v1999, %v2273
        %v2275 = vpop.f32.mrf.mxu0
        %2276 = vmatprep.mubr.f32.mxu0 0.0
        %2277 = vmatmul.mubr.f32.gmra.mxu0 %v2069
        %v2278 = vpop.f32.mrf.mxu0
        %v2279 = vadd.f32 %v1999, %v2278
        %v2280 = vpop.f32.mrf.mxu0
        %2281 = vmatprep.mubr.f32.mxu0 0.0
        %2282 = vmatmul.mubr.f32.gmra.mxu0 %v2072
        %v2283 = vpop.f32.mrf.mxu0
        %v2284 = vadd.f32 %v1999, %v2283
        %v2285 = vpop.f32.mrf.mxu0
        %2286 = vmatprep.mubr.f32.mxu0 0.0
        %2287 = vmatmul.mubr.f32.gmra.mxu0 %v2075
        %v2288 = vpop.f32.mrf.mxu0
        %v2289 = vadd.f32 %v1999, %v2288
        %v2290 = vpop.f32.mrf.mxu0
        %2291 = vmatprep.mubr.f32.mxu0 0.0
        %2292 = vmatmul.mubr.f32.gmra.mxu0 %v2078
        %v2293 = vpop.f32.mrf.mxu0
        %v2294 = vadd.f32 %v1999, %v2293
        %v2295 = vpop.f32.mrf.mxu0
        %2296 = vmatprep.mubr.f32.mxu0 0.0
        %2297 = vmatmul.mubr.f32.gmra.mxu0 %v2081
        %v2298 = vpop.f32.mrf.mxu0
        %v2299 = vadd.f32 %v1999, %v2298
        %v2300 = vpop.f32.mrf.mxu0
        %2301 = vmatprep.mubr.f32.mxu0 0.0
        %2302 = vmatmul.mubr.f32.gmra.mxu0 %v2084
        %v2303 = vpop.f32.mrf.mxu0
        %v2304 = vadd.f32 %v1999, %v2303
        %v2305 = vpop.f32.mrf.mxu0
        %2306 = vmatprep.mubr.f32.mxu0 0.0
        %2307 = vmatmul.mubr.f32.gmra.mxu0 %v2087
        %v2308 = vpop.f32.mrf.mxu0
        %v2309 = vadd.f32 %v1999, %v2308
        %v2310 = vpop.f32.mrf.mxu0
        %2311 = vmatprep.mubr.f32.mxu0 0.0
        %2312 = vmatmul.mubr.f32.gmra.mxu0 %v2090
        %v2313 = vpop.f32.mrf.mxu0
        %v2314 = vadd.f32 %v1999, %v2313
        %v2315 = vpop.f32.mrf.mxu0
        %2316 = vmatprep.mubr.f32.mxu0 0.0
        %2317 = vmatmul.mubr.f32.gmra.mxu0 %v2093
        %v2318 = vpop.f32.mrf.mxu0
        %v2319 = vadd.f32 %v1999, %v2318
        %v2320 = vpop.f32.mrf.mxu0
        %2321 = vmatprep.mubr.f32.mxu0 0.0
        %2322 = vmatmul.mubr.f32.gmra.mxu0 %v2096
        %v2323 = vpop.f32.mrf.mxu0
        %v2324 = vadd.f32 %v1999, %v2323
        %v2325 = vpop.f32.mrf.mxu0
        %2326 = vdwg.mxu0
        %vm2327 = vcmp.gt.f32.partialorder %v2169, 0.0
        %vm2328 = vcmp.gt.f32.partialorder %v2174, 0.0
        %vm2329 = vcmp.gt.f32.partialorder %v2179, 0.0
        %vm2330 = vcmp.gt.f32.partialorder %v2184, 0.0
        %vm2331 = vcmp.gt.f32.partialorder %v2189, 0.0
        %vm2332 = vcmp.gt.f32.partialorder %v2194, 0.0
        %vm2333 = vcmp.gt.f32.partialorder %v2199, 0.0
        %vm2334 = vcmp.gt.f32.partialorder %v2204, 0.0
        %vm2335 = vcmp.gt.f32.partialorder %v2209, 0.0
        %vm2336 = vcmp.gt.f32.partialorder %v2214, 0.0
        %vm2337 = vcmp.gt.f32.partialorder %v2219, 0.0
        %vm2338 = vcmp.gt.f32.partialorder %v2224, 0.0
        %vm2339 = vcmp.gt.f32.partialorder %v2229, 0.0
        %vm2340 = vcmp.gt.f32.partialorder %v2234, 0.0
        %vm2341 = vcmp.gt.f32.partialorder %v2239, 0.0
        %vm2342 = vcmp.gt.f32.partialorder %v2244, 0.0
        %vm2343 = vcmp.gt.f32.partialorder %v2249, 0.0
        %vm2344 = vcmp.gt.f32.partialorder %v2254, 0.0
        %vm2345 = vcmp.gt.f32.partialorder %v2259, 0.0
        %vm2346 = vcmp.gt.f32.partialorder %v2264, 0.0
        %vm2347 = vcmp.gt.f32.partialorder %v2269, 0.0
        %vm2348 = vcmp.gt.f32.partialorder %v2274, 0.0
        %vm2349 = vcmp.gt.f32.partialorder %v2279, 0.0
        %vm2350 = vcmp.gt.f32.partialorder %v2284, 0.0
        %vm2351 = vcmp.gt.f32.partialorder %v2289, 0.0
        %vm2352 = vcmp.gt.f32.partialorder %v2294, 0.0
        %vm2353 = vcmp.gt.f32.partialorder %v2299, 0.0
        %vm2354 = vcmp.gt.f32.partialorder %v2304, 0.0
        %vm2355 = vcmp.gt.f32.partialorder %v2309, 0.0
        %vm2356 = vcmp.gt.f32.partialorder %v2314, 0.0
        %vm2357 = vcmp.gt.f32.partialorder %v2319, 0.0
        %vm2358 = vcmp.gt.f32.partialorder %v2324, 0.0
        %v2359 = vmin.f32 %v2169, 0.0
        %v2360 = vmin.f32 %v2174, 0.0
        %v2361 = vmin.f32 %v2179, 0.0
        %v2362 = vmin.f32 %v2184, 0.0
        %v2363 = vmin.f32 %v2189, 0.0
        %v2364 = vmin.f32 %v2194, 0.0
        %v2365 = vmin.f32 %v2199, 0.0
        %v2366 = vmin.f32 %v2204, 0.0
        %v2367 = vmin.f32 %v2209, 0.0
        %v2368 = vmin.f32 %v2214, 0.0
        %v2369 = vmin.f32 %v2219, 0.0
        %v2370 = vmin.f32 %v2224, 0.0
        %v2371 = vmin.f32 %v2229, 0.0
        %v2372 = vmin.f32 %v2234, 0.0
        %v2373 = vmin.f32 %v2239, 0.0
        %v2374 = vmin.f32 %v2244, 0.0
        %v2375 = vmin.f32 %v2249, 0.0
        %v2376 = vmin.f32 %v2254, 0.0
        %v2377 = vmin.f32 %v2259, 0.0
        %v2378 = vmin.f32 %v2264, 0.0
        %v2379 = vmin.f32 %v2269, 0.0
        %v2380 = vmin.f32 %v2274, 0.0
        %v2381 = vmin.f32 %v2279, 0.0
        %v2382 = vmin.f32 %v2284, 0.0
        %v2383 = vmin.f32 %v2289, 0.0
        %v2384 = vmin.f32 %v2294, 0.0
        %v2385 = vmin.f32 %v2299, 0.0
        %v2386 = vmin.f32 %v2304, 0.0
        %v2387 = vmin.f32 %v2309, 0.0
        %v2388 = vmin.f32 %v2314, 0.0
        %v2389 = vmin.f32 %v2319, 0.0
        %v2390 = vmin.f32 %v2324, 0.0
        %v2391 = vmul.f32 %v2359, 1.442695
        %v2392 = vpow.pop %v2391
        %v2393 = vmul.f32 %v2360, 1.442695
        %v2394 = vpow.pop %v2393
        %v2395 = vmul.f32 %v2361, 1.442695
        %v2396 = vpow.pop %v2395
        %v2397 = vmul.f32 %v2362, 1.442695
        %v2398 = vpow.pop %v2397
        %v2399 = vmul.f32 %v2363, 1.442695
        %v2400 = vpow.pop %v2399
        %v2401 = vmul.f32 %v2364, 1.442695
        %v2402 = vpow.pop %v2401
        %v2403 = vmul.f32 %v2365, 1.442695
        %v2404 = vpow.pop %v2403
        %v2405 = vmul.f32 %v2366, 1.442695
        %v2406 = vpow.pop %v2405
        %v2407 = vmul.f32 %v2367, 1.442695
        %v2408 = vpow.pop %v2407
        %v2409 = vmul.f32 %v2368, 1.442695
        %v2410 = vpow.pop %v2409
        %v2411 = vmul.f32 %v2369, 1.442695
        %v2412 = vpow.pop %v2411
        %v2413 = vmul.f32 %v2370, 1.442695
        %v2414 = vpow.pop %v2413
        %v2415 = vmul.f32 %v2371, 1.442695
        %v2416 = vpow.pop %v2415
        %v2417 = vmul.f32 %v2372, 1.442695
        %v2418 = vpow.pop %v2417
        %v2419 = vmul.f32 %v2373, 1.442695
        %v2420 = vpow.pop %v2419
        %v2421 = vmul.f32 %v2374, 1.442695
        %v2422 = vpow.pop %v2421
        %v2423 = vmul.f32 %v2375, 1.442695
        %v2424 = vpow.pop %v2423
        %v2425 = vmul.f32 %v2376, 1.442695
        %v2426 = vpow.pop %v2425
        %v2427 = vmul.f32 %v2377, 1.442695
        %v2428 = vpow.pop %v2427
        %v2429 = vmul.f32 %v2378, 1.442695
        %v2430 = vpow.pop %v2429
        %v2431 = vmul.f32 %v2379, 1.442695
        %v2432 = vpow.pop %v2431
        %v2433 = vmul.f32 %v2380, 1.442695
        %v2434 = vpow.pop %v2433
        %v2435 = vmul.f32 %v2381, 1.442695
        %v2436 = vpow.pop %v2435
        %v2437 = vmul.f32 %v2382, 1.442695
        %v2438 = vpow.pop %v2437
        %v2439 = vmul.f32 %v2383, 1.442695
        %v2440 = vpow.pop %v2439
        %v2441 = vmul.f32 %v2384, 1.442695
        %v2442 = vpow.pop %v2441
        %v2443 = vmul.f32 %v2385, 1.442695
        %v2444 = vpow.pop %v2443
        %v2445 = vmul.f32 %v2386, 1.442695
        %v2446 = vpow.pop %v2445
        %v2447 = vmul.f32 %v2387, 1.442695
        %v2448 = vpow.pop %v2447
        %v2449 = vmul.f32 %v2388, 1.442695
        %v2450 = vpow.pop %v2449
        %v2451 = vmul.f32 %v2389, 1.442695
        %v2452 = vpow.pop %v2451
        %v2453 = vmul.f32 %v2390, 1.442695
        %v2454 = vpow.pop %v2453
        %v2455 = vsub.f32 %v2392, 1.0
        %v2456 = vsub.f32 %v2394, 1.0
        %v2457 = vsub.f32 %v2396, 1.0
        %v2458 = vsub.f32 %v2398, 1.0
        %v2459 = vsub.f32 %v2400, 1.0
        %v2460 = vsub.f32 %v2402, 1.0
        %v2461 = vsub.f32 %v2404, 1.0
        %v2462 = vsub.f32 %v2406, 1.0
        %v2463 = vsub.f32 %v2408, 1.0
        %v2464 = vsub.f32 %v2410, 1.0
        %v2465 = vsub.f32 %v2412, 1.0
        %v2466 = vsub.f32 %v2414, 1.0
        %v2467 = vsub.f32 %v2416, 1.0
        %v2468 = vsub.f32 %v2418, 1.0
        %v2469 = vsub.f32 %v2420, 1.0
        %v2470 = vsub.f32 %v2422, 1.0
        %v2471 = vsub.f32 %v2424, 1.0
        %v2472 = vsub.f32 %v2426, 1.0
        %v2473 = vsub.f32 %v2428, 1.0
        %v2474 = vsub.f32 %v2430, 1.0
        %v2475 = vsub.f32 %v2432, 1.0
        %v2476 = vsub.f32 %v2434, 1.0
        %v2477 = vsub.f32 %v2436, 1.0
        %v2478 = vsub.f32 %v2438, 1.0
        %v2479 = vsub.f32 %v2440, 1.0
        %v2480 = vsub.f32 %v2442, 1.0
        %v2481 = vsub.f32 %v2444, 1.0
        %v2482 = vsub.f32 %v2446, 1.0
        %v2483 = vsub.f32 %v2448, 1.0
        %v2484 = vsub.f32 %v2450, 1.0
        %v2485 = vsub.f32 %v2452, 1.0
        %v2486 = vsub.f32 %v2454, 1.0
        %v2487 = vsel %vm2327, %v2169, %v2455
        %v2488 = vsel %vm2328, %v2174, %v2456
        %v2489 = vsel %vm2329, %v2179, %v2457
        %v2490 = vsel %vm2330, %v2184, %v2458
        %v2491 = vsel %vm2331, %v2189, %v2459
        %v2492 = vsel %vm2332, %v2194, %v2460
        %v2493 = vsel %vm2333, %v2199, %v2461
        %v2494 = vsel %vm2334, %v2204, %v2462
        %v2495 = vsel %vm2335, %v2209, %v2463
        %v2496 = vsel %vm2336, %v2214, %v2464
        %v2497 = vsel %vm2337, %v2219, %v2465
        %v2498 = vsel %vm2338, %v2224, %v2466
        %v2499 = vsel %vm2339, %v2229, %v2467
        %v2500 = vsel %vm2340, %v2234, %v2468
        %v2501 = vsel %vm2341, %v2239, %v2469
        %v2502 = vsel %vm2342, %v2244, %v2470
        %v2503 = vsel %vm2343, %v2249, %v2471
        %v2504 = vsel %vm2344, %v2254, %v2472
        %v2505 = vsel %vm2345, %v2259, %v2473
        %v2506 = vsel %vm2346, %v2264, %v2474
        %v2507 = vsel %vm2347, %v2269, %v2475
        %v2508 = vsel %vm2348, %v2274, %v2476
        %v2509 = vsel %vm2349, %v2279, %v2477
        %v2510 = vsel %vm2350, %v2284, %v2478
        %v2511 = vsel %vm2351, %v2289, %v2479
        %v2512 = vsel %vm2352, %v2294, %v2480
        %v2513 = vsel %vm2353, %v2299, %v2481
        %v2514 = vsel %vm2354, %v2304, %v2482
        %v2515 = vsel %vm2355, %v2309, %v2483
        %v2516 = vsel %vm2356, %v2314, %v2484
        %v2517 = vsel %vm2357, %v2319, %v2485
        %v2518 = vsel %vm2358, %v2324, %v2486
        %s2519 = scalar_lea.vmem [#allocation3], 24
        %2520 = vst [vmem:[%s2519 + $0x1] sm:$0xff] %v2487
        %2521 = vst [vmem:[%s2519 + $0x9] sm:$0xff] %v2488
        %2522 = vst [vmem:[%s2519 + $0x19] sm:$0xff] %v2489
        %2523 = vst [vmem:[%s2519 + $0x21] sm:$0xff] %v2490
        %2524 = vst [vmem:[%s2519 + $0x31] sm:$0xff] %v2491
        %2525 = vst [vmem:[%s2519 + $0x39] sm:$0xff] %v2492
        %2526 = vst [vmem:[%s2519 + $0x49] sm:$0xff] %v2493
        %2527 = vst [vmem:[%s2519 + $0x51] sm:$0xff] %v2494
        %2528 = vst [vmem:[%s2519 + $0x61] sm:$0xff] %v2495
        %2529 = vst [vmem:[%s2519 + $0x69] sm:$0xff] %v2496
        %2530 = vst [vmem:[%s2519 + $0x79] sm:$0xff] %v2497
        %2531 = vst [vmem:[%s2519 + $0x81] sm:$0xff] %v2498
        %2532 = vst [vmem:[%s2519 + $0x91] sm:$0xff] %v2499
        %2533 = vst [vmem:[%s2519 + $0x99] sm:$0xff] %v2500
        %2534 = vst [vmem:[%s2519 + $0xa9] sm:$0xff] %v2501
        %2535 = vst [vmem:[%s2519 + $0xb1] sm:$0xff] %v2502
        %2536 = vst [vmem:[%s2519 + $0xc1] sm:$0xff] %v2503
        %2537 = vst [vmem:[%s2519 + $0xc9] sm:$0xff] %v2504
        %2538 = vst [vmem:[%s2519 + $0xd9] sm:$0xff] %v2505
        %2539 = vst [vmem:[%s2519 + $0xe1] sm:$0xff] %v2506
        %2540 = vst [vmem:[%s2519 + $0xf1] sm:$0xff] %v2507
        %2541 = vst [vmem:[%s2519 + $0xf9] sm:$0xff] %v2508
        %2542 = vst [vmem:[%s2519 + $0x109] sm:$0xff] %v2509
        %2543 = vst [vmem:[%s2519 + $0x111] sm:$0xff] %v2510
        %2544 = vst [vmem:[%s2519 + $0x121] sm:$0xff] %v2511
        %2545 = vst [vmem:[%s2519 + $0x129] sm:$0xff] %v2512
        %2546 = vst [vmem:[%s2519 + $0x139] sm:$0xff] %v2513
        %2547 = vst [vmem:[%s2519 + $0x141] sm:$0xff] %v2514
        %2548 = vst [vmem:[%s2519 + $0x151] sm:$0xff] %v2515
        %2549 = vst [vmem:[%s2519 + $0x159] sm:$0xff] %v2516
        %2550 = vst [vmem:[%s2519 + $0x169] sm:$0xff] %v2517
        %2551 = vst [vmem:[%s2519 + $0x171] sm:$0xff] %v2518
        %v2552 = vld [vmem:[#allocation3] sm:$0xff]
        %v2553 = vld [vmem:[#allocation3 + $0x8] sm:$0xff]
        %v2554 = vld [vmem:[#allocation3 + $0x18] sm:$0xff]
        %v2555 = vld [vmem:[#allocation3 + $0x20] sm:$0xff]
        %v2556 = vld [vmem:[#allocation3 + $0x30] sm:$0xff]
        %v2557 = vld [vmem:[#allocation3 + $0x38] sm:$0xff]
        %v2558 = vld [vmem:[#allocation3 + $0x48] sm:$0xff]
        %v2559 = vld [vmem:[#allocation3 + $0x50] sm:$0xff]
        %v2560 = vld [vmem:[#allocation3 + $0x60] sm:$0xff]
        %v2561 = vld [vmem:[#allocation3 + $0x68] sm:$0xff]
        %v2562 = vld [vmem:[#allocation3 + $0x78] sm:$0xff]
        %v2563 = vld [vmem:[#allocation3 + $0x80] sm:$0xff]
        %v2564 = vld [vmem:[#allocation3 + $0x90] sm:$0xff]
        %v2565 = vld [vmem:[#allocation3 + $0x98] sm:$0xff]
        %v2566 = vld [vmem:[#allocation3 + $0xa8] sm:$0xff]
        %v2567 = vld [vmem:[#allocation3 + $0xb0] sm:$0xff]
        %v2568 = vld [vmem:[#allocation3 + $0xc0] sm:$0xff]
        %v2569 = vld [vmem:[#allocation3 + $0xc8] sm:$0xff]
        %v2570 = vld [vmem:[#allocation3 + $0xd8] sm:$0xff]
        %v2571 = vld [vmem:[#allocation3 + $0xe0] sm:$0xff]
        %v2572 = vld [vmem:[#allocation3 + $0xf0] sm:$0xff]
        %v2573 = vld [vmem:[#allocation3 + $0xf8] sm:$0xff]
        %v2574 = vld [vmem:[#allocation3 + $0x108] sm:$0xff]
        %v2575 = vld [vmem:[#allocation3 + $0x110] sm:$0xff]
        %v2576 = vld [vmem:[#allocation3 + $0x120] sm:$0xff]
        %v2577 = vld [vmem:[#allocation3 + $0x128] sm:$0xff]
        %v2578 = vld [vmem:[#allocation3 + $0x138] sm:$0xff]
        %v2579 = vld [vmem:[#allocation3 + $0x140] sm:$0xff]
        %v2580 = vld [vmem:[#allocation3 + $0x150] sm:$0xff]
        %v2581 = vld [vmem:[#allocation3 + $0x158] sm:$0xff]
        %v2582 = vld [vmem:[#allocation3 + $0x168] sm:$0xff]
        %v2583 = vld [vmem:[#allocation3 + $0x170] sm:$0xff]
        %v2584 = vld [vmem:[#allocation3 + $0x1] sm:$0xff]
        %v2585 = vld [vmem:[#allocation3 + $0x9] sm:$0xff]
        %v2586 = vld [vmem:[#allocation3 + $0x19] sm:$0xff]
        %v2587 = vld [vmem:[#allocation3 + $0x21] sm:$0xff]
        %v2588 = vld [vmem:[#allocation3 + $0x31] sm:$0xff]
        %v2589 = vld [vmem:[#allocation3 + $0x39] sm:$0xff]
        %v2590 = vld [vmem:[#allocation3 + $0x49] sm:$0xff]
        %v2591 = vld [vmem:[#allocation3 + $0x51] sm:$0xff]
        %v2592 = vld [vmem:[#allocation3 + $0x61] sm:$0xff]
        %v2593 = vld [vmem:[#allocation3 + $0x69] sm:$0xff]
        %v2594 = vld [vmem:[#allocation3 + $0x79] sm:$0xff]
        %v2595 = vld [vmem:[#allocation3 + $0x81] sm:$0xff]
        %v2596 = vld [vmem:[#allocation3 + $0x91] sm:$0xff]
        %v2597 = vld [vmem:[#allocation3 + $0x99] sm:$0xff]
        %v2598 = vld [vmem:[#allocation3 + $0xa9] sm:$0xff]
        %v2599 = vld [vmem:[#allocation3 + $0xb1] sm:$0xff]
        %v2600 = vld [vmem:[#allocation3 + $0xc1] sm:$0xff]
        %v2601 = vld [vmem:[#allocation3 + $0xc9] sm:$0xff]
        %v2602 = vld [vmem:[#allocation3 + $0xd9] sm:$0xff]
        %v2603 = vld [vmem:[#allocation3 + $0xe1] sm:$0xff]
        %v2604 = vld [vmem:[#allocation3 + $0xf1] sm:$0xff]
        %v2605 = vld [vmem:[#allocation3 + $0xf9] sm:$0xff]
        %v2606 = vld [vmem:[#allocation3 + $0x109] sm:$0xff]
        %v2607 = vld [vmem:[#allocation3 + $0x111] sm:$0xff]
        %v2608 = vld [vmem:[#allocation3 + $0x121] sm:$0xff]
        %v2609 = vld [vmem:[#allocation3 + $0x129] sm:$0xff]
        %v2610 = vld [vmem:[#allocation3 + $0x139] sm:$0xff]
        %v2611 = vld [vmem:[#allocation3 + $0x141] sm:$0xff]
        %v2612 = vld [vmem:[#allocation3 + $0x151] sm:$0xff]
        %v2613 = vld [vmem:[#allocation3 + $0x159] sm:$0xff]
        %v2614 = vld [vmem:[#allocation3 + $0x169] sm:$0xff]
        %v2615 = vld [vmem:[#allocation3 + $0x171] sm:$0xff]
        %v2616 = vld [vmem:[#allocation3 + $0x2] sm:$0xff]
        %v2617 = vld [vmem:[#allocation3 + $0xa] sm:$0xff]
        %v2618 = vld [vmem:[#allocation3 + $0x1a] sm:$0xff]
        %v2619 = vld [vmem:[#allocation3 + $0x22] sm:$0xff]
        %v2620 = vld [vmem:[#allocation3 + $0x32] sm:$0xff]
        %v2621 = vld [vmem:[#allocation3 + $0x3a] sm:$0xff]
        %v2622 = vld [vmem:[#allocation3 + $0x4a] sm:$0xff]
        %v2623 = vld [vmem:[#allocation3 + $0x52] sm:$0xff]
        %v2624 = vld [vmem:[#allocation3 + $0x62] sm:$0xff]
        %v2625 = vld [vmem:[#allocation3 + $0x6a] sm:$0xff]
        %v2626 = vld [vmem:[#allocation3 + $0x7a] sm:$0xff]
        %v2627 = vld [vmem:[#allocation3 + $0x82] sm:$0xff]
        %v2628 = vld [vmem:[#allocation3 + $0x92] sm:$0xff]
        %v2629 = vld [vmem:[#allocation3 + $0x9a] sm:$0xff]
        %v2630 = vld [vmem:[#allocation3 + $0xaa] sm:$0xff]
        %v2631 = vld [vmem:[#allocation3 + $0xb2] sm:$0xff]
        %v2632 = vld [vmem:[#allocation3 + $0xc2] sm:$0xff]
        %v2633 = vld [vmem:[#allocation3 + $0xca] sm:$0xff]
        %v2634 = vld [vmem:[#allocation3 + $0xda] sm:$0xff]
        %v2635 = vld [vmem:[#allocation3 + $0xe2] sm:$0xff]
        %v2636 = vld [vmem:[#allocation3 + $0xf2] sm:$0xff]
        %v2637 = vld [vmem:[#allocation3 + $0xfa] sm:$0xff]
        %v2638 = vld [vmem:[#allocation3 + $0x10a] sm:$0xff]
        %v2639 = vld [vmem:[#allocation3 + $0x112] sm:$0xff]
        %v2640 = vld [vmem:[#allocation3 + $0x122] sm:$0xff]
        %v2641 = vld [vmem:[#allocation3 + $0x12a] sm:$0xff]
        %v2642 = vld [vmem:[#allocation3 + $0x13a] sm:$0xff]
        %v2643 = vld [vmem:[#allocation3 + $0x142] sm:$0xff]
        %v2644 = vld [vmem:[#allocation3 + $0x152] sm:$0xff]
        %v2645 = vld [vmem:[#allocation3 + $0x15a] sm:$0xff]
        %v2646 = vld [vmem:[#allocation3 + $0x16a] sm:$0xff]
        %v2647 = vld [vmem:[#allocation3 + $0x172] sm:$0xff]
        %v2648 = vld [vmem:[%s2519] sm:$0xff]
        %v2649 = vld [vmem:[%s2519 + $0x8] sm:$0xff]
        %v2650 = vld [vmem:[%s2519 + $0x18] sm:$0xff]
        %v2651 = vld [vmem:[%s2519 + $0x20] sm:$0xff]
        %v2652 = vld [vmem:[%s2519 + $0x30] sm:$0xff]
        %v2653 = vld [vmem:[%s2519 + $0x38] sm:$0xff]
        %v2654 = vld [vmem:[%s2519 + $0x48] sm:$0xff]
        %v2655 = vld [vmem:[%s2519 + $0x50] sm:$0xff]
        %v2656 = vld [vmem:[%s2519 + $0x60] sm:$0xff]
        %v2657 = vld [vmem:[%s2519 + $0x68] sm:$0xff]
        %v2658 = vld [vmem:[%s2519 + $0x78] sm:$0xff]
        %v2659 = vld [vmem:[%s2519 + $0x80] sm:$0xff]
        %v2660 = vld [vmem:[%s2519 + $0x90] sm:$0xff]
        %v2661 = vld [vmem:[%s2519 + $0x98] sm:$0xff]
        %v2662 = vld [vmem:[%s2519 + $0xa8] sm:$0xff]
        %v2663 = vld [vmem:[%s2519 + $0xb0] sm:$0xff]
        %v2664 = vld [vmem:[%s2519 + $0xc0] sm:$0xff]
        %v2665 = vld [vmem:[%s2519 + $0xc8] sm:$0xff]
        %v2666 = vld [vmem:[%s2519 + $0xd8] sm:$0xff]
        %v2667 = vld [vmem:[%s2519 + $0xe0] sm:$0xff]
        %v2668 = vld [vmem:[%s2519 + $0xf0] sm:$0xff]
        %v2669 = vld [vmem:[%s2519 + $0xf8] sm:$0xff]
        %v2670 = vld [vmem:[%s2519 + $0x108] sm:$0xff]
        %v2671 = vld [vmem:[%s2519 + $0x110] sm:$0xff]
        %v2672 = vld [vmem:[%s2519 + $0x120] sm:$0xff]
        %v2673 = vld [vmem:[%s2519 + $0x128] sm:$0xff]
        %v2674 = vld [vmem:[%s2519 + $0x138] sm:$0xff]
        %v2675 = vld [vmem:[%s2519 + $0x140] sm:$0xff]
        %v2676 = vld [vmem:[%s2519 + $0x150] sm:$0xff]
        %v2677 = vld [vmem:[%s2519 + $0x158] sm:$0xff]
        %v2678 = vld [vmem:[%s2519 + $0x168] sm:$0xff]
        %v2679 = vld [vmem:[%s2519 + $0x170] sm:$0xff]
        %v2680 = vld [vmem:[%s2519 + $0x1] sm:$0xff]
        %v2681 = vld [vmem:[%s2519 + $0x9] sm:$0xff]
        %v2682 = vld [vmem:[%s2519 + $0x19] sm:$0xff]
        %v2683 = vld [vmem:[%s2519 + $0x21] sm:$0xff]
        %v2684 = vld [vmem:[%s2519 + $0x31] sm:$0xff]
        %v2685 = vld [vmem:[%s2519 + $0x39] sm:$0xff]
        %v2686 = vld [vmem:[%s2519 + $0x49] sm:$0xff]
        %v2687 = vld [vmem:[%s2519 + $0x51] sm:$0xff]
        %v2688 = vld [vmem:[%s2519 + $0x61] sm:$0xff]
        %v2689 = vld [vmem:[%s2519 + $0x69] sm:$0xff]
        %v2690 = vld [vmem:[%s2519 + $0x79] sm:$0xff]
        %v2691 = vld [vmem:[%s2519 + $0x81] sm:$0xff]
        %v2692 = vld [vmem:[%s2519 + $0x91] sm:$0xff]
        %v2693 = vld [vmem:[%s2519 + $0x99] sm:$0xff]
        %v2694 = vld [vmem:[%s2519 + $0xa9] sm:$0xff]
        %v2695 = vld [vmem:[%s2519 + $0xb1] sm:$0xff]
        %v2696 = vld [vmem:[%s2519 + $0xc1] sm:$0xff]
        %v2697 = vld [vmem:[%s2519 + $0xc9] sm:$0xff]
        %v2698 = vld [vmem:[%s2519 + $0xd9] sm:$0xff]
        %v2699 = vld [vmem:[%s2519 + $0xe1] sm:$0xff]
        %v2700 = vld [vmem:[%s2519 + $0xf1] sm:$0xff]
        %v2701 = vld [vmem:[%s2519 + $0xf9] sm:$0xff]
        %v2702 = vld [vmem:[%s2519 + $0x109] sm:$0xff]
        %v2703 = vld [vmem:[%s2519 + $0x111] sm:$0xff]
        %v2704 = vld [vmem:[%s2519 + $0x121] sm:$0xff]
        %v2705 = vld [vmem:[%s2519 + $0x129] sm:$0xff]
        %v2706 = vld [vmem:[%s2519 + $0x139] sm:$0xff]
        %v2707 = vld [vmem:[%s2519 + $0x141] sm:$0xff]
        %v2708 = vld [vmem:[%s2519 + $0x151] sm:$0xff]
        %v2709 = vld [vmem:[%s2519 + $0x159] sm:$0xff]
        %v2710 = vld [vmem:[%s2519 + $0x169] sm:$0xff]
        %v2711 = vld [vmem:[%s2519 + $0x171] sm:$0xff]
        %v2712 = vld [vmem:[%s2519 + $0x2] sm:$0xff]
        %v2713 = vld [vmem:[%s2519 + $0xa] sm:$0xff]
        %v2714 = vld [vmem:[%s2519 + $0x1a] sm:$0xff]
        %v2715 = vld [vmem:[%s2519 + $0x22] sm:$0xff]
        %v2716 = vld [vmem:[%s2519 + $0x32] sm:$0xff]
        %v2717 = vld [vmem:[%s2519 + $0x3a] sm:$0xff]
        %v2718 = vld [vmem:[%s2519 + $0x4a] sm:$0xff]
        %v2719 = vld [vmem:[%s2519 + $0x52] sm:$0xff]
        %v2720 = vld [vmem:[%s2519 + $0x62] sm:$0xff]
        %v2721 = vld [vmem:[%s2519 + $0x6a] sm:$0xff]
        %v2722 = vld [vmem:[%s2519 + $0x7a] sm:$0xff]
        %v2723 = vld [vmem:[%s2519 + $0x82] sm:$0xff]
        %v2724 = vld [vmem:[%s2519 + $0x92] sm:$0xff]
        %v2725 = vld [vmem:[%s2519 + $0x9a] sm:$0xff]
        %v2726 = vld [vmem:[%s2519 + $0xaa] sm:$0xff]
        %v2727 = vld [vmem:[%s2519 + $0xb2] sm:$0xff]
        %v2728 = vld [vmem:[%s2519 + $0xc2] sm:$0xff]
        %v2729 = vld [vmem:[%s2519 + $0xca] sm:$0xff]
        %v2730 = vld [vmem:[%s2519 + $0xda] sm:$0xff]
        %v2731 = vld [vmem:[%s2519 + $0xe2] sm:$0xff]
        %v2732 = vld [vmem:[%s2519 + $0xf2] sm:$0xff]
        %v2733 = vld [vmem:[%s2519 + $0xfa] sm:$0xff]
        %v2734 = vld [vmem:[%s2519 + $0x10a] sm:$0xff]
        %v2735 = vld [vmem:[%s2519 + $0x112] sm:$0xff]
        %v2736 = vld [vmem:[%s2519 + $0x122] sm:$0xff]
        %v2737 = vld [vmem:[%s2519 + $0x12a] sm:$0xff]
        %v2738 = vld [vmem:[%s2519 + $0x13a] sm:$0xff]
        %v2739 = vld [vmem:[%s2519 + $0x142] sm:$0xff]
        %v2740 = vld [vmem:[%s2519 + $0x152] sm:$0xff]
        %v2741 = vld [vmem:[%s2519 + $0x15a] sm:$0xff]
        %v2742 = vld [vmem:[%s2519 + $0x16a] sm:$0xff]
        %v2743 = vld [vmem:[%s2519 + $0x172] sm:$0xff]
        %s2744 = scalar_lea.vmem [#allocation3], 48
        %v2745 = vld [vmem:[%s2744] sm:$0xff]
        %v2746 = vld [vmem:[%s2744 + $0x8] sm:$0xff]
        %v2747 = vld [vmem:[%s2744 + $0x18] sm:$0xff]
        %v2748 = vld [vmem:[%s2744 + $0x20] sm:$0xff]
        %v2749 = vld [vmem:[%s2744 + $0x30] sm:$0xff]
        %v2750 = vld [vmem:[%s2744 + $0x38] sm:$0xff]
        %v2751 = vld [vmem:[%s2744 + $0x48] sm:$0xff]
        %v2752 = vld [vmem:[%s2744 + $0x50] sm:$0xff]
        %v2753 = vld [vmem:[%s2744 + $0x60] sm:$0xff]
        %v2754 = vld [vmem:[%s2744 + $0x68] sm:$0xff]
        %v2755 = vld [vmem:[%s2744 + $0x78] sm:$0xff]
        %v2756 = vld [vmem:[%s2744 + $0x80] sm:$0xff]
        %v2757 = vld [vmem:[%s2744 + $0x90] sm:$0xff]
        %v2758 = vld [vmem:[%s2744 + $0x98] sm:$0xff]
        %v2759 = vld [vmem:[%s2744 + $0xa8] sm:$0xff]
        %v2760 = vld [vmem:[%s2744 + $0xb0] sm:$0xff]
        %v2761 = vld [vmem:[%s2744 + $0xc0] sm:$0xff]
        %v2762 = vld [vmem:[%s2744 + $0xc8] sm:$0xff]
        %v2763 = vld [vmem:[%s2744 + $0xd8] sm:$0xff]
        %v2764 = vld [vmem:[%s2744 + $0xe0] sm:$0xff]
        %v2765 = vld [vmem:[%s2744 + $0xf0] sm:$0xff]
        %v2766 = vld [vmem:[%s2744 + $0xf8] sm:$0xff]
        %v2767 = vld [vmem:[%s2744 + $0x108] sm:$0xff]
        %v2768 = vld [vmem:[%s2744 + $0x110] sm:$0xff]
        %v2769 = vld [vmem:[%s2744 + $0x120] sm:$0xff]
        %v2770 = vld [vmem:[%s2744 + $0x128] sm:$0xff]
        %v2771 = vld [vmem:[%s2744 + $0x138] sm:$0xff]
        %v2772 = vld [vmem:[%s2744 + $0x140] sm:$0xff]
        %v2773 = vld [vmem:[%s2744 + $0x150] sm:$0xff]
        %v2774 = vld [vmem:[%s2744 + $0x158] sm:$0xff]
        %v2775 = vld [vmem:[%s2744 + $0x168] sm:$0xff]
        %v2776 = vld [vmem:[%s2744 + $0x170] sm:$0xff]
        %v2777 = vld [vmem:[%s2744 + $0x1] sm:$0xff]
        %v2778 = vld [vmem:[%s2744 + $0x9] sm:$0xff]
        %v2779 = vld [vmem:[%s2744 + $0x19] sm:$0xff]
        %v2780 = vld [vmem:[%s2744 + $0x21] sm:$0xff]
        %v2781 = vld [vmem:[%s2744 + $0x31] sm:$0xff]
        %v2782 = vld [vmem:[%s2744 + $0x39] sm:$0xff]
        %v2783 = vld [vmem:[%s2744 + $0x49] sm:$0xff]
        %v2784 = vld [vmem:[%s2744 + $0x51] sm:$0xff]
        %v2785 = vld [vmem:[%s2744 + $0x61] sm:$0xff]
        %v2786 = vld [vmem:[%s2744 + $0x69] sm:$0xff]
        %v2787 = vld [vmem:[%s2744 + $0x79] sm:$0xff]
        %v2788 = vld [vmem:[%s2744 + $0x81] sm:$0xff]
        %v2789 = vld [vmem:[%s2744 + $0x91] sm:$0xff]
        %v2790 = vld [vmem:[%s2744 + $0x99] sm:$0xff]
        %v2791 = vld [vmem:[%s2744 + $0xa9] sm:$0xff]
        %v2792 = vld [vmem:[%s2744 + $0xb1] sm:$0xff]
        %v2793 = vld [vmem:[%s2744 + $0xc1] sm:$0xff]
        %v2794 = vld [vmem:[%s2744 + $0xc9] sm:$0xff]
        %v2795 = vld [vmem:[%s2744 + $0xd9] sm:$0xff]
        %v2796 = vld [vmem:[%s2744 + $0xe1] sm:$0xff]
        %v2797 = vld [vmem:[%s2744 + $0xf1] sm:$0xff]
        %v2798 = vld [vmem:[%s2744 + $0xf9] sm:$0xff]
        %v2799 = vld [vmem:[%s2744 + $0x109] sm:$0xff]
        %v2800 = vld [vmem:[%s2744 + $0x111] sm:$0xff]
        %v2801 = vld [vmem:[%s2744 + $0x121] sm:$0xff]
        %v2802 = vld [vmem:[%s2744 + $0x129] sm:$0xff]
        %v2803 = vld [vmem:[%s2744 + $0x139] sm:$0xff]
        %v2804 = vld [vmem:[%s2744 + $0x141] sm:$0xff]
        %v2805 = vld [vmem:[%s2744 + $0x151] sm:$0xff]
        %v2806 = vld [vmem:[%s2744 + $0x159] sm:$0xff]
        %v2807 = vld [vmem:[%s2744 + $0x169] sm:$0xff]
        %v2808 = vld [vmem:[%s2744 + $0x171] sm:$0xff]
        %v2809 = vld [vmem:[%s2744 + $0x2] sm:$0xff]
        %v2810 = vld [vmem:[%s2744 + $0xa] sm:$0xff]
        %v2811 = vld [vmem:[%s2744 + $0x1a] sm:$0xff]
        %v2812 = vld [vmem:[%s2744 + $0x22] sm:$0xff]
        %v2813 = vld [vmem:[%s2744 + $0x32] sm:$0xff]
        %v2814 = vld [vmem:[%s2744 + $0x3a] sm:$0xff]
        %v2815 = vld [vmem:[%s2744 + $0x4a] sm:$0xff]
        %v2816 = vld [vmem:[%s2744 + $0x52] sm:$0xff]
        %v2817 = vld [vmem:[%s2744 + $0x62] sm:$0xff]
        %v2818 = vld [vmem:[%s2744 + $0x6a] sm:$0xff]
        %v2819 = vld [vmem:[%s2744 + $0x7a] sm:$0xff]
        %v2820 = vld [vmem:[%s2744 + $0x82] sm:$0xff]
        %v2821 = vld [vmem:[%s2744 + $0x92] sm:$0xff]
        %v2822 = vld [vmem:[%s2744 + $0x9a] sm:$0xff]
        %v2823 = vld [vmem:[%s2744 + $0xaa] sm:$0xff]
        %v2824 = vld [vmem:[%s2744 + $0xb2] sm:$0xff]
        %v2825 = vld [vmem:[%s2744 + $0xc2] sm:$0xff]
        %v2826 = vld [vmem:[%s2744 + $0xca] sm:$0xff]
        %v2827 = vld [vmem:[%s2744 + $0xda] sm:$0xff]
        %v2828 = vld [vmem:[%s2744 + $0xe2] sm:$0xff]
        %v2829 = vld [vmem:[%s2744 + $0xf2] sm:$0xff]
        %v2830 = vld [vmem:[%s2744 + $0xfa] sm:$0xff]
        %v2831 = vld [vmem:[%s2744 + $0x10a] sm:$0xff]
        %v2832 = vld [vmem:[%s2744 + $0x112] sm:$0xff]
        %v2833 = vld [vmem:[%s2744 + $0x122] sm:$0xff]
        %v2834 = vld [vmem:[%s2744 + $0x12a] sm:$0xff]
        %v2835 = vld [vmem:[%s2744 + $0x13a] sm:$0xff]
        %v2836 = vld [vmem:[%s2744 + $0x142] sm:$0xff]
        %v2837 = vld [vmem:[%s2744 + $0x152] sm:$0xff]
        %v2838 = vld [vmem:[%s2744 + $0x15a] sm:$0xff]
        %v2839 = vld [vmem:[%s2744 + $0x16a] sm:$0xff]
        %v2840 = vld [vmem:[%s2744 + $0x172] sm:$0xff]
        %v2841 = vld [vmem:[#allocation4] sm:$0xff]
        %v2842 = vld [vmem:[#allocation4 + $0x8] sm:$0xff]
        %v2843 = vld [vmem:[#allocation4 + $0x10] sm:$0xff]
        %v2844 = vld [vmem:[#allocation4 + $0x18] sm:$0xff]
        %v2845 = vld [vmem:[#allocation4 + $0x20] sm:$0xff]
        %v2846 = vld [vmem:[#allocation4 + $0x28] sm:$0xff]
        %v2847 = vld [vmem:[#allocation4 + $0x30] sm:$0xff]
        %v2848 = vld [vmem:[#allocation4 + $0x38] sm:$0xff]
        %v2849 = vld [vmem:[#allocation4 + $0x40] sm:$0xff]
        %v2850 = vld [vmem:[#allocation4 + $0x48] sm:$0xff]
        %v2851 = vld [vmem:[#allocation4 + $0x50] sm:$0xff]
        %v2852 = vld [vmem:[#allocation4 + $0x58] sm:$0xff]
        %v2853 = vld [vmem:[#allocation4 + $0x60] sm:$0xff]
        %v2854 = vld [vmem:[#allocation4 + $0x68] sm:$0xff]
        %v2855 = vld [vmem:[#allocation4 + $0x70] sm:$0xff]
        %v2856 = vld [vmem:[#allocation4 + $0x78] sm:$0xff]
        %v2857 = vld [vmem:[#allocation4 + $0x80] sm:$0xff]
        %v2858 = vld [vmem:[#allocation4 + $0x88] sm:$0xff]
        %v2859 = vld [vmem:[#allocation4 + $0x90] sm:$0xff]
        %v2860 = vld [vmem:[#allocation4 + $0x98] sm:$0xff]
        %v2861 = vld [vmem:[#allocation4 + $0xa0] sm:$0xff]
        %v2862 = vld [vmem:[#allocation4 + $0xa8] sm:$0xff]
        %v2863 = vld [vmem:[#allocation4 + $0xb0] sm:$0xff]
        %v2864 = vld [vmem:[#allocation4 + $0xb8] sm:$0xff]
        %v2865 = vld [vmem:[#allocation4 + $0xc0] sm:$0xff]
        %v2866 = vld [vmem:[#allocation4 + $0xc8] sm:$0xff]
        %v2867 = vld [vmem:[#allocation4 + $0xd0] sm:$0xff]
        %v2868 = vld [vmem:[#allocation4 + $0xd8] sm:$0xff]
        %v2869 = vld [vmem:[#allocation4 + $0xe0] sm:$0xff]
        %v2870 = vld [vmem:[#allocation4 + $0xe8] sm:$0xff]
        %v2871 = vld [vmem:[#allocation4 + $0xf0] sm:$0xff]
        %v2872 = vld [vmem:[#allocation4 + $0xf8] sm:$0xff]
        %v2873 = vld [vmem:[#allocation4 + $0x100] sm:$0xff]
        %v2874 = vld [vmem:[#allocation4 + $0x108] sm:$0xff]
        %v2875 = vld [vmem:[#allocation4 + $0x110] sm:$0xff]
        %v2876 = vld [vmem:[#allocation4 + $0x118] sm:$0xff]
        %v2877 = vld [vmem:[#allocation4 + $0x120] sm:$0xff]
        %v2878 = vld [vmem:[#allocation4 + $0x128] sm:$0xff]
        %v2879 = vld [vmem:[#allocation4 + $0x130] sm:$0xff]
        %v2880 = vld [vmem:[#allocation4 + $0x138] sm:$0xff]
        %v2881 = vld [vmem:[#allocation4 + $0x140] sm:$0xff]
        %v2882 = vld [vmem:[#allocation4 + $0x148] sm:$0xff]
        %v2883 = vld [vmem:[#allocation4 + $0x150] sm:$0xff]
        %v2884 = vld [vmem:[#allocation4 + $0x158] sm:$0xff]
        %v2885 = vld [vmem:[#allocation4 + $0x160] sm:$0xff]
        %v2886 = vld [vmem:[#allocation4 + $0x168] sm:$0xff]
        %v2887 = vld [vmem:[#allocation4 + $0x170] sm:$0xff]
        %v2888 = vld [vmem:[#allocation4 + $0x178] sm:$0xff]
        %v2889 = vld [vmem:[#allocation4 + $0x180] sm:$0xff]
        %v2890 = vld [vmem:[#allocation4 + $0x188] sm:$0xff]
        %v2891 = vld [vmem:[#allocation4 + $0x190] sm:$0xff]
        %v2892 = vld [vmem:[#allocation4 + $0x198] sm:$0xff]
        %v2893 = vld [vmem:[#allocation4 + $0x1a0] sm:$0xff]
        %v2894 = vld [vmem:[#allocation4 + $0x1a8] sm:$0xff]
        %v2895 = vld [vmem:[#allocation4 + $0x1b0] sm:$0xff]
        %v2896 = vld [vmem:[#allocation4 + $0x1b8] sm:$0xff]
        %v2897 = vld [vmem:[#allocation4 + $0x1c0] sm:$0xff]
        %v2898 = vld [vmem:[#allocation4 + $0x1c8] sm:$0xff]
        %v2899 = vld [vmem:[#allocation4 + $0x1d0] sm:$0xff]
        %v2900 = vld [vmem:[#allocation4 + $0x1d8] sm:$0xff]
        %v2901 = vld [vmem:[#allocation4 + $0x1e0] sm:$0xff]
        %v2902 = vld [vmem:[#allocation4 + $0x1e8] sm:$0xff]
        %v2903 = vld [vmem:[#allocation4 + $0x1f0] sm:$0xff]
        %v2904 = vld [vmem:[#allocation4 + $0x1f8] sm:$0xff]
        %v2905 = vld [vmem:[#allocation4 + $0x200] sm:$0xff]
        %v2906 = vld [vmem:[#allocation4 + $0x208] sm:$0xff]
        %v2907 = vld [vmem:[#allocation4 + $0x210] sm:$0xff]
        %v2908 = vld [vmem:[#allocation4 + $0x218] sm:$0xff]
        %v2909 = vld [vmem:[#allocation4 + $0x220] sm:$0xff]
        %v2910 = vld [vmem:[#allocation4 + $0x228] sm:$0xff]
        %v2911 = vld [vmem:[#allocation4 + $0x230] sm:$0xff]
        %v2912 = vld [vmem:[#allocation4 + $0x238] sm:$0xff]
        %v2913 = vld [vmem:[#allocation4 + $0x240] sm:$0xff]
        %v2914 = vld [vmem:[#allocation4 + $0x248] sm:$0xff]
        %v2915 = vld [vmem:[#allocation4 + $0x250] sm:$0xff]
        %v2916 = vld [vmem:[#allocation4 + $0x258] sm:$0xff]
        %v2917 = vld [vmem:[#allocation4 + $0x260] sm:$0xff]
        %v2918 = vld [vmem:[#allocation4 + $0x268] sm:$0xff]
        %v2919 = vld [vmem:[#allocation4 + $0x270] sm:$0xff]
        %v2920 = vld [vmem:[#allocation4 + $0x278] sm:$0xff]
        %v2921 = vld [vmem:[#allocation4 + $0x280] sm:$0xff]
        %v2922 = vld [vmem:[#allocation4 + $0x288] sm:$0xff]
        %v2923 = vld [vmem:[#allocation4 + $0x290] sm:$0xff]
        %v2924 = vld [vmem:[#allocation4 + $0x298] sm:$0xff]
        %v2925 = vld [vmem:[#allocation4 + $0x2a0] sm:$0xff]
        %v2926 = vld [vmem:[#allocation4 + $0x2a8] sm:$0xff]
        %v2927 = vld [vmem:[#allocation4 + $0x2b0] sm:$0xff]
        %v2928 = vld [vmem:[#allocation4 + $0x2b8] sm:$0xff]
        %v2929 = vld [vmem:[#allocation4 + $0x2c0] sm:$0xff]
        %v2930 = vld [vmem:[#allocation4 + $0x2c8] sm:$0xff]
        %v2931 = vld [vmem:[#allocation4 + $0x2d0] sm:$0xff]
        %v2932 = vld [vmem:[#allocation4 + $0x2d8] sm:$0xff]
        %v2933 = vld [vmem:[#allocation4 + $0x2e0] sm:$0xff]
        %v2934 = vld [vmem:[#allocation4 + $0x2e8] sm:$0xff]
        %v2935 = vld [vmem:[#allocation4 + $0x2f0] sm:$0xff]
        %v2936 = vld [vmem:[#allocation4 + $0x2f8] sm:$0xff]
        %v2937 = vld [vmem:[#allocation4 + $0x300] sm:$0xff]
        %v2938 = vld [vmem:[#allocation4 + $0x308] sm:$0xff]
        %v2939 = vld [vmem:[#allocation4 + $0x310] sm:$0xff]
        %v2940 = vld [vmem:[#allocation4 + $0x318] sm:$0xff]
        %v2941 = vld [vmem:[#allocation4 + $0x320] sm:$0xff]
        %v2942 = vld [vmem:[#allocation4 + $0x328] sm:$0xff]
        %v2943 = vld [vmem:[#allocation4 + $0x330] sm:$0xff]
        %v2944 = vld [vmem:[#allocation4 + $0x338] sm:$0xff]
        %v2945 = vld [vmem:[#allocation4 + $0x340] sm:$0xff]
        %v2946 = vld [vmem:[#allocation4 + $0x348] sm:$0xff]
        %v2947 = vld [vmem:[#allocation4 + $0x350] sm:$0xff]
        %v2948 = vld [vmem:[#allocation4 + $0x358] sm:$0xff]
        %v2949 = vld [vmem:[#allocation4 + $0x360] sm:$0xff]
        %v2950 = vld [vmem:[#allocation4 + $0x368] sm:$0xff]
        %v2951 = vld [vmem:[#allocation4 + $0x370] sm:$0xff]
        %v2952 = vld [vmem:[#allocation4 + $0x378] sm:$0xff]
        %v2953 = vld [vmem:[#allocation4 + $0x380] sm:$0xff]
        %v2954 = vld [vmem:[#allocation4 + $0x388] sm:$0xff]
        %v2955 = vld [vmem:[#allocation4 + $0x390] sm:$0xff]
        %v2956 = vld [vmem:[#allocation4 + $0x398] sm:$0xff]
        %v2957 = vld [vmem:[#allocation4 + $0x3a0] sm:$0xff]
        %v2958 = vld [vmem:[#allocation4 + $0x3a8] sm:$0xff]
        %v2959 = vld [vmem:[#allocation4 + $0x3b0] sm:$0xff]
        %v2960 = vld [vmem:[#allocation4 + $0x3b8] sm:$0xff]
        %v2961 = vld [vmem:[#allocation4 + $0x3c0] sm:$0xff]
        %v2962 = vld [vmem:[#allocation4 + $0x3c8] sm:$0xff]
        %v2963 = vld [vmem:[#allocation4 + $0x3d0] sm:$0xff]
        %v2964 = vld [vmem:[#allocation4 + $0x3d8] sm:$0xff]
        %v2965 = vld [vmem:[#allocation4 + $0x3e0] sm:$0xff]
        %v2966 = vld [vmem:[#allocation4 + $0x3e8] sm:$0xff]
        %v2967 = vld [vmem:[#allocation4 + $0x3f0] sm:$0xff]
        %v2968 = vld [vmem:[#allocation4 + $0x3f8] sm:$0xff]
        %v2969 = vld [vmem:[#allocation4 + $0x400] sm:$0xff]
        %v2970 = vld [vmem:[#allocation4 + $0x408] sm:$0xff]
        %v2971 = vld [vmem:[#allocation4 + $0x410] sm:$0xff]
        %v2972 = vld [vmem:[#allocation4 + $0x418] sm:$0xff]
        %v2973 = vld [vmem:[#allocation4 + $0x420] sm:$0xff]
        %v2974 = vld [vmem:[#allocation4 + $0x428] sm:$0xff]
        %v2975 = vld [vmem:[#allocation4 + $0x430] sm:$0xff]
        %v2976 = vld [vmem:[#allocation4 + $0x438] sm:$0xff]
        %v2977 = vld [vmem:[#allocation4 + $0x440] sm:$0xff]
        %v2978 = vld [vmem:[#allocation4 + $0x448] sm:$0xff]
        %v2979 = vld [vmem:[#allocation4 + $0x450] sm:$0xff]
        %v2980 = vld [vmem:[#allocation4 + $0x458] sm:$0xff]
        %v2981 = vld [vmem:[#allocation4 + $0x460] sm:$0xff]
        %v2982 = vld [vmem:[#allocation4 + $0x468] sm:$0xff]
        %v2983 = vld [vmem:[#allocation4 + $0x470] sm:$0xff]
        %v2984 = vld [vmem:[#allocation4 + $0x478] sm:$0xff]
        %v2985 = vld [vmem:[%s4] sm:$0x1]
        %v2987 = vlaneseq
        %v2988 = vshrl.u32 %v2987, 7
        %v2989 = vsub.s32 0, %v2988
        %v2990 = vrot.slane %v2985, %v2989
        %2992 = vmatprep.subr.mxu0 0.0
        %2993 = vmatpush1.msra.mxu0 %v2856
        %2994 = vmatprep.subr.mxu0 0.0
        %2995 = vmatpush1.msra.mxu0 %v2855
        %2996 = vmatprep.subr.mxu0 0.0
        %2997 = vmatpush1.msra.mxu0 %v2854
        %2998 = vmatprep.subr.mxu0 0.0
        %2999 = vmatpush1.msra.mxu0 %v2853
        %3000 = vmatprep.subr.mxu0 0.0
        %3001 = vmatpush1.msra.mxu0 %v2852
        %3002 = vmatprep.subr.mxu0 0.0
        %3003 = vmatpush1.msra.mxu0 %v2851
        %3004 = vmatprep.subr.mxu0 0.0
        %3005 = vmatpush1.msra.mxu0 %v2850
        %3006 = vmatprep.subr.mxu0 0.0
        %3007 = vmatpush1.msra.mxu0 %v2849
        %3008 = vmatprep.subr.mxu0 0.0
        %3009 = vmatpush1.msra.mxu0 %v2848
        %3010 = vmatprep.subr.mxu0 0.0
        %3011 = vmatpush1.msra.mxu0 %v2847
        %3012 = vmatprep.subr.mxu0 0.0
        %3013 = vmatpush1.msra.mxu0 %v2846
        %3014 = vmatprep.subr.mxu0 0.0
        %3015 = vmatpush1.msra.mxu0 %v2845
        %3016 = vmatprep.subr.mxu0 0.0
        %3017 = vmatpush1.msra.mxu0 %v2844
        %3018 = vmatprep.subr.mxu0 0.0
        %3019 = vmatpush1.msra.mxu0 %v2843
        %3020 = vmatprep.subr.mxu0 0.0
        %3021 = vmatpush1.msra.mxu0 %v2842
        %3022 = vmatprep.subr.mxu0 0.0
        %3023 = vmatpush1.msra.mxu0 %v2841
        %3024 = vmatprep.subr.mxu0 0.0
        %3025 = vmatpush2.msra.mxu0 %v2872
        %3026 = vmatprep.subr.mxu0 0.0
        %3027 = vmatpush2.msra.mxu0 %v2871
        %3028 = vmatprep.subr.mxu0 0.0
        %3029 = vmatpush2.msra.mxu0 %v2870
        %3030 = vmatprep.subr.mxu0 0.0
        %3031 = vmatpush2.msra.mxu0 %v2869
        %3032 = vmatprep.subr.mxu0 0.0
        %3033 = vmatpush2.msra.mxu0 %v2868
        %3034 = vmatprep.subr.mxu0 0.0
        %3035 = vmatpush2.msra.mxu0 %v2867
        %3036 = vmatprep.subr.mxu0 0.0
        %3037 = vmatpush2.msra.mxu0 %v2866
        %3038 = vmatprep.subr.mxu0 0.0
        %3039 = vmatpush2.msra.mxu0 %v2865
        %3040 = vmatprep.subr.mxu0 0.0
        %3041 = vmatpush2.msra.mxu0 %v2864
        %3042 = vmatprep.subr.mxu0 0.0
        %3043 = vmatpush2.msra.mxu0 %v2863
        %3044 = vmatprep.subr.mxu0 0.0
        %3045 = vmatpush2.msra.mxu0 %v2862
        %3046 = vmatprep.subr.mxu0 0.0
        %3047 = vmatpush2.msra.mxu0 %v2861
        %3048 = vmatprep.subr.mxu0 0.0
        %3049 = vmatpush2.msra.mxu0 %v2860
        %3050 = vmatprep.subr.mxu0 0.0
        %3051 = vmatpush2.msra.mxu0 %v2859
        %3052 = vmatprep.subr.mxu0 0.0
        %3053 = vmatpush2.msra.mxu0 %v2858
        %3054 = vmatprep.subr.mxu0 0.0
        %3055 = vmatpush2.msra.mxu0 %v2857
        %3056 = vmatprep.mubr.f32.mxu0 %v2584
        %3057 = vmatmul.mubr.f32.gmra.mxu0 %v2552
        %v3058 = vpop.f32.mrf.mxu0
        %v3059 = vadd.f32 %v2990, %v3058
        %v3060 = vpop.f32.mrf.mxu0
        %3061 = vmatprep.mubr.f32.mxu0 %v2585
        %3062 = vmatmul.mubr.f32.gmra.mxu0 %v2553
        %v3063 = vpop.f32.mrf.mxu0
        %v3064 = vadd.f32 %v2990, %v3063
        %v3065 = vpop.f32.mrf.mxu0
        %3066 = vmatprep.mubr.f32.mxu0 %v2586
        %3067 = vmatmul.mubr.f32.gmra.mxu0 %v2554
        %v3068 = vpop.f32.mrf.mxu0
        %v3069 = vadd.f32 %v2990, %v3068
        %v3070 = vpop.f32.mrf.mxu0
        %3071 = vmatprep.mubr.f32.mxu0 %v2587
        %3072 = vmatmul.mubr.f32.gmra.mxu0 %v2555
        %v3073 = vpop.f32.mrf.mxu0
        %v3074 = vadd.f32 %v2990, %v3073
        %v3075 = vpop.f32.mrf.mxu0
        %3076 = vmatprep.mubr.f32.mxu0 %v2588
        %3077 = vmatmul.mubr.f32.gmra.mxu0 %v2556
        %v3078 = vpop.f32.mrf.mxu0
        %v3079 = vadd.f32 %v2990, %v3078
        %v3080 = vpop.f32.mrf.mxu0
        %3081 = vmatprep.mubr.f32.mxu0 %v2589
        %3082 = vmatmul.mubr.f32.gmra.mxu0 %v2557
        %v3083 = vpop.f32.mrf.mxu0
        %v3084 = vadd.f32 %v2990, %v3083
        %v3085 = vpop.f32.mrf.mxu0
        %3086 = vmatprep.mubr.f32.mxu0 %v2590
        %3087 = vmatmul.mubr.f32.gmra.mxu0 %v2558
        %v3088 = vpop.f32.mrf.mxu0
        %v3089 = vadd.f32 %v2990, %v3088
        %v3090 = vpop.f32.mrf.mxu0
        %3091 = vmatprep.mubr.f32.mxu0 %v2591
        %3092 = vmatmul.mubr.f32.gmra.mxu0 %v2559
        %v3093 = vpop.f32.mrf.mxu0
        %v3094 = vadd.f32 %v2990, %v3093
        %v3095 = vpop.f32.mrf.mxu0
        %3096 = vmatprep.mubr.f32.mxu0 %v2592
        %3097 = vmatmul.mubr.f32.gmra.mxu0 %v2560
        %v3098 = vpop.f32.mrf.mxu0
        %v3099 = vadd.f32 %v2990, %v3098
        %v3100 = vpop.f32.mrf.mxu0
        %3101 = vmatprep.mubr.f32.mxu0 %v2593
        %3102 = vmatmul.mubr.f32.gmra.mxu0 %v2561
        %v3103 = vpop.f32.mrf.mxu0
        %v3104 = vadd.f32 %v2990, %v3103
        %v3105 = vpop.f32.mrf.mxu0
        %3106 = vmatprep.mubr.f32.mxu0 %v2594
        %3107 = vmatmul.mubr.f32.gmra.mxu0 %v2562
        %v3108 = vpop.f32.mrf.mxu0
        %v3109 = vadd.f32 %v2990, %v3108
        %v3110 = vpop.f32.mrf.mxu0
        %3111 = vmatprep.mubr.f32.mxu0 %v2595
        %3112 = vmatmul.mubr.f32.gmra.mxu0 %v2563
        %v3113 = vpop.f32.mrf.mxu0
        %v3114 = vadd.f32 %v2990, %v3113
        %v3115 = vpop.f32.mrf.mxu0
        %3116 = vmatprep.mubr.f32.mxu0 %v2596
        %3117 = vmatmul.mubr.f32.gmra.mxu0 %v2564
        %v3118 = vpop.f32.mrf.mxu0
        %v3119 = vadd.f32 %v2990, %v3118
        %v3120 = vpop.f32.mrf.mxu0
        %3121 = vmatprep.mubr.f32.mxu0 %v2597
        %3122 = vmatmul.mubr.f32.gmra.mxu0 %v2565
        %v3123 = vpop.f32.mrf.mxu0
        %v3124 = vadd.f32 %v2990, %v3123
        %v3125 = vpop.f32.mrf.mxu0
        %3126 = vmatprep.mubr.f32.mxu0 %v2598
        %3127 = vmatmul.mubr.f32.gmra.mxu0 %v2566
        %v3128 = vpop.f32.mrf.mxu0
        %v3129 = vadd.f32 %v2990, %v3128
        %v3130 = vpop.f32.mrf.mxu0
        %3131 = vmatprep.mubr.f32.mxu0 %v2599
        %3132 = vmatmul.mubr.f32.gmra.mxu0 %v2567
        %v3133 = vpop.f32.mrf.mxu0
        %v3134 = vadd.f32 %v2990, %v3133
        %v3135 = vpop.f32.mrf.mxu0
        %3136 = vmatprep.mubr.f32.mxu0 %v2600
        %3137 = vmatmul.mubr.f32.gmra.mxu0 %v2568
        %v3138 = vpop.f32.mrf.mxu0
        %v3139 = vadd.f32 %v2990, %v3138
        %v3140 = vpop.f32.mrf.mxu0
        %3141 = vmatprep.mubr.f32.mxu0 %v2601
        %3142 = vmatmul.mubr.f32.gmra.mxu0 %v2569
        %v3143 = vpop.f32.mrf.mxu0
        %v3144 = vadd.f32 %v2990, %v3143
        %v3145 = vpop.f32.mrf.mxu0
        %3146 = vmatprep.mubr.f32.mxu0 %v2602
        %3147 = vmatmul.mubr.f32.gmra.mxu0 %v2570
        %v3148 = vpop.f32.mrf.mxu0
        %v3149 = vadd.f32 %v2990, %v3148
        %v3150 = vpop.f32.mrf.mxu0
        %3151 = vmatprep.mubr.f32.mxu0 %v2603
        %3152 = vmatmul.mubr.f32.gmra.mxu0 %v2571
        %v3153 = vpop.f32.mrf.mxu0
        %v3154 = vadd.f32 %v2990, %v3153
        %v3155 = vpop.f32.mrf.mxu0
        %3156 = vmatprep.mubr.f32.mxu0 %v2604
        %3157 = vmatmul.mubr.f32.gmra.mxu0 %v2572
        %v3158 = vpop.f32.mrf.mxu0
        %v3159 = vadd.f32 %v2990, %v3158
        %v3160 = vpop.f32.mrf.mxu0
        %3161 = vmatprep.mubr.f32.mxu0 %v2605
        %3162 = vmatmul.mubr.f32.gmra.mxu0 %v2573
        %v3163 = vpop.f32.mrf.mxu0
        %v3164 = vadd.f32 %v2990, %v3163
        %v3165 = vpop.f32.mrf.mxu0
        %3166 = vmatprep.mubr.f32.mxu0 %v2606
        %3167 = vmatmul.mubr.f32.gmra.mxu0 %v2574
        %v3168 = vpop.f32.mrf.mxu0
        %v3169 = vadd.f32 %v2990, %v3168
        %v3170 = vpop.f32.mrf.mxu0
        %3171 = vmatprep.mubr.f32.mxu0 %v2607
        %3172 = vmatmul.mubr.f32.gmra.mxu0 %v2575
        %v3173 = vpop.f32.mrf.mxu0
        %v3174 = vadd.f32 %v2990, %v3173
        %v3175 = vpop.f32.mrf.mxu0
        %3176 = vmatprep.mubr.f32.mxu0 %v2608
        %3177 = vmatmul.mubr.f32.gmra.mxu0 %v2576
        %v3178 = vpop.f32.mrf.mxu0
        %v3179 = vadd.f32 %v2990, %v3178
        %v3180 = vpop.f32.mrf.mxu0
        %3181 = vmatprep.mubr.f32.mxu0 %v2609
        %3182 = vmatmul.mubr.f32.gmra.mxu0 %v2577
        %v3183 = vpop.f32.mrf.mxu0
        %v3184 = vadd.f32 %v2990, %v3183
        %v3185 = vpop.f32.mrf.mxu0
        %3186 = vmatprep.mubr.f32.mxu0 %v2610
        %3187 = vmatmul.mubr.f32.gmra.mxu0 %v2578
        %v3188 = vpop.f32.mrf.mxu0
        %v3189 = vadd.f32 %v2990, %v3188
        %v3190 = vpop.f32.mrf.mxu0
        %3191 = vmatprep.mubr.f32.mxu0 %v2611
        %3192 = vmatmul.mubr.f32.gmra.mxu0 %v2579
        %v3193 = vpop.f32.mrf.mxu0
        %v3194 = vadd.f32 %v2990, %v3193
        %v3195 = vpop.f32.mrf.mxu0
        %3196 = vmatprep.mubr.f32.mxu0 %v2612
        %3197 = vmatmul.mubr.f32.gmra.mxu0 %v2580
        %v3198 = vpop.f32.mrf.mxu0
        %v3199 = vadd.f32 %v2990, %v3198
        %v3200 = vpop.f32.mrf.mxu0
        %3201 = vmatprep.mubr.f32.mxu0 %v2613
        %3202 = vmatmul.mubr.f32.gmra.mxu0 %v2581
        %v3203 = vpop.f32.mrf.mxu0
        %v3204 = vadd.f32 %v2990, %v3203
        %v3205 = vpop.f32.mrf.mxu0
        %3206 = vmatprep.mubr.f32.mxu0 %v2614
        %3207 = vmatmul.mubr.f32.gmra.mxu0 %v2582
        %v3208 = vpop.f32.mrf.mxu0
        %v3209 = vadd.f32 %v2990, %v3208
        %v3210 = vpop.f32.mrf.mxu0
        %3211 = vmatprep.mubr.f32.mxu0 %v2615
        %3212 = vmatmul.mubr.f32.gmra.mxu0 %v2583
        %v3213 = vpop.f32.mrf.mxu0
        %v3214 = vadd.f32 %v2990, %v3213
        %v3215 = vpop.f32.mrf.mxu0
        %3216 = vdwg.mxu0
        %3217 = vmatprep.subr.mxu0 0.0
        %3218 = vmatpush1.msra.mxu0 %v2888
        %3219 = vmatprep.subr.mxu0 0.0
        %3220 = vmatpush1.msra.mxu0 %v2887
        %3221 = vmatprep.subr.mxu0 0.0
        %3222 = vmatpush1.msra.mxu0 %v2886
        %3223 = vmatprep.subr.mxu0 0.0
        %3224 = vmatpush1.msra.mxu0 %v2885
        %3225 = vmatprep.subr.mxu0 0.0
        %3226 = vmatpush1.msra.mxu0 %v2884
        %3227 = vmatprep.subr.mxu0 0.0
        %3228 = vmatpush1.msra.mxu0 %v2883
        %3229 = vmatprep.subr.mxu0 0.0
        %3230 = vmatpush1.msra.mxu0 %v2882
        %3231 = vmatprep.subr.mxu0 0.0
        %3232 = vmatpush1.msra.mxu0 %v2881
        %3233 = vmatprep.subr.mxu0 0.0
        %3234 = vmatpush1.msra.mxu0 %v2880
        %3235 = vmatprep.subr.mxu0 0.0
        %3236 = vmatpush1.msra.mxu0 %v2879
        %3237 = vmatprep.subr.mxu0 0.0
        %3238 = vmatpush1.msra.mxu0 %v2878
        %3239 = vmatprep.subr.mxu0 0.0
        %3240 = vmatpush1.msra.mxu0 %v2877
        %3241 = vmatprep.subr.mxu0 0.0
        %3242 = vmatpush1.msra.mxu0 %v2876
        %3243 = vmatprep.subr.mxu0 0.0
        %3244 = vmatpush1.msra.mxu0 %v2875
        %3245 = vmatprep.subr.mxu0 0.0
        %3246 = vmatpush1.msra.mxu0 %v2874
        %3247 = vmatprep.subr.mxu0 0.0
        %3248 = vmatpush1.msra.mxu0 %v2873
        %3249 = vmatprep.subr.mxu0 0.0
        %3250 = vmatpush2.msra.mxu0 %v2904
        %3251 = vmatprep.subr.mxu0 0.0
        %3252 = vmatpush2.msra.mxu0 %v2903
        %3253 = vmatprep.subr.mxu0 0.0
        %3254 = vmatpush2.msra.mxu0 %v2902
        %3255 = vmatprep.subr.mxu0 0.0
        %3256 = vmatpush2.msra.mxu0 %v2901
        %3257 = vmatprep.subr.mxu0 0.0
        %3258 = vmatpush2.msra.mxu0 %v2900
        %3259 = vmatprep.subr.mxu0 0.0
        %3260 = vmatpush2.msra.mxu0 %v2899
        %3261 = vmatprep.subr.mxu0 0.0
        %3262 = vmatpush2.msra.mxu0 %v2898
        %3263 = vmatprep.subr.mxu0 0.0
        %3264 = vmatpush2.msra.mxu0 %v2897
        %3265 = vmatprep.subr.mxu0 0.0
        %3266 = vmatpush2.msra.mxu0 %v2896
        %3267 = vmatprep.subr.mxu0 0.0
        %3268 = vmatpush2.msra.mxu0 %v2895
        %3269 = vmatprep.subr.mxu0 0.0
        %3270 = vmatpush2.msra.mxu0 %v2894
        %3271 = vmatprep.subr.mxu0 0.0
        %3272 = vmatpush2.msra.mxu0 %v2893
        %3273 = vmatprep.subr.mxu0 0.0
        %3274 = vmatpush2.msra.mxu0 %v2892
        %3275 = vmatprep.subr.mxu0 0.0
        %3276 = vmatpush2.msra.mxu0 %v2891
        %3277 = vmatprep.subr.mxu0 0.0
        %3278 = vmatpush2.msra.mxu0 %v2890
        %3279 = vmatprep.subr.mxu0 0.0
        %3280 = vmatpush2.msra.mxu0 %v2889
        %3281 = vmatprep.mubr.f32.mxu0 %v2648
        %3282 = vmatmul.mubr.f32.gmra.mxu0 %v2616
        %v3283 = vpop.f32.mrf.mxu0
        %v3284 = vadd.f32 %v3059, %v3283
        %v3285 = vpop.f32.mrf.mxu0
        %3286 = vmatprep.mubr.f32.mxu0 %v2649
        %3287 = vmatmul.mubr.f32.gmra.mxu0 %v2617
        %v3288 = vpop.f32.mrf.mxu0
        %v3289 = vadd.f32 %v3064, %v3288
        %v3290 = vpop.f32.mrf.mxu0
        %3291 = vmatprep.mubr.f32.mxu0 %v2650
        %3292 = vmatmul.mubr.f32.gmra.mxu0 %v2618
        %v3293 = vpop.f32.mrf.mxu0
        %v3294 = vadd.f32 %v3069, %v3293
        %v3295 = vpop.f32.mrf.mxu0
        %3296 = vmatprep.mubr.f32.mxu0 %v2651
        %3297 = vmatmul.mubr.f32.gmra.mxu0 %v2619
        %v3298 = vpop.f32.mrf.mxu0
        %v3299 = vadd.f32 %v3074, %v3298
        %v3300 = vpop.f32.mrf.mxu0
        %3301 = vmatprep.mubr.f32.mxu0 %v2652
        %3302 = vmatmul.mubr.f32.gmra.mxu0 %v2620
        %v3303 = vpop.f32.mrf.mxu0
        %v3304 = vadd.f32 %v3079, %v3303
        %v3305 = vpop.f32.mrf.mxu0
        %3306 = vmatprep.mubr.f32.mxu0 %v2653
        %3307 = vmatmul.mubr.f32.gmra.mxu0 %v2621
        %v3308 = vpop.f32.mrf.mxu0
        %v3309 = vadd.f32 %v3084, %v3308
        %v3310 = vpop.f32.mrf.mxu0
        %3311 = vmatprep.mubr.f32.mxu0 %v2654
        %3312 = vmatmul.mubr.f32.gmra.mxu0 %v2622
        %v3313 = vpop.f32.mrf.mxu0
        %v3314 = vadd.f32 %v3089, %v3313
        %v3315 = vpop.f32.mrf.mxu0
        %3316 = vmatprep.mubr.f32.mxu0 %v2655
        %3317 = vmatmul.mubr.f32.gmra.mxu0 %v2623
        %v3318 = vpop.f32.mrf.mxu0
        %v3319 = vadd.f32 %v3094, %v3318
        %v3320 = vpop.f32.mrf.mxu0
        %3321 = vmatprep.mubr.f32.mxu0 %v2656
        %3322 = vmatmul.mubr.f32.gmra.mxu0 %v2624
        %v3323 = vpop.f32.mrf.mxu0
        %v3324 = vadd.f32 %v3099, %v3323
        %v3325 = vpop.f32.mrf.mxu0
        %3326 = vmatprep.mubr.f32.mxu0 %v2657
        %3327 = vmatmul.mubr.f32.gmra.mxu0 %v2625
        %v3328 = vpop.f32.mrf.mxu0
        %v3329 = vadd.f32 %v3104, %v3328
        %v3330 = vpop.f32.mrf.mxu0
        %3331 = vmatprep.mubr.f32.mxu0 %v2658
        %3332 = vmatmul.mubr.f32.gmra.mxu0 %v2626
        %v3333 = vpop.f32.mrf.mxu0
        %v3334 = vadd.f32 %v3109, %v3333
        %v3335 = vpop.f32.mrf.mxu0
        %3336 = vmatprep.mubr.f32.mxu0 %v2659
        %3337 = vmatmul.mubr.f32.gmra.mxu0 %v2627
        %v3338 = vpop.f32.mrf.mxu0
        %v3339 = vadd.f32 %v3114, %v3338
        %v3340 = vpop.f32.mrf.mxu0
        %3341 = vmatprep.mubr.f32.mxu0 %v2660
        %3342 = vmatmul.mubr.f32.gmra.mxu0 %v2628
        %v3343 = vpop.f32.mrf.mxu0
        %v3344 = vadd.f32 %v3119, %v3343
        %v3345 = vpop.f32.mrf.mxu0
        %3346 = vmatprep.mubr.f32.mxu0 %v2661
        %3347 = vmatmul.mubr.f32.gmra.mxu0 %v2629
        %v3348 = vpop.f32.mrf.mxu0
        %v3349 = vadd.f32 %v3124, %v3348
        %v3350 = vpop.f32.mrf.mxu0
        %3351 = vmatprep.mubr.f32.mxu0 %v2662
        %3352 = vmatmul.mubr.f32.gmra.mxu0 %v2630
        %v3353 = vpop.f32.mrf.mxu0
        %v3354 = vadd.f32 %v3129, %v3353
        %v3355 = vpop.f32.mrf.mxu0
        %3356 = vmatprep.mubr.f32.mxu0 %v2663
        %3357 = vmatmul.mubr.f32.gmra.mxu0 %v2631
        %v3358 = vpop.f32.mrf.mxu0
        %v3359 = vadd.f32 %v3134, %v3358
        %v3360 = vpop.f32.mrf.mxu0
        %3361 = vmatprep.mubr.f32.mxu0 %v2664
        %3362 = vmatmul.mubr.f32.gmra.mxu0 %v2632
        %v3363 = vpop.f32.mrf.mxu0
        %v3364 = vadd.f32 %v3139, %v3363
        %v3365 = vpop.f32.mrf.mxu0
        %3366 = vmatprep.mubr.f32.mxu0 %v2665
        %3367 = vmatmul.mubr.f32.gmra.mxu0 %v2633
        %v3368 = vpop.f32.mrf.mxu0
        %v3369 = vadd.f32 %v3144, %v3368
        %v3370 = vpop.f32.mrf.mxu0
        %3371 = vmatprep.mubr.f32.mxu0 %v2666
        %3372 = vmatmul.mubr.f32.gmra.mxu0 %v2634
        %v3373 = vpop.f32.mrf.mxu0
        %v3374 = vadd.f32 %v3149, %v3373
        %v3375 = vpop.f32.mrf.mxu0
        %3376 = vmatprep.mubr.f32.mxu0 %v2667
        %3377 = vmatmul.mubr.f32.gmra.mxu0 %v2635
        %v3378 = vpop.f32.mrf.mxu0
        %v3379 = vadd.f32 %v3154, %v3378
        %v3380 = vpop.f32.mrf.mxu0
        %3381 = vmatprep.mubr.f32.mxu0 %v2668
        %3382 = vmatmul.mubr.f32.gmra.mxu0 %v2636
        %v3383 = vpop.f32.mrf.mxu0
        %v3384 = vadd.f32 %v3159, %v3383
        %v3385 = vpop.f32.mrf.mxu0
        %3386 = vmatprep.mubr.f32.mxu0 %v2669
        %3387 = vmatmul.mubr.f32.gmra.mxu0 %v2637
        %v3388 = vpop.f32.mrf.mxu0
        %v3389 = vadd.f32 %v3164, %v3388
        %v3390 = vpop.f32.mrf.mxu0
        %3391 = vmatprep.mubr.f32.mxu0 %v2670
        %3392 = vmatmul.mubr.f32.gmra.mxu0 %v2638
        %v3393 = vpop.f32.mrf.mxu0
        %v3394 = vadd.f32 %v3169, %v3393
        %v3395 = vpop.f32.mrf.mxu0
        %3396 = vmatprep.mubr.f32.mxu0 %v2671
        %3397 = vmatmul.mubr.f32.gmra.mxu0 %v2639
        %v3398 = vpop.f32.mrf.mxu0
        %v3399 = vadd.f32 %v3174, %v3398
        %v3400 = vpop.f32.mrf.mxu0
        %3401 = vmatprep.mubr.f32.mxu0 %v2672
        %3402 = vmatmul.mubr.f32.gmra.mxu0 %v2640
        %v3403 = vpop.f32.mrf.mxu0
        %v3404 = vadd.f32 %v3179, %v3403
        %v3405 = vpop.f32.mrf.mxu0
        %3406 = vmatprep.mubr.f32.mxu0 %v2673
        %3407 = vmatmul.mubr.f32.gmra.mxu0 %v2641
        %v3408 = vpop.f32.mrf.mxu0
        %v3409 = vadd.f32 %v3184, %v3408
        %v3410 = vpop.f32.mrf.mxu0
        %3411 = vmatprep.mubr.f32.mxu0 %v2674
        %3412 = vmatmul.mubr.f32.gmra.mxu0 %v2642
        %v3413 = vpop.f32.mrf.mxu0
        %v3414 = vadd.f32 %v3189, %v3413
        %v3415 = vpop.f32.mrf.mxu0
        %3416 = vmatprep.mubr.f32.mxu0 %v2675
        %3417 = vmatmul.mubr.f32.gmra.mxu0 %v2643
        %v3418 = vpop.f32.mrf.mxu0
        %v3419 = vadd.f32 %v3194, %v3418
        %v3420 = vpop.f32.mrf.mxu0
        %3421 = vmatprep.mubr.f32.mxu0 %v2676
        %3422 = vmatmul.mubr.f32.gmra.mxu0 %v2644
        %v3423 = vpop.f32.mrf.mxu0
        %v3424 = vadd.f32 %v3199, %v3423
        %v3425 = vpop.f32.mrf.mxu0
        %3426 = vmatprep.mubr.f32.mxu0 %v2677
        %3427 = vmatmul.mubr.f32.gmra.mxu0 %v2645
        %v3428 = vpop.f32.mrf.mxu0
        %v3429 = vadd.f32 %v3204, %v3428
        %v3430 = vpop.f32.mrf.mxu0
        %3431 = vmatprep.mubr.f32.mxu0 %v2678
        %3432 = vmatmul.mubr.f32.gmra.mxu0 %v2646
        %v3433 = vpop.f32.mrf.mxu0
        %v3434 = vadd.f32 %v3209, %v3433
        %v3435 = vpop.f32.mrf.mxu0
        %3436 = vmatprep.mubr.f32.mxu0 %v2679
        %3437 = vmatmul.mubr.f32.gmra.mxu0 %v2647
        %v3438 = vpop.f32.mrf.mxu0
        %v3439 = vadd.f32 %v3214, %v3438
        %v3440 = vpop.f32.mrf.mxu0
        %3441 = vdwg.mxu0
        %3442 = vmatprep.subr.mxu0 0.0
        %3443 = vmatpush1.msra.mxu0 %v2920
        %3444 = vmatprep.subr.mxu0 0.0
        %3445 = vmatpush1.msra.mxu0 %v2919
        %3446 = vmatprep.subr.mxu0 0.0
        %3447 = vmatpush1.msra.mxu0 %v2918
        %3448 = vmatprep.subr.mxu0 0.0
        %3449 = vmatpush1.msra.mxu0 %v2917
        %3450 = vmatprep.subr.mxu0 0.0
        %3451 = vmatpush1.msra.mxu0 %v2916
        %3452 = vmatprep.subr.mxu0 0.0
        %3453 = vmatpush1.msra.mxu0 %v2915
        %3454 = vmatprep.subr.mxu0 0.0
        %3455 = vmatpush1.msra.mxu0 %v2914
        %3456 = vmatprep.subr.mxu0 0.0
        %3457 = vmatpush1.msra.mxu0 %v2913
        %3458 = vmatprep.subr.mxu0 0.0
        %3459 = vmatpush1.msra.mxu0 %v2912
        %3460 = vmatprep.subr.mxu0 0.0
        %3461 = vmatpush1.msra.mxu0 %v2911
        %3462 = vmatprep.subr.mxu0 0.0
        %3463 = vmatpush1.msra.mxu0 %v2910
        %3464 = vmatprep.subr.mxu0 0.0
        %3465 = vmatpush1.msra.mxu0 %v2909
        %3466 = vmatprep.subr.mxu0 0.0
        %3467 = vmatpush1.msra.mxu0 %v2908
        %3468 = vmatprep.subr.mxu0 0.0
        %3469 = vmatpush1.msra.mxu0 %v2907
        %3470 = vmatprep.subr.mxu0 0.0
        %3471 = vmatpush1.msra.mxu0 %v2906
        %3472 = vmatprep.subr.mxu0 0.0
        %3473 = vmatpush1.msra.mxu0 %v2905
        %3474 = vmatprep.subr.mxu0 0.0
        %3475 = vmatpush2.msra.mxu0 %v2936
        %3476 = vmatprep.subr.mxu0 0.0
        %3477 = vmatpush2.msra.mxu0 %v2935
        %3478 = vmatprep.subr.mxu0 0.0
        %3479 = vmatpush2.msra.mxu0 %v2934
        %3480 = vmatprep.subr.mxu0 0.0
        %3481 = vmatpush2.msra.mxu0 %v2933
        %3482 = vmatprep.subr.mxu0 0.0
        %3483 = vmatpush2.msra.mxu0 %v2932
        %3484 = vmatprep.subr.mxu0 0.0
        %3485 = vmatpush2.msra.mxu0 %v2931
        %3486 = vmatprep.subr.mxu0 0.0
        %3487 = vmatpush2.msra.mxu0 %v2930
        %3488 = vmatprep.subr.mxu0 0.0
        %3489 = vmatpush2.msra.mxu0 %v2929
        %3490 = vmatprep.subr.mxu0 0.0
        %3491 = vmatpush2.msra.mxu0 %v2928
        %3492 = vmatprep.subr.mxu0 0.0
        %3493 = vmatpush2.msra.mxu0 %v2927
        %3494 = vmatprep.subr.mxu0 0.0
        %3495 = vmatpush2.msra.mxu0 %v2926
        %3496 = vmatprep.subr.mxu0 0.0
        %3497 = vmatpush2.msra.mxu0 %v2925
        %3498 = vmatprep.subr.mxu0 0.0
        %3499 = vmatpush2.msra.mxu0 %v2924
        %3500 = vmatprep.subr.mxu0 0.0
        %3501 = vmatpush2.msra.mxu0 %v2923
        %3502 = vmatprep.subr.mxu0 0.0
        %3503 = vmatpush2.msra.mxu0 %v2922
        %3504 = vmatprep.subr.mxu0 0.0
        %3505 = vmatpush2.msra.mxu0 %v2921
        %3506 = vmatprep.mubr.f32.mxu0 %v2712
        %3507 = vmatmul.mubr.f32.gmra.mxu0 %v2680
        %v3508 = vpop.f32.mrf.mxu0
        %v3509 = vadd.f32 %v3284, %v3508
        %v3510 = vpop.f32.mrf.mxu0
        %3511 = vmatprep.mubr.f32.mxu0 %v2713
        %3512 = vmatmul.mubr.f32.gmra.mxu0 %v2681
        %v3513 = vpop.f32.mrf.mxu0
        %v3514 = vadd.f32 %v3289, %v3513
        %v3515 = vpop.f32.mrf.mxu0
        %3516 = vmatprep.mubr.f32.mxu0 %v2714
        %3517 = vmatmul.mubr.f32.gmra.mxu0 %v2682
        %v3518 = vpop.f32.mrf.mxu0
        %v3519 = vadd.f32 %v3294, %v3518
        %v3520 = vpop.f32.mrf.mxu0
        %3521 = vmatprep.mubr.f32.mxu0 %v2715
        %3522 = vmatmul.mubr.f32.gmra.mxu0 %v2683
        %v3523 = vpop.f32.mrf.mxu0
        %v3524 = vadd.f32 %v3299, %v3523
        %v3525 = vpop.f32.mrf.mxu0
        %3526 = vmatprep.mubr.f32.mxu0 %v2716
        %3527 = vmatmul.mubr.f32.gmra.mxu0 %v2684
        %v3528 = vpop.f32.mrf.mxu0
        %v3529 = vadd.f32 %v3304, %v3528
        %v3530 = vpop.f32.mrf.mxu0
        %3531 = vmatprep.mubr.f32.mxu0 %v2717
        %3532 = vmatmul.mubr.f32.gmra.mxu0 %v2685
        %v3533 = vpop.f32.mrf.mxu0
        %v3534 = vadd.f32 %v3309, %v3533
        %v3535 = vpop.f32.mrf.mxu0
        %3536 = vmatprep.mubr.f32.mxu0 %v2718
        %3537 = vmatmul.mubr.f32.gmra.mxu0 %v2686
        %v3538 = vpop.f32.mrf.mxu0
        %v3539 = vadd.f32 %v3314, %v3538
        %v3540 = vpop.f32.mrf.mxu0
        %3541 = vmatprep.mubr.f32.mxu0 %v2719
        %3542 = vmatmul.mubr.f32.gmra.mxu0 %v2687
        %v3543 = vpop.f32.mrf.mxu0
        %v3544 = vadd.f32 %v3319, %v3543
        %v3545 = vpop.f32.mrf.mxu0
        %3546 = vmatprep.mubr.f32.mxu0 %v2720
        %3547 = vmatmul.mubr.f32.gmra.mxu0 %v2688
        %v3548 = vpop.f32.mrf.mxu0
        %v3549 = vadd.f32 %v3324, %v3548
        %v3550 = vpop.f32.mrf.mxu0
        %3551 = vmatprep.mubr.f32.mxu0 %v2721
        %3552 = vmatmul.mubr.f32.gmra.mxu0 %v2689
        %v3553 = vpop.f32.mrf.mxu0
        %v3554 = vadd.f32 %v3329, %v3553
        %v3555 = vpop.f32.mrf.mxu0
        %3556 = vmatprep.mubr.f32.mxu0 %v2722
        %3557 = vmatmul.mubr.f32.gmra.mxu0 %v2690
        %v3558 = vpop.f32.mrf.mxu0
        %v3559 = vadd.f32 %v3334, %v3558
        %v3560 = vpop.f32.mrf.mxu0
        %3561 = vmatprep.mubr.f32.mxu0 %v2723
        %3562 = vmatmul.mubr.f32.gmra.mxu0 %v2691
        %v3563 = vpop.f32.mrf.mxu0
        %v3564 = vadd.f32 %v3339, %v3563
        %v3565 = vpop.f32.mrf.mxu0
        %3566 = vmatprep.mubr.f32.mxu0 %v2724
        %3567 = vmatmul.mubr.f32.gmra.mxu0 %v2692
        %v3568 = vpop.f32.mrf.mxu0
        %v3569 = vadd.f32 %v3344, %v3568
        %v3570 = vpop.f32.mrf.mxu0
        %3571 = vmatprep.mubr.f32.mxu0 %v2725
        %3572 = vmatmul.mubr.f32.gmra.mxu0 %v2693
        %v3573 = vpop.f32.mrf.mxu0
        %v3574 = vadd.f32 %v3349, %v3573
        %v3575 = vpop.f32.mrf.mxu0
        %3576 = vmatprep.mubr.f32.mxu0 %v2726
        %3577 = vmatmul.mubr.f32.gmra.mxu0 %v2694
        %v3578 = vpop.f32.mrf.mxu0
        %v3579 = vadd.f32 %v3354, %v3578
        %v3580 = vpop.f32.mrf.mxu0
        %3581 = vmatprep.mubr.f32.mxu0 %v2727
        %3582 = vmatmul.mubr.f32.gmra.mxu0 %v2695
        %v3583 = vpop.f32.mrf.mxu0
        %v3584 = vadd.f32 %v3359, %v3583
        %v3585 = vpop.f32.mrf.mxu0
        %3586 = vmatprep.mubr.f32.mxu0 %v2728
        %3587 = vmatmul.mubr.f32.gmra.mxu0 %v2696
        %v3588 = vpop.f32.mrf.mxu0
        %v3589 = vadd.f32 %v3364, %v3588
        %v3590 = vpop.f32.mrf.mxu0
        %3591 = vmatprep.mubr.f32.mxu0 %v2729
        %3592 = vmatmul.mubr.f32.gmra.mxu0 %v2697
        %v3593 = vpop.f32.mrf.mxu0
        %v3594 = vadd.f32 %v3369, %v3593
        %v3595 = vpop.f32.mrf.mxu0
        %3596 = vmatprep.mubr.f32.mxu0 %v2730
        %3597 = vmatmul.mubr.f32.gmra.mxu0 %v2698
        %v3598 = vpop.f32.mrf.mxu0
        %v3599 = vadd.f32 %v3374, %v3598
        %v3600 = vpop.f32.mrf.mxu0
        %3601 = vmatprep.mubr.f32.mxu0 %v2731
        %3602 = vmatmul.mubr.f32.gmra.mxu0 %v2699
        %v3603 = vpop.f32.mrf.mxu0
        %v3604 = vadd.f32 %v3379, %v3603
        %v3605 = vpop.f32.mrf.mxu0
        %3606 = vmatprep.mubr.f32.mxu0 %v2732
        %3607 = vmatmul.mubr.f32.gmra.mxu0 %v2700
        %v3608 = vpop.f32.mrf.mxu0
        %v3609 = vadd.f32 %v3384, %v3608
        %v3610 = vpop.f32.mrf.mxu0
        %3611 = vmatprep.mubr.f32.mxu0 %v2733
        %3612 = vmatmul.mubr.f32.gmra.mxu0 %v2701
        %v3613 = vpop.f32.mrf.mxu0
        %v3614 = vadd.f32 %v3389, %v3613
        %v3615 = vpop.f32.mrf.mxu0
        %3616 = vmatprep.mubr.f32.mxu0 %v2734
        %3617 = vmatmul.mubr.f32.gmra.mxu0 %v2702
        %v3618 = vpop.f32.mrf.mxu0
        %v3619 = vadd.f32 %v3394, %v3618
        %v3620 = vpop.f32.mrf.mxu0
        %3621 = vmatprep.mubr.f32.mxu0 %v2735
        %3622 = vmatmul.mubr.f32.gmra.mxu0 %v2703
        %v3623 = vpop.f32.mrf.mxu0
        %v3624 = vadd.f32 %v3399, %v3623
        %v3625 = vpop.f32.mrf.mxu0
        %3626 = vmatprep.mubr.f32.mxu0 %v2736
        %3627 = vmatmul.mubr.f32.gmra.mxu0 %v2704
        %v3628 = vpop.f32.mrf.mxu0
        %v3629 = vadd.f32 %v3404, %v3628
        %v3630 = vpop.f32.mrf.mxu0
        %3631 = vmatprep.mubr.f32.mxu0 %v2737
        %3632 = vmatmul.mubr.f32.gmra.mxu0 %v2705
        %v3633 = vpop.f32.mrf.mxu0
        %v3634 = vadd.f32 %v3409, %v3633
        %v3635 = vpop.f32.mrf.mxu0
        %3636 = vmatprep.mubr.f32.mxu0 %v2738
        %3637 = vmatmul.mubr.f32.gmra.mxu0 %v2706
        %v3638 = vpop.f32.mrf.mxu0
        %v3639 = vadd.f32 %v3414, %v3638
        %v3640 = vpop.f32.mrf.mxu0
        %3641 = vmatprep.mubr.f32.mxu0 %v2739
        %3642 = vmatmul.mubr.f32.gmra.mxu0 %v2707
        %v3643 = vpop.f32.mrf.mxu0
        %v3644 = vadd.f32 %v3419, %v3643
        %v3645 = vpop.f32.mrf.mxu0
        %3646 = vmatprep.mubr.f32.mxu0 %v2740
        %3647 = vmatmul.mubr.f32.gmra.mxu0 %v2708
        %v3648 = vpop.f32.mrf.mxu0
        %v3649 = vadd.f32 %v3424, %v3648
        %v3650 = vpop.f32.mrf.mxu0
        %3651 = vmatprep.mubr.f32.mxu0 %v2741
        %3652 = vmatmul.mubr.f32.gmra.mxu0 %v2709
        %v3653 = vpop.f32.mrf.mxu0
        %v3654 = vadd.f32 %v3429, %v3653
        %v3655 = vpop.f32.mrf.mxu0
        %3656 = vmatprep.mubr.f32.mxu0 %v2742
        %3657 = vmatmul.mubr.f32.gmra.mxu0 %v2710
        %v3658 = vpop.f32.mrf.mxu0
        %v3659 = vadd.f32 %v3434, %v3658
        %v3660 = vpop.f32.mrf.mxu0
        %3661 = vmatprep.mubr.f32.mxu0 %v2743
        %3662 = vmatmul.mubr.f32.gmra.mxu0 %v2711
        %v3663 = vpop.f32.mrf.mxu0
        %v3664 = vadd.f32 %v3439, %v3663
        %v3665 = vpop.f32.mrf.mxu0
        %3666 = vdwg.mxu0
        %3667 = vmatprep.subr.mxu0 0.0
        %3668 = vmatpush1.msra.mxu0 %v2952
        %3669 = vmatprep.subr.mxu0 0.0
        %3670 = vmatpush1.msra.mxu0 %v2951
        %3671 = vmatprep.subr.mxu0 0.0
        %3672 = vmatpush1.msra.mxu0 %v2950
        %3673 = vmatprep.subr.mxu0 0.0
        %3674 = vmatpush1.msra.mxu0 %v2949
        %3675 = vmatprep.subr.mxu0 0.0
        %3676 = vmatpush1.msra.mxu0 %v2948
        %3677 = vmatprep.subr.mxu0 0.0
        %3678 = vmatpush1.msra.mxu0 %v2947
        %3679 = vmatprep.subr.mxu0 0.0
        %3680 = vmatpush1.msra.mxu0 %v2946
        %3681 = vmatprep.subr.mxu0 0.0
        %3682 = vmatpush1.msra.mxu0 %v2945
        %3683 = vmatprep.subr.mxu0 0.0
        %3684 = vmatpush1.msra.mxu0 %v2944
        %3685 = vmatprep.subr.mxu0 0.0
        %3686 = vmatpush1.msra.mxu0 %v2943
        %3687 = vmatprep.subr.mxu0 0.0
        %3688 = vmatpush1.msra.mxu0 %v2942
        %3689 = vmatprep.subr.mxu0 0.0
        %3690 = vmatpush1.msra.mxu0 %v2941
        %3691 = vmatprep.subr.mxu0 0.0
        %3692 = vmatpush1.msra.mxu0 %v2940
        %3693 = vmatprep.subr.mxu0 0.0
        %3694 = vmatpush1.msra.mxu0 %v2939
        %3695 = vmatprep.subr.mxu0 0.0
        %3696 = vmatpush1.msra.mxu0 %v2938
        %3697 = vmatprep.subr.mxu0 0.0
        %3698 = vmatpush1.msra.mxu0 %v2937
        %3699 = vmatprep.subr.mxu0 0.0
        %3700 = vmatpush2.msra.mxu0 %v2968
        %3701 = vmatprep.subr.mxu0 0.0
        %3702 = vmatpush2.msra.mxu0 %v2967
        %3703 = vmatprep.subr.mxu0 0.0
        %3704 = vmatpush2.msra.mxu0 %v2966
        %3705 = vmatprep.subr.mxu0 0.0
        %3706 = vmatpush2.msra.mxu0 %v2965
        %3707 = vmatprep.subr.mxu0 0.0
        %3708 = vmatpush2.msra.mxu0 %v2964
        %3709 = vmatprep.subr.mxu0 0.0
        %3710 = vmatpush2.msra.mxu0 %v2963
        %3711 = vmatprep.subr.mxu0 0.0
        %3712 = vmatpush2.msra.mxu0 %v2962
        %3713 = vmatprep.subr.mxu0 0.0
        %3714 = vmatpush2.msra.mxu0 %v2961
        %3715 = vmatprep.subr.mxu0 0.0
        %3716 = vmatpush2.msra.mxu0 %v2960
        %3717 = vmatprep.subr.mxu0 0.0
        %3718 = vmatpush2.msra.mxu0 %v2959
        %3719 = vmatprep.subr.mxu0 0.0
        %3720 = vmatpush2.msra.mxu0 %v2958
        %3721 = vmatprep.subr.mxu0 0.0
        %3722 = vmatpush2.msra.mxu0 %v2957
        %3723 = vmatprep.subr.mxu0 0.0
        %3724 = vmatpush2.msra.mxu0 %v2956
        %3725 = vmatprep.subr.mxu0 0.0
        %3726 = vmatpush2.msra.mxu0 %v2955
        %3727 = vmatprep.subr.mxu0 0.0
        %3728 = vmatpush2.msra.mxu0 %v2954
        %3729 = vmatprep.subr.mxu0 0.0
        %3730 = vmatpush2.msra.mxu0 %v2953
        %3731 = vmatprep.mubr.f32.mxu0 %v2777
        %3732 = vmatmul.mubr.f32.gmra.mxu0 %v2745
        %v3733 = vpop.f32.mrf.mxu0
        %v3734 = vadd.f32 %v3509, %v3733
        %v3735 = vpop.f32.mrf.mxu0
        %3736 = vmatprep.mubr.f32.mxu0 %v2778
        %3737 = vmatmul.mubr.f32.gmra.mxu0 %v2746
        %v3738 = vpop.f32.mrf.mxu0
        %v3739 = vadd.f32 %v3514, %v3738
        %v3740 = vpop.f32.mrf.mxu0
        %3741 = vmatprep.mubr.f32.mxu0 %v2779
        %3742 = vmatmul.mubr.f32.gmra.mxu0 %v2747
        %v3743 = vpop.f32.mrf.mxu0
        %v3744 = vadd.f32 %v3519, %v3743
        %v3745 = vpop.f32.mrf.mxu0
        %3746 = vmatprep.mubr.f32.mxu0 %v2780
        %3747 = vmatmul.mubr.f32.gmra.mxu0 %v2748
        %v3748 = vpop.f32.mrf.mxu0
        %v3749 = vadd.f32 %v3524, %v3748
        %v3750 = vpop.f32.mrf.mxu0
        %3751 = vmatprep.mubr.f32.mxu0 %v2781
        %3752 = vmatmul.mubr.f32.gmra.mxu0 %v2749
        %v3753 = vpop.f32.mrf.mxu0
        %v3754 = vadd.f32 %v3529, %v3753
        %v3755 = vpop.f32.mrf.mxu0
        %3756 = vmatprep.mubr.f32.mxu0 %v2782
        %3757 = vmatmul.mubr.f32.gmra.mxu0 %v2750
        %v3758 = vpop.f32.mrf.mxu0
        %v3759 = vadd.f32 %v3534, %v3758
        %v3760 = vpop.f32.mrf.mxu0
        %3761 = vmatprep.mubr.f32.mxu0 %v2783
        %3762 = vmatmul.mubr.f32.gmra.mxu0 %v2751
        %v3763 = vpop.f32.mrf.mxu0
        %v3764 = vadd.f32 %v3539, %v3763
        %v3765 = vpop.f32.mrf.mxu0
        %3766 = vmatprep.mubr.f32.mxu0 %v2784
        %3767 = vmatmul.mubr.f32.gmra.mxu0 %v2752
        %v3768 = vpop.f32.mrf.mxu0
        %v3769 = vadd.f32 %v3544, %v3768
        %v3770 = vpop.f32.mrf.mxu0
        %3771 = vmatprep.mubr.f32.mxu0 %v2785
        %3772 = vmatmul.mubr.f32.gmra.mxu0 %v2753
        %v3773 = vpop.f32.mrf.mxu0
        %v3774 = vadd.f32 %v3549, %v3773
        %v3775 = vpop.f32.mrf.mxu0
        %3776 = vmatprep.mubr.f32.mxu0 %v2786
        %3777 = vmatmul.mubr.f32.gmra.mxu0 %v2754
        %v3778 = vpop.f32.mrf.mxu0
        %v3779 = vadd.f32 %v3554, %v3778
        %v3780 = vpop.f32.mrf.mxu0
        %3781 = vmatprep.mubr.f32.mxu0 %v2787
        %3782 = vmatmul.mubr.f32.gmra.mxu0 %v2755
        %v3783 = vpop.f32.mrf.mxu0
        %v3784 = vadd.f32 %v3559, %v3783
        %v3785 = vpop.f32.mrf.mxu0
        %3786 = vmatprep.mubr.f32.mxu0 %v2788
        %3787 = vmatmul.mubr.f32.gmra.mxu0 %v2756
        %v3788 = vpop.f32.mrf.mxu0
        %v3789 = vadd.f32 %v3564, %v3788
        %v3790 = vpop.f32.mrf.mxu0
        %3791 = vmatprep.mubr.f32.mxu0 %v2789
        %3792 = vmatmul.mubr.f32.gmra.mxu0 %v2757
        %v3793 = vpop.f32.mrf.mxu0
        %v3794 = vadd.f32 %v3569, %v3793
        %v3795 = vpop.f32.mrf.mxu0
        %3796 = vmatprep.mubr.f32.mxu0 %v2790
        %3797 = vmatmul.mubr.f32.gmra.mxu0 %v2758
        %v3798 = vpop.f32.mrf.mxu0
        %v3799 = vadd.f32 %v3574, %v3798
        %v3800 = vpop.f32.mrf.mxu0
        %3801 = vmatprep.mubr.f32.mxu0 %v2791
        %3802 = vmatmul.mubr.f32.gmra.mxu0 %v2759
        %v3803 = vpop.f32.mrf.mxu0
        %v3804 = vadd.f32 %v3579, %v3803
        %v3805 = vpop.f32.mrf.mxu0
        %3806 = vmatprep.mubr.f32.mxu0 %v2792
        %3807 = vmatmul.mubr.f32.gmra.mxu0 %v2760
        %v3808 = vpop.f32.mrf.mxu0
        %v3809 = vadd.f32 %v3584, %v3808
        %v3810 = vpop.f32.mrf.mxu0
        %3811 = vmatprep.mubr.f32.mxu0 %v2793
        %3812 = vmatmul.mubr.f32.gmra.mxu0 %v2761
        %v3813 = vpop.f32.mrf.mxu0
        %v3814 = vadd.f32 %v3589, %v3813
        %v3815 = vpop.f32.mrf.mxu0
        %3816 = vmatprep.mubr.f32.mxu0 %v2794
        %3817 = vmatmul.mubr.f32.gmra.mxu0 %v2762
        %v3818 = vpop.f32.mrf.mxu0
        %v3819 = vadd.f32 %v3594, %v3818
        %v3820 = vpop.f32.mrf.mxu0
        %3821 = vmatprep.mubr.f32.mxu0 %v2795
        %3822 = vmatmul.mubr.f32.gmra.mxu0 %v2763
        %v3823 = vpop.f32.mrf.mxu0
        %v3824 = vadd.f32 %v3599, %v3823
        %v3825 = vpop.f32.mrf.mxu0
        %3826 = vmatprep.mubr.f32.mxu0 %v2796
        %3827 = vmatmul.mubr.f32.gmra.mxu0 %v2764
        %v3828 = vpop.f32.mrf.mxu0
        %v3829 = vadd.f32 %v3604, %v3828
        %v3830 = vpop.f32.mrf.mxu0
        %3831 = vmatprep.mubr.f32.mxu0 %v2797
        %3832 = vmatmul.mubr.f32.gmra.mxu0 %v2765
        %v3833 = vpop.f32.mrf.mxu0
        %v3834 = vadd.f32 %v3609, %v3833
        %v3835 = vpop.f32.mrf.mxu0
        %3836 = vmatprep.mubr.f32.mxu0 %v2798
        %3837 = vmatmul.mubr.f32.gmra.mxu0 %v2766
        %v3838 = vpop.f32.mrf.mxu0
        %v3839 = vadd.f32 %v3614, %v3838
        %v3840 = vpop.f32.mrf.mxu0
        %3841 = vmatprep.mubr.f32.mxu0 %v2799
        %3842 = vmatmul.mubr.f32.gmra.mxu0 %v2767
        %v3843 = vpop.f32.mrf.mxu0
        %v3844 = vadd.f32 %v3619, %v3843
        %v3845 = vpop.f32.mrf.mxu0
        %3846 = vmatprep.mubr.f32.mxu0 %v2800
        %3847 = vmatmul.mubr.f32.gmra.mxu0 %v2768
        %v3848 = vpop.f32.mrf.mxu0
        %v3849 = vadd.f32 %v3624, %v3848
        %v3850 = vpop.f32.mrf.mxu0
        %3851 = vmatprep.mubr.f32.mxu0 %v2801
        %3852 = vmatmul.mubr.f32.gmra.mxu0 %v2769
        %v3853 = vpop.f32.mrf.mxu0
        %v3854 = vadd.f32 %v3629, %v3853
        %v3855 = vpop.f32.mrf.mxu0
        %3856 = vmatprep.mubr.f32.mxu0 %v2802
        %3857 = vmatmul.mubr.f32.gmra.mxu0 %v2770
        %v3858 = vpop.f32.mrf.mxu0
        %v3859 = vadd.f32 %v3634, %v3858
        %v3860 = vpop.f32.mrf.mxu0
        %3861 = vmatprep.mubr.f32.mxu0 %v2803
        %3862 = vmatmul.mubr.f32.gmra.mxu0 %v2771
        %v3863 = vpop.f32.mrf.mxu0
        %v3864 = vadd.f32 %v3639, %v3863
        %v3865 = vpop.f32.mrf.mxu0
        %3866 = vmatprep.mubr.f32.mxu0 %v2804
        %3867 = vmatmul.mubr.f32.gmra.mxu0 %v2772
        %v3868 = vpop.f32.mrf.mxu0
        %v3869 = vadd.f32 %v3644, %v3868
        %v3870 = vpop.f32.mrf.mxu0
        %3871 = vmatprep.mubr.f32.mxu0 %v2805
        %3872 = vmatmul.mubr.f32.gmra.mxu0 %v2773
        %v3873 = vpop.f32.mrf.mxu0
        %v3874 = vadd.f32 %v3649, %v3873
        %v3875 = vpop.f32.mrf.mxu0
        %3876 = vmatprep.mubr.f32.mxu0 %v2806
        %3877 = vmatmul.mubr.f32.gmra.mxu0 %v2774
        %v3878 = vpop.f32.mrf.mxu0
        %v3879 = vadd.f32 %v3654, %v3878
        %v3880 = vpop.f32.mrf.mxu0
        %3881 = vmatprep.mubr.f32.mxu0 %v2807
        %3882 = vmatmul.mubr.f32.gmra.mxu0 %v2775
        %v3883 = vpop.f32.mrf.mxu0
        %v3884 = vadd.f32 %v3659, %v3883
        %v3885 = vpop.f32.mrf.mxu0
        %3886 = vmatprep.mubr.f32.mxu0 %v2808
        %3887 = vmatmul.mubr.f32.gmra.mxu0 %v2776
        %v3888 = vpop.f32.mrf.mxu0
        %v3889 = vadd.f32 %v3664, %v3888
        %v3890 = vpop.f32.mrf.mxu0
        %3891 = vdwg.mxu0
        %3892 = vmatprep.subr.mxu0 0.0
        %3893 = vmatpush1.msra.mxu0 %v2984
        %3894 = vmatprep.subr.mxu0 0.0
        %3895 = vmatpush1.msra.mxu0 %v2983
        %3896 = vmatprep.subr.mxu0 0.0
        %3897 = vmatpush1.msra.mxu0 %v2982
        %3898 = vmatprep.subr.mxu0 0.0
        %3899 = vmatpush1.msra.mxu0 %v2981
        %3900 = vmatprep.subr.mxu0 0.0
        %3901 = vmatpush1.msra.mxu0 %v2980
        %3902 = vmatprep.subr.mxu0 0.0
        %3903 = vmatpush1.msra.mxu0 %v2979
        %3904 = vmatprep.subr.mxu0 0.0
        %3905 = vmatpush1.msra.mxu0 %v2978
        %3906 = vmatprep.subr.mxu0 0.0
        %3907 = vmatpush1.msra.mxu0 %v2977
        %3908 = vmatprep.subr.mxu0 0.0
        %3909 = vmatpush1.msra.mxu0 %v2976
        %3910 = vmatprep.subr.mxu0 0.0
        %3911 = vmatpush1.msra.mxu0 %v2975
        %3912 = vmatprep.subr.mxu0 0.0
        %3913 = vmatpush1.msra.mxu0 %v2974
        %3914 = vmatprep.subr.mxu0 0.0
        %3915 = vmatpush1.msra.mxu0 %v2973
        %3916 = vmatprep.subr.mxu0 0.0
        %3917 = vmatpush1.msra.mxu0 %v2972
        %3918 = vmatprep.subr.mxu0 0.0
        %3919 = vmatpush1.msra.mxu0 %v2971
        %3920 = vmatprep.subr.mxu0 0.0
        %3921 = vmatpush1.msra.mxu0 %v2970
        %3922 = vmatprep.subr.mxu0 0.0
        %3923 = vmatpush1.msra.mxu0 %v2969
        %3924 = vmatprep.subr.mxu0 0.0
        %3925 = vmatpush2.msra.mxu0 0.0
        %3926 = vmatprep.subr.mxu0 0.0
        %3927 = vmatpush2.msra.mxu0 0.0
        %3928 = vmatprep.subr.mxu0 0.0
        %3929 = vmatpush2.msra.mxu0 0.0
        %3930 = vmatprep.subr.mxu0 0.0
        %3931 = vmatpush2.msra.mxu0 0.0
        %3932 = vmatprep.subr.mxu0 0.0
        %3933 = vmatpush2.msra.mxu0 0.0
        %3934 = vmatprep.subr.mxu0 0.0
        %3935 = vmatpush2.msra.mxu0 0.0
        %3936 = vmatprep.subr.mxu0 0.0
        %3937 = vmatpush2.msra.mxu0 0.0
        %3938 = vmatprep.subr.mxu0 0.0
        %3939 = vmatpush2.msra.mxu0 0.0
        %3940 = vmatprep.subr.mxu0 0.0
        %3941 = vmatpush2.msra.mxu0 0.0
        %3942 = vmatprep.subr.mxu0 0.0
        %3943 = vmatpush2.msra.mxu0 0.0
        %3944 = vmatprep.subr.mxu0 0.0
        %3945 = vmatpush2.msra.mxu0 0.0
        %3946 = vmatprep.subr.mxu0 0.0
        %3947 = vmatpush2.msra.mxu0 0.0
        %3948 = vmatprep.subr.mxu0 0.0
        %3949 = vmatpush2.msra.mxu0 0.0
        %3950 = vmatprep.subr.mxu0 0.0
        %3951 = vmatpush2.msra.mxu0 0.0
        %3952 = vmatprep.subr.mxu0 0.0
        %3953 = vmatpush2.msra.mxu0 0.0
        %3954 = vmatprep.subr.mxu0 0.0
        %3955 = vmatpush2.msra.mxu0 0.0
        %3956 = vmatprep.mubr.f32.mxu0 0.0
        %3957 = vmatmul.mubr.f32.gmra.mxu0 %v2809
        %v3958 = vpop.f32.mrf.mxu0
        %v3959 = vadd.f32 %v3734, %v3958
        %v3960 = vpop.f32.mrf.mxu0
        %3961 = vmatprep.mubr.f32.mxu0 0.0
        %3962 = vmatmul.mubr.f32.gmra.mxu0 %v2810
        %v3963 = vpop.f32.mrf.mxu0
        %v3964 = vadd.f32 %v3739, %v3963
        %v3965 = vpop.f32.mrf.mxu0
        %3966 = vmatprep.mubr.f32.mxu0 0.0
        %3967 = vmatmul.mubr.f32.gmra.mxu0 %v2811
        %v3968 = vpop.f32.mrf.mxu0
        %v3969 = vadd.f32 %v3744, %v3968
        %v3970 = vpop.f32.mrf.mxu0
        %3971 = vmatprep.mubr.f32.mxu0 0.0
        %3972 = vmatmul.mubr.f32.gmra.mxu0 %v2812
        %v3973 = vpop.f32.mrf.mxu0
        %v3974 = vadd.f32 %v3749, %v3973
        %v3975 = vpop.f32.mrf.mxu0
        %3976 = vmatprep.mubr.f32.mxu0 0.0
        %3977 = vmatmul.mubr.f32.gmra.mxu0 %v2813
        %v3978 = vpop.f32.mrf.mxu0
        %v3979 = vadd.f32 %v3754, %v3978
        %v3980 = vpop.f32.mrf.mxu0
        %3981 = vmatprep.mubr.f32.mxu0 0.0
        %3982 = vmatmul.mubr.f32.gmra.mxu0 %v2814
        %v3983 = vpop.f32.mrf.mxu0
        %v3984 = vadd.f32 %v3759, %v3983
        %v3985 = vpop.f32.mrf.mxu0
        %3986 = vmatprep.mubr.f32.mxu0 0.0
        %3987 = vmatmul.mubr.f32.gmra.mxu0 %v2815
        %v3988 = vpop.f32.mrf.mxu0
        %v3989 = vadd.f32 %v3764, %v3988
        %v3990 = vpop.f32.mrf.mxu0
        %3991 = vmatprep.mubr.f32.mxu0 0.0
        %3992 = vmatmul.mubr.f32.gmra.mxu0 %v2816
        %v3993 = vpop.f32.mrf.mxu0
        %v3994 = vadd.f32 %v3769, %v3993
        %v3995 = vpop.f32.mrf.mxu0
        %3996 = vmatprep.mubr.f32.mxu0 0.0
        %3997 = vmatmul.mubr.f32.gmra.mxu0 %v2817
        %v3998 = vpop.f32.mrf.mxu0
        %v3999 = vadd.f32 %v3774, %v3998
        %v4000 = vpop.f32.mrf.mxu0
        %4001 = vmatprep.mubr.f32.mxu0 0.0
        %4002 = vmatmul.mubr.f32.gmra.mxu0 %v2818
        %v4003 = vpop.f32.mrf.mxu0
        %v4004 = vadd.f32 %v3779, %v4003
        %v4005 = vpop.f32.mrf.mxu0
        %4006 = vmatprep.mubr.f32.mxu0 0.0
        %4007 = vmatmul.mubr.f32.gmra.mxu0 %v2819
        %v4008 = vpop.f32.mrf.mxu0
        %v4009 = vadd.f32 %v3784, %v4008
        %v4010 = vpop.f32.mrf.mxu0
        %4011 = vmatprep.mubr.f32.mxu0 0.0
        %4012 = vmatmul.mubr.f32.gmra.mxu0 %v2820
        %v4013 = vpop.f32.mrf.mxu0
        %v4014 = vadd.f32 %v3789, %v4013
        %v4015 = vpop.f32.mrf.mxu0
        %4016 = vmatprep.mubr.f32.mxu0 0.0
        %4017 = vmatmul.mubr.f32.gmra.mxu0 %v2821
        %v4018 = vpop.f32.mrf.mxu0
        %v4019 = vadd.f32 %v3794, %v4018
        %v4020 = vpop.f32.mrf.mxu0
        %4021 = vmatprep.mubr.f32.mxu0 0.0
        %4022 = vmatmul.mubr.f32.gmra.mxu0 %v2822
        %v4023 = vpop.f32.mrf.mxu0
        %v4024 = vadd.f32 %v3799, %v4023
        %v4025 = vpop.f32.mrf.mxu0
        %4026 = vmatprep.mubr.f32.mxu0 0.0
        %4027 = vmatmul.mubr.f32.gmra.mxu0 %v2823
        %v4028 = vpop.f32.mrf.mxu0
        %v4029 = vadd.f32 %v3804, %v4028
        %v4030 = vpop.f32.mrf.mxu0
        %4031 = vmatprep.mubr.f32.mxu0 0.0
        %4032 = vmatmul.mubr.f32.gmra.mxu0 %v2824
        %v4033 = vpop.f32.mrf.mxu0
        %v4034 = vadd.f32 %v3809, %v4033
        %v4035 = vpop.f32.mrf.mxu0
        %4036 = vmatprep.mubr.f32.mxu0 0.0
        %4037 = vmatmul.mubr.f32.gmra.mxu0 %v2825
        %v4038 = vpop.f32.mrf.mxu0
        %v4039 = vadd.f32 %v3814, %v4038
        %v4040 = vpop.f32.mrf.mxu0
        %4041 = vmatprep.mubr.f32.mxu0 0.0
        %4042 = vmatmul.mubr.f32.gmra.mxu0 %v2826
        %v4043 = vpop.f32.mrf.mxu0
        %v4044 = vadd.f32 %v3819, %v4043
        %v4045 = vpop.f32.mrf.mxu0
        %4046 = vmatprep.mubr.f32.mxu0 0.0
        %4047 = vmatmul.mubr.f32.gmra.mxu0 %v2827
        %v4048 = vpop.f32.mrf.mxu0
        %v4049 = vadd.f32 %v3824, %v4048
        %v4050 = vpop.f32.mrf.mxu0
        %4051 = vmatprep.mubr.f32.mxu0 0.0
        %4052 = vmatmul.mubr.f32.gmra.mxu0 %v2828
        %v4053 = vpop.f32.mrf.mxu0
        %v4054 = vadd.f32 %v3829, %v4053
        %v4055 = vpop.f32.mrf.mxu0
        %4056 = vmatprep.mubr.f32.mxu0 0.0
        %4057 = vmatmul.mubr.f32.gmra.mxu0 %v2829
        %v4058 = vpop.f32.mrf.mxu0
        %v4059 = vadd.f32 %v3834, %v4058
        %v4060 = vpop.f32.mrf.mxu0
        %4061 = vmatprep.mubr.f32.mxu0 0.0
        %4062 = vmatmul.mubr.f32.gmra.mxu0 %v2830
        %v4063 = vpop.f32.mrf.mxu0
        %v4064 = vadd.f32 %v3839, %v4063
        %v4065 = vpop.f32.mrf.mxu0
        %4066 = vmatprep.mubr.f32.mxu0 0.0
        %4067 = vmatmul.mubr.f32.gmra.mxu0 %v2831
        %v4068 = vpop.f32.mrf.mxu0
        %v4069 = vadd.f32 %v3844, %v4068
        %v4070 = vpop.f32.mrf.mxu0
        %4071 = vmatprep.mubr.f32.mxu0 0.0
        %4072 = vmatmul.mubr.f32.gmra.mxu0 %v2832
        %v4073 = vpop.f32.mrf.mxu0
        %v4074 = vadd.f32 %v3849, %v4073
        %v4075 = vpop.f32.mrf.mxu0
        %4076 = vmatprep.mubr.f32.mxu0 0.0
        %4077 = vmatmul.mubr.f32.gmra.mxu0 %v2833
        %v4078 = vpop.f32.mrf.mxu0
        %v4079 = vadd.f32 %v3854, %v4078
        %v4080 = vpop.f32.mrf.mxu0
        %4081 = vmatprep.mubr.f32.mxu0 0.0
        %4082 = vmatmul.mubr.f32.gmra.mxu0 %v2834
        %v4083 = vpop.f32.mrf.mxu0
        %v4084 = vadd.f32 %v3859, %v4083
        %v4085 = vpop.f32.mrf.mxu0
        %4086 = vmatprep.mubr.f32.mxu0 0.0
        %4087 = vmatmul.mubr.f32.gmra.mxu0 %v2835
        %v4088 = vpop.f32.mrf.mxu0
        %v4089 = vadd.f32 %v3864, %v4088
        %v4090 = vpop.f32.mrf.mxu0
        %4091 = vmatprep.mubr.f32.mxu0 0.0
        %4092 = vmatmul.mubr.f32.gmra.mxu0 %v2836
        %v4093 = vpop.f32.mrf.mxu0
        %v4094 = vadd.f32 %v3869, %v4093
        %v4095 = vpop.f32.mrf.mxu0
        %4096 = vmatprep.mubr.f32.mxu0 0.0
        %4097 = vmatmul.mubr.f32.gmra.mxu0 %v2837
        %v4098 = vpop.f32.mrf.mxu0
        %v4099 = vadd.f32 %v3874, %v4098
        %v4100 = vpop.f32.mrf.mxu0
        %4101 = vmatprep.mubr.f32.mxu0 0.0
        %4102 = vmatmul.mubr.f32.gmra.mxu0 %v2838
        %v4103 = vpop.f32.mrf.mxu0
        %v4104 = vadd.f32 %v3879, %v4103
        %v4105 = vpop.f32.mrf.mxu0
        %4106 = vmatprep.mubr.f32.mxu0 0.0
        %4107 = vmatmul.mubr.f32.gmra.mxu0 %v2839
        %v4108 = vpop.f32.mrf.mxu0
        %v4109 = vadd.f32 %v3884, %v4108
        %v4110 = vpop.f32.mrf.mxu0
        %4111 = vmatprep.mubr.f32.mxu0 0.0
        %4112 = vmatmul.mubr.f32.gmra.mxu0 %v2840
        %v4113 = vpop.f32.mrf.mxu0
        %v4114 = vadd.f32 %v3889, %v4113
        %v4115 = vpop.f32.mrf.mxu0
        %4116 = vdwg.mxu0
        %vm4117 = vcmp.gt.f32.partialorder %v3959, 0.0
        %vm4118 = vcmp.gt.f32.partialorder %v3964, 0.0
        %vm4119 = vcmp.gt.f32.partialorder %v3969, 0.0
        %vm4120 = vcmp.gt.f32.partialorder %v3974, 0.0
        %vm4121 = vcmp.gt.f32.partialorder %v3979, 0.0
        %vm4122 = vcmp.gt.f32.partialorder %v3984, 0.0
        %vm4123 = vcmp.gt.f32.partialorder %v3989, 0.0
        %vm4124 = vcmp.gt.f32.partialorder %v3994, 0.0
        %vm4125 = vcmp.gt.f32.partialorder %v3999, 0.0
        %vm4126 = vcmp.gt.f32.partialorder %v4004, 0.0
        %vm4127 = vcmp.gt.f32.partialorder %v4009, 0.0
        %vm4128 = vcmp.gt.f32.partialorder %v4014, 0.0
        %vm4129 = vcmp.gt.f32.partialorder %v4019, 0.0
        %vm4130 = vcmp.gt.f32.partialorder %v4024, 0.0
        %vm4131 = vcmp.gt.f32.partialorder %v4029, 0.0
        %vm4132 = vcmp.gt.f32.partialorder %v4034, 0.0
        %vm4133 = vcmp.gt.f32.partialorder %v4039, 0.0
        %vm4134 = vcmp.gt.f32.partialorder %v4044, 0.0
        %vm4135 = vcmp.gt.f32.partialorder %v4049, 0.0
        %vm4136 = vcmp.gt.f32.partialorder %v4054, 0.0
        %vm4137 = vcmp.gt.f32.partialorder %v4059, 0.0
        %vm4138 = vcmp.gt.f32.partialorder %v4064, 0.0
        %vm4139 = vcmp.gt.f32.partialorder %v4069, 0.0
        %vm4140 = vcmp.gt.f32.partialorder %v4074, 0.0
        %vm4141 = vcmp.gt.f32.partialorder %v4079, 0.0
        %vm4142 = vcmp.gt.f32.partialorder %v4084, 0.0
        %vm4143 = vcmp.gt.f32.partialorder %v4089, 0.0
        %vm4144 = vcmp.gt.f32.partialorder %v4094, 0.0
        %vm4145 = vcmp.gt.f32.partialorder %v4099, 0.0
        %vm4146 = vcmp.gt.f32.partialorder %v4104, 0.0
        %vm4147 = vcmp.gt.f32.partialorder %v4109, 0.0
        %vm4148 = vcmp.gt.f32.partialorder %v4114, 0.0
        %v4149 = vmin.f32 %v3959, 0.0
        %v4150 = vmin.f32 %v3964, 0.0
        %v4151 = vmin.f32 %v3969, 0.0
        %v4152 = vmin.f32 %v3974, 0.0
        %v4153 = vmin.f32 %v3979, 0.0
        %v4154 = vmin.f32 %v3984, 0.0
        %v4155 = vmin.f32 %v3989, 0.0
        %v4156 = vmin.f32 %v3994, 0.0
        %v4157 = vmin.f32 %v3999, 0.0
        %v4158 = vmin.f32 %v4004, 0.0
        %v4159 = vmin.f32 %v4009, 0.0
        %v4160 = vmin.f32 %v4014, 0.0
        %v4161 = vmin.f32 %v4019, 0.0
        %v4162 = vmin.f32 %v4024, 0.0
        %v4163 = vmin.f32 %v4029, 0.0
        %v4164 = vmin.f32 %v4034, 0.0
        %v4165 = vmin.f32 %v4039, 0.0
        %v4166 = vmin.f32 %v4044, 0.0
        %v4167 = vmin.f32 %v4049, 0.0
        %v4168 = vmin.f32 %v4054, 0.0
        %v4169 = vmin.f32 %v4059, 0.0
        %v4170 = vmin.f32 %v4064, 0.0
        %v4171 = vmin.f32 %v4069, 0.0
        %v4172 = vmin.f32 %v4074, 0.0
        %v4173 = vmin.f32 %v4079, 0.0
        %v4174 = vmin.f32 %v4084, 0.0
        %v4175 = vmin.f32 %v4089, 0.0
        %v4176 = vmin.f32 %v4094, 0.0
        %v4177 = vmin.f32 %v4099, 0.0
        %v4178 = vmin.f32 %v4104, 0.0
        %v4179 = vmin.f32 %v4109, 0.0
        %v4180 = vmin.f32 %v4114, 0.0
        %v4181 = vmul.f32 %v4149, 1.442695
        %v4182 = vpow.pop %v4181
        %v4183 = vmul.f32 %v4150, 1.442695
        %v4184 = vpow.pop %v4183
        %v4185 = vmul.f32 %v4151, 1.442695
        %v4186 = vpow.pop %v4185
        %v4187 = vmul.f32 %v4152, 1.442695
        %v4188 = vpow.pop %v4187
        %v4189 = vmul.f32 %v4153, 1.442695
        %v4190 = vpow.pop %v4189
        %v4191 = vmul.f32 %v4154, 1.442695
        %v4192 = vpow.pop %v4191
        %v4193 = vmul.f32 %v4155, 1.442695
        %v4194 = vpow.pop %v4193
        %v4195 = vmul.f32 %v4156, 1.442695
        %v4196 = vpow.pop %v4195
        %v4197 = vmul.f32 %v4157, 1.442695
        %v4198 = vpow.pop %v4197
        %v4199 = vmul.f32 %v4158, 1.442695
        %v4200 = vpow.pop %v4199
        %v4201 = vmul.f32 %v4159, 1.442695
        %v4202 = vpow.pop %v4201
        %v4203 = vmul.f32 %v4160, 1.442695
        %v4204 = vpow.pop %v4203
        %v4205 = vmul.f32 %v4161, 1.442695
        %v4206 = vpow.pop %v4205
        %v4207 = vmul.f32 %v4162, 1.442695
        %v4208 = vpow.pop %v4207
        %v4209 = vmul.f32 %v4163, 1.442695
        %v4210 = vpow.pop %v4209
        %v4211 = vmul.f32 %v4164, 1.442695
        %v4212 = vpow.pop %v4211
        %v4213 = vmul.f32 %v4165, 1.442695
        %v4214 = vpow.pop %v4213
        %v4215 = vmul.f32 %v4166, 1.442695
        %v4216 = vpow.pop %v4215
        %v4217 = vmul.f32 %v4167, 1.442695
        %v4218 = vpow.pop %v4217
        %v4219 = vmul.f32 %v4168, 1.442695
        %v4220 = vpow.pop %v4219
        %v4221 = vmul.f32 %v4169, 1.442695
        %v4222 = vpow.pop %v4221
        %v4223 = vmul.f32 %v4170, 1.442695
        %v4224 = vpow.pop %v4223
        %v4225 = vmul.f32 %v4171, 1.442695
        %v4226 = vpow.pop %v4225
        %v4227 = vmul.f32 %v4172, 1.442695
        %v4228 = vpow.pop %v4227
        %v4229 = vmul.f32 %v4173, 1.442695
        %v4230 = vpow.pop %v4229
        %v4231 = vmul.f32 %v4174, 1.442695
        %v4232 = vpow.pop %v4231
        %v4233 = vmul.f32 %v4175, 1.442695
        %v4234 = vpow.pop %v4233
        %v4235 = vmul.f32 %v4176, 1.442695
        %v4236 = vpow.pop %v4235
        %v4237 = vmul.f32 %v4177, 1.442695
        %v4238 = vpow.pop %v4237
        %v4239 = vmul.f32 %v4178, 1.442695
        %v4240 = vpow.pop %v4239
        %v4241 = vmul.f32 %v4179, 1.442695
        %v4242 = vpow.pop %v4241
        %v4243 = vmul.f32 %v4180, 1.442695
        %v4244 = vpow.pop %v4243
        %v4245 = vsub.f32 %v4182, 1.0
        %v4246 = vsub.f32 %v4184, 1.0
        %v4247 = vsub.f32 %v4186, 1.0
        %v4248 = vsub.f32 %v4188, 1.0
        %v4249 = vsub.f32 %v4190, 1.0
        %v4250 = vsub.f32 %v4192, 1.0
        %v4251 = vsub.f32 %v4194, 1.0
        %v4252 = vsub.f32 %v4196, 1.0
        %v4253 = vsub.f32 %v4198, 1.0
        %v4254 = vsub.f32 %v4200, 1.0
        %v4255 = vsub.f32 %v4202, 1.0
        %v4256 = vsub.f32 %v4204, 1.0
        %v4257 = vsub.f32 %v4206, 1.0
        %v4258 = vsub.f32 %v4208, 1.0
        %v4259 = vsub.f32 %v4210, 1.0
        %v4260 = vsub.f32 %v4212, 1.0
        %v4261 = vsub.f32 %v4214, 1.0
        %v4262 = vsub.f32 %v4216, 1.0
        %v4263 = vsub.f32 %v4218, 1.0
        %v4264 = vsub.f32 %v4220, 1.0
        %v4265 = vsub.f32 %v4222, 1.0
        %v4266 = vsub.f32 %v4224, 1.0
        %v4267 = vsub.f32 %v4226, 1.0
        %v4268 = vsub.f32 %v4228, 1.0
        %v4269 = vsub.f32 %v4230, 1.0
        %v4270 = vsub.f32 %v4232, 1.0
        %v4271 = vsub.f32 %v4234, 1.0
        %v4272 = vsub.f32 %v4236, 1.0
        %v4273 = vsub.f32 %v4238, 1.0
        %v4274 = vsub.f32 %v4240, 1.0
        %v4275 = vsub.f32 %v4242, 1.0
        %v4276 = vsub.f32 %v4244, 1.0
        %v4277 = vsel %vm4117, %v3959, %v4245
        %v4278 = vsel %vm4118, %v3964, %v4246
        %v4279 = vsel %vm4119, %v3969, %v4247
        %v4280 = vsel %vm4120, %v3974, %v4248
        %v4281 = vsel %vm4121, %v3979, %v4249
        %v4282 = vsel %vm4122, %v3984, %v4250
        %v4283 = vsel %vm4123, %v3989, %v4251
        %v4284 = vsel %vm4124, %v3994, %v4252
        %v4285 = vsel %vm4125, %v3999, %v4253
        %v4286 = vsel %vm4126, %v4004, %v4254
        %v4287 = vsel %vm4127, %v4009, %v4255
        %v4288 = vsel %vm4128, %v4014, %v4256
        %v4289 = vsel %vm4129, %v4019, %v4257
        %v4290 = vsel %vm4130, %v4024, %v4258
        %v4291 = vsel %vm4131, %v4029, %v4259
        %v4292 = vsel %vm4132, %v4034, %v4260
        %v4293 = vsel %vm4133, %v4039, %v4261
        %v4294 = vsel %vm4134, %v4044, %v4262
        %v4295 = vsel %vm4135, %v4049, %v4263
        %v4296 = vsel %vm4136, %v4054, %v4264
        %v4297 = vsel %vm4137, %v4059, %v4265
        %v4298 = vsel %vm4138, %v4064, %v4266
        %v4299 = vsel %vm4139, %v4069, %v4267
        %v4300 = vsel %vm4140, %v4074, %v4268
        %v4301 = vsel %vm4141, %v4079, %v4269
        %v4302 = vsel %vm4142, %v4084, %v4270
        %v4303 = vsel %vm4143, %v4089, %v4271
        %v4304 = vsel %vm4144, %v4094, %v4272
        %v4305 = vsel %vm4145, %v4099, %v4273
        %v4306 = vsel %vm4146, %v4104, %v4274
        %v4307 = vsel %vm4147, %v4109, %v4275
        %v4308 = vsel %vm4148, %v4114, %v4276
        %4309 = vst [vmem:[%s232] sm:$0xff] %v4277
        %4310 = vst [vmem:[%s232 + $0x8] sm:$0xff] %v4278
        %4311 = vst [vmem:[%s232 + $0x10] sm:$0xff] %v4279
        %4312 = vst [vmem:[%s232 + $0x18] sm:$0xff] %v4280
        %4313 = vst [vmem:[%s232 + $0x20] sm:$0xff] %v4281
        %4314 = vst [vmem:[%s232 + $0x28] sm:$0xff] %v4282
        %4315 = vst [vmem:[%s232 + $0x30] sm:$0xff] %v4283
        %4316 = vst [vmem:[%s232 + $0x38] sm:$0xff] %v4284
        %4317 = vst [vmem:[%s232 + $0x40] sm:$0xff] %v4285
        %4318 = vst [vmem:[%s232 + $0x48] sm:$0xff] %v4286
        %4319 = vst [vmem:[%s232 + $0x50] sm:$0xff] %v4287
        %4320 = vst [vmem:[%s232 + $0x58] sm:$0xff] %v4288
        %4321 = vst [vmem:[%s232 + $0x60] sm:$0xff] %v4289
        %4322 = vst [vmem:[%s232 + $0x68] sm:$0xff] %v4290
        %4323 = vst [vmem:[%s232 + $0x70] sm:$0xff] %v4291
        %4324 = vst [vmem:[%s232 + $0x78] sm:$0xff] %v4292
        %4325 = vst [vmem:[%s232 + $0x80] sm:$0xff] %v4293
        %4326 = vst [vmem:[%s232 + $0x88] sm:$0xff] %v4294
        %4327 = vst [vmem:[%s232 + $0x90] sm:$0xff] %v4295
        %4328 = vst [vmem:[%s232 + $0x98] sm:$0xff] %v4296
        %4329 = vst [vmem:[%s232 + $0xa0] sm:$0xff] %v4297
        %4330 = vst [vmem:[%s232 + $0xa8] sm:$0xff] %v4298
        %4331 = vst [vmem:[%s232 + $0xb0] sm:$0xff] %v4299
        %4332 = vst [vmem:[%s232 + $0xb8] sm:$0xff] %v4300
        %4333 = vst [vmem:[%s232 + $0xc0] sm:$0xff] %v4301
        %4334 = vst [vmem:[%s232 + $0xc8] sm:$0xff] %v4302
        %4335 = vst [vmem:[%s232 + $0xd0] sm:$0xff] %v4303
        %4336 = vst [vmem:[%s232 + $0xd8] sm:$0xff] %v4304
        %4337 = vst [vmem:[%s232 + $0xe0] sm:$0xff] %v4305
        %4338 = vst [vmem:[%s232 + $0xe8] sm:$0xff] %v4306
        %4339 = vst [vmem:[%s232 + $0xf0] sm:$0xff] %v4307
        %4340 = vst [vmem:[%s232 + $0xf8] sm:$0xff] %v4308
        %s4341 = sand.u32 %s138, 1
        %s4342 = scalar_lea.sflag [#allocation6], %s4341
        %s4343 = sand.u32 %s138, 1
        %s4344 = smul.addr %s4343, 256
        %s4345 = scalar_lea.vmem [#allocation7], %s4344
        // Predicated region
        $region45: #{tpu_custom_call.1} parent=39 // pred_check
          %p4346 = pneg %p148
        $region46: #{tpu_custom_call.1} parent=39 // pred_check_branch
          %4348 = sbr.rel (%p4346) target = $region48
        $region47: #{tpu_custom_call.1} parent=39 // pred_region
          %s4350 = ssub.s32 4096, 4096
          %4351 = vsyncadd %s4342, %s4350
          %s4352 = smul.addr %s20, 32
          %s4353 = smul.addr %s4352, 128
          %s4354 = scalar_lea.hbm %s5, %s4353
          %s4355 = sshll.u32 %s4345, 4
          %s4356 = int_to_ptr.vmem [resolvable:$true] %s4355
          %4361 = dma.vmem_to_hbm [thread:$0]  %s4356, 4096, %s4354, %s4342, 128, 128, 8
        $region48: #{tpu_custom_call.1} parent=39 // pred_fallthru
          _
      $region40: #{tpu_custom_call.1} parent=5 // pred_fallthru
        _
      %p4362 = scmp.le.s32.totalorder 2, %s15
      // Predicated region
      $region49: #{tpu_custom_call.1} parent=5 // pred_check
        %p4363 = pneg %p4362
      $region50: #{tpu_custom_call.1} parent=5 // pred_check_branch
        %4365 = sbr.rel (%p4363) target = $region52
      $region51: #{tpu_custom_call.1} parent=5 // pred_region
        %s4366 = ssub.s32 %s15, 2
        // Predicated region
        $region53: #{tpu_custom_call.1} parent=51 // pred_check
          %p4367 = pneg %p154
        $region54: #{tpu_custom_call.1} parent=51 // pred_check_branch
          %4369 = sbr.rel (%p4367) target = $region56
        $region55: #{tpu_custom_call.1} parent=51 // pred_region
          %s4370 = sand.u32 %s139, 1
          %s4371 = scalar_lea.sflag [#allocation6], %s4370
          %s4372 = sand.u32 %s139, 1
          %s4373 = smul.addr %s4372, 256
          %s4374 = scalar_lea.vmem [#allocation7], %s4373
          %4375 = dma.done %s4371, 4096
        $region56: #{tpu_custom_call.1} parent=51 // pred_fallthru
          _
      $region52: #{tpu_custom_call.1} parent=5 // pred_fallthru
        _
    $region6: #{tpu_custom_call.1} parent=1 // loop_footer
      %s19 = sadd.s32 1, %s15
    $region7: #{tpu_custom_call.1} parent=1 // loop_footer_branch
      %14 = sbr.rel target = $region3
    $region8: #{tpu_custom_call.1} parent=1 // loop_exit
      _
    %4376 = vsyncpa [#allocation5], 1
    %s4377 = scalar_lea.sflag [#allocation5], 1
    %4378 = vsyncpa %s4377, 1
    %4379 = vsyncpa [#allocation6], 1
    %s4380 = scalar_lea.sflag [#allocation6], 1
    %4381 = vsyncpa %s4380, 1

</llo_original>
